<compile_context>
chip_gen: v5e
topology: v5e:2x2
jax: 0.10.0
libtpu: 0.0.40
codegen_flags: <defaults>
</compile_context>

<pallas_src>
import functools

import jax
import jax.numpy as jnp
from jax.experimental import pallas as pl
from jax.experimental.pallas import tpu as pltpu

VOCAB_PAD = 128  # lane-dense padded vocab dimension


# -----------------------------------------------------------------------------
# Fused kernel (runs once, no grid).
# -----------------------------------------------------------------------------
def fused_gru_kernel(idx_ref, h0_ref, emb_ref, w_ih0_ref, b_ih0_ref,
                     w_hh0_ref, b_hh0_ref, w_cat_ref, b_cat_ref,
                     dec_w_ref, dec_b_ref,
                     logits_ref, hidden_ref, y_ref, *, S, B, L, H, Vp):
    SB = S * B

    # ---- embedding for ALL timesteps: one vectorized one-hot + one matmul ----
    col_iota = jax.lax.broadcasted_iota(jnp.int32, (SB, Vp), 1)
    onehot = (col_iota == idx_ref[...]).astype(jnp.float32)            # (SB, Vp)
    x_all = jnp.dot(onehot, emb_ref[...],
                    preferred_element_type=jnp.float32)                # (SB, E)

    # ---- layer-0 input projection for ALL timesteps (hoisted) ----------------
    gi0_all = jnp.dot(x_all, w_ih0_ref[...],
                      preferred_element_type=jnp.float32) + b_ih0_ref[...]  # (SB, 3H)

    h = [h0_ref[l] for l in range(L)]                                  # each (B, H)

    for t in range(S):
        # ---- layer 0: gi precomputed, only the recurrent matmul is serial ----
        gi0 = gi0_all[t * B:(t + 1) * B, :]
        gh0 = jnp.dot(h[0], w_hh0_ref[...],
                      preferred_element_type=jnp.float32) + b_hh0_ref[...]
        rz = jax.nn.sigmoid(gi0[:, :2 * H] + gh0[:, :2 * H])
        r, z = rz[:, :H], rz[:, H:]
        # b_hh_n stays inside the r-scaled term, matching nn.GRU exactly.
        n = jnp.tanh(gi0[:, 2 * H:] + r * gh0[:, 2 * H:])
        h[0] = (1.0 - z) * n + z * h[0]
        x = h[0]

        # ---- layers 1..L-1: ONE fused [x, h] @ (2H, 4H) matmul per layer -----
        for l in range(1, L):
            cat = jnp.concatenate([x, h[l]], axis=1)                   # (B, 2H)
            g = (jnp.dot(cat, w_cat_ref[l - 1],
                         preferred_element_type=jnp.float32)
                 + b_cat_ref[l - 1])                                   # (B, 4H)
            rz = jax.nn.sigmoid(g[:, :2 * H])
            r, z = rz[:, :H], rz[:, H:]
            n = jnp.tanh(g[:, 2 * H:3 * H] + r * g[:, 3 * H:4 * H])
            h[l] = (1.0 - z) * n + z * h[l]
            x = h[l]

        # stash last-layer output for the batched decoder matmul
        y_ref[t * B:(t + 1) * B, :] = x

    # ---- decoder Linear: ONE (SB,H)@(H,Vp) matmul, one contiguous store ------
    logits_ref[...] = (jnp.dot(y_ref[...], dec_w_ref[...],
                               preferred_element_type=jnp.float32)
                       + dec_b_ref[...])

    for l in range(L):
        hidden_ref[l] = h[l]


def fused_forward(idx_flat, h0, emb_p, w_ih0, b_ih0, w_hh0, b_hh0,
                  w_cat, b_cat, dec_w_p, dec_b_p):
    """idx_flat: int32 (S*B, 1); h0: (L, B, H); emb_p: (Vp, E);
       w_ih0: (E, 3H); b_ih0: (1, 3H); w_hh0: (H, 3H); b_hh0: (1, 3H);
       w_cat: (L-1, 2H, 4H); b_cat: (L-1, 1, 4H);
       dec_w_p: (H, Vp); dec_b_p: (1, Vp).
       Returns logits (S*B, Vp) f32 and hidden (L, B, H) f32."""
    SB = idx_flat.shape[0]
    Vp = emb_p.shape[0]
    L, B, H = h0.shape
    S = SB // B

    kernel = functools.partial(fused_gru_kernel, S=S, B=B, L=L, H=H, Vp=Vp)
    vmem = pl.BlockSpec(memory_space=pltpu.MemorySpace.VMEM)

    return pl.pallas_call(
        kernel,
        out_shape=(
            jax.ShapeDtypeStruct((SB, Vp), jnp.float32),
            jax.ShapeDtypeStruct((L, B, H), jnp.float32),
        ),
        in_specs=[vmem] * 11,
        out_specs=(vmem, vmem),
        scratch_shapes=[pltpu.VMEM((SB, H), jnp.float32)],
    )(idx_flat, h0, emb_p, w_ih0, b_ih0, w_hh0, b_hh0, w_cat, b_cat,
      dec_w_p, dec_b_p)


# -----------------------------------------------------------------------------
# Parameters (natural packed layout: gates along the output dim, order r,z,n).
# -----------------------------------------------------------------------------
def init_params(key, input_size, embedding_size, n_layers):
    V, E = input_size, embedding_size
    H = E
    k_emb, k_gru, k_dw, k_db = jax.random.split(key, 4)

    params = {"embedding": jax.random.normal(k_emb, (V, E), jnp.float32)}

    k = 1.0 / (H ** 0.5)
    gkeys = jax.random.split(k_gru, 4 * n_layers)
    w_ih, w_hh, b_ih, b_hh = [], [], [], []
    for l in range(n_layers):
        k0, k1, k2, k3 = gkeys[4 * l: 4 * l + 4]
        # PyTorch stores weight_ih_l{k}: (3H, E_in), gate order (r, z, n);
        # we keep the transposed, output-dim-packed layout (E_in, 3H).
        w_ih.append(jax.random.uniform(k0, (E, 3 * H), jnp.float32, -k, k))
        w_hh.append(jax.random.uniform(k1, (H, 3 * H), jnp.float32, -k, k))
        b_ih.append(jax.random.uniform(k2, (1, 3 * H), jnp.float32, -k, k))
        b_hh.append(jax.random.uniform(k3, (1, 3 * H), jnp.float32, -k, k))
    params["w_ih"] = jnp.stack(w_ih)
    params["w_hh"] = jnp.stack(w_hh)
    params["b_ih"] = jnp.stack(b_ih)
    params["b_hh"] = jnp.stack(b_hh)

    kd = 1.0 / (H ** 0.5)
    params["dec_w"] = jax.random.uniform(k_dw, (H, V), jnp.float32, -kd, kd)
    params["dec_b"] = jax.random.uniform(k_db, (1, V), jnp.float32, -kd, kd)
    return params


def _pack_for_kernel(params, Vp):
    """Wrapper-side layout plumbing (runs in XLA, zero kernel cost)."""
    emb = params["embedding"]
    V, E = emb.shape
    w_ih, w_hh = params["w_ih"], params["w_hh"]
    b_ih, b_hh = params["b_ih"], params["b_hh"]
    L, H = w_hh.shape[0], w_hh.shape[1]

    emb_p = jnp.zeros((Vp, E), jnp.float32).at[:V].set(emb)

    w_cat, b_cat = [], []
    for l in range(1, L):
        # columns: [rz (from ih) | n (from ih) | zeros]   over the x rows
        top = jnp.concatenate(
            [w_ih[l][:, :2 * H], w_ih[l][:, 2 * H:],
             jnp.zeros((E, H), jnp.float32)], axis=1)
        # columns: [rz (from hh) | zeros | n (from hh)]   over the h rows
        bot = jnp.concatenate(
            [w_hh[l][:, :2 * H], jnp.zeros((H, H), jnp.float32),
             w_hh[l][:, 2 * H:]], axis=1)
        w_cat.append(jnp.concatenate([top, bot], axis=0))            # (2H, 4H)
        b_cat.append(jnp.concatenate(
            [b_ih[l][:, :2 * H] + b_hh[l][:, :2 * H],
             b_ih[l][:, 2 * H:], b_hh[l][:, 2 * H:]], axis=1))       # (1, 4H)
    w_cat = jnp.stack(w_cat)                                         # (L-1, 2H, 4H)
    b_cat = jnp.stack(b_cat)                                         # (L-1, 1, 4H)

    dec_w_p = jnp.zeros((H, Vp), jnp.float32).at[:, :V].set(params["dec_w"])
    dec_b_p = jnp.zeros((1, Vp), jnp.float32).at[:, :V].set(params["dec_b"])

    return (emb_p, w_ih[0], b_ih[0], w_hh[0], b_hh[0],
            w_cat, b_cat, dec_w_p, dec_b_p)


@jax.jit
def model_forward(params, x_idx, hidden=None):
    """x_idx: int32 (S, B, 1). Returns (logits (S, B, V), hidden (L, B, H))."""
    idx = jnp.squeeze(x_idx, axis=2).astype(jnp.int32)      # (S, B)
    S, B = idx.shape
    V = params["embedding"].shape[0]
    L = params["w_ih"].shape[0]
    H = params["w_hh"].shape[1]
    if hidden is None:                                       # hidden=None -> zeros
        hidden = jnp.zeros((L, B, H), jnp.float32)

    packed = _pack_for_kernel(params, VOCAB_PAD)
    idx_flat = idx.reshape(S * B, 1)                         # t-major, b-minor

    logits_flat, hidden_out = fused_forward(idx_flat, hidden, *packed)
    logits = logits_flat.reshape(S, B, VOCAB_PAD)[:, :, :V]
    return logits, hidden_out


# -----------------------------------------------------------------------------
# Pure-JAX reference (same packed layout) for a correctness sanity check.
# -----------------------------------------------------------------------------
def reference_forward(params, x_idx, hidden=None):
    idx = jnp.squeeze(x_idx, axis=2)
    x = jnp.take(params["embedding"], idx, axis=0)           # (S, B, E)
    S, B, _ = x.shape
    L = params["w_ih"].shape[0]
    H = params["w_hh"].shape[1]
    if hidden is None:
        hidden = jnp.zeros((L, B, H), jnp.float32)
    hs = [hidden[l] for l in range(L)]
    ys = []
    for t in range(S):
        inp = x[t]
        for l in range(L):
            gi = inp @ params["w_ih"][l] + params["b_ih"][l]
            gh = hs[l] @ params["w_hh"][l] + params["b_hh"][l]
            r = jax.nn.sigmoid(gi[:, :H] + gh[:, :H])
            z = jax.nn.sigmoid(gi[:, H:2 * H] + gh[:, H:2 * H])
            n = jnp.tanh(gi[:, 2 * H:] + r * gh[:, 2 * H:])
            hs[l] = (1.0 - z) * n + z * hs[l]
            inp = hs[l]
        ys.append(inp)
    y = jnp.stack(ys)                                        # (S, B, H)
    logits = y @ params["dec_w"] + params["dec_b"]
    return logits, jnp.stack(hs)


if __name__ == "__main__":
    INPUT_SIZE = 50        # vocab size
    EMBEDDING_SIZE = 32    # embedding == hidden size
    N_LAYERS = 4
    SEQ = 8
    BATCH = 2

    key = jax.random.PRNGKey(0)
    k_params, k_x = jax.random.split(key)

    params = init_params(k_params, INPUT_SIZE, EMBEDDING_SIZE, N_LAYERS)
    x = jax.random.randint(k_x, (SEQ, BATCH, 1), 0, INPUT_SIZE, dtype=jnp.int32)

    logits, hidden = model_forward(params, x)
    jax.block_until_ready((logits, hidden))

    assert logits.shape == (SEQ, BATCH, INPUT_SIZE), logits.shape
    assert hidden.shape == (N_LAYERS, BATCH, EMBEDDING_SIZE), hidden.shape

    # Sanity check against a pure-JAX reference (loose tolerance: MXU vs XLA
    # default f32 matmul precisions differ slightly).
    ref_logits, ref_hidden = reference_forward(params, x)
    assert float(jnp.max(jnp.abs(logits - ref_logits))) < 1e-2
    assert float(jnp.max(jnp.abs(hidden - ref_hidden))) < 1e-2

    print("KERNEL_OK")
</pallas_src>

<mosaic_0001>
module attributes {stable_mosaic.version = 11 : i64} {
  func.func @fused_gru_kernel(%arg0: memref<16x1xi32, #tpu.memory_space<vmem>>, %arg1: memref<4x2x32xf32, #tpu.memory_space<vmem>>, %arg2: memref<128x32xf32, #tpu.memory_space<vmem>>, %arg3: memref<32x96xf32, #tpu.memory_space<vmem>>, %arg4: memref<1x96xf32, #tpu.memory_space<vmem>>, %arg5: memref<32x96xf32, #tpu.memory_space<vmem>>, %arg6: memref<1x96xf32, #tpu.memory_space<vmem>>, %arg7: memref<3x64x128xf32, #tpu.memory_space<vmem>>, %arg8: memref<3x1x128xf32, #tpu.memory_space<vmem>>, %arg9: memref<32x128xf32, #tpu.memory_space<vmem>>, %arg10: memref<1x128xf32, #tpu.memory_space<vmem>>, %arg11: memref<16x128xf32, #tpu.memory_space<vmem>>, %arg12: memref<4x2x32xf32, #tpu.memory_space<vmem>>, %arg13: memref<16x32xf32, #tpu.memory_space<vmem>>) attributes {dimension_semantics = [], scalar_prefetch = 0 : i64, scratch_operands = 1 : i64, tpu.core_type = #tpu.core_type<tc>} {
    %0 = tpu.iota {dimensions = array<i32: 1>} : vector<16x128xi32>
    %c0 = arith.constant 0 : index
    %c0_0 = arith.constant 0 : index
    %1 = vector.load %arg0[%c0, %c0_0] : memref<16x1xi32, #tpu.memory_space<vmem>>, vector<16x1xi32>
    %2 = vector.broadcast %1 : vector<16x1xi32> to vector<16x128xi32>
    %3 = arith.cmpi eq, %0, %2 : vector<16x128xi32>
    %4 = arith.extui %3 : vector<16x128xi1> to vector<16x128xi32>
    %5 = arith.sitofp %4 : vector<16x128xi32> to vector<16x128xf32>
    %c0_1 = arith.constant 0 : index
    %c0_2 = arith.constant 0 : index
    %6 = vector.load %arg2[%c0_1, %c0_2] : memref<128x32xf32, #tpu.memory_space<vmem>>, vector<128x32xf32>
    %cst = arith.constant dense<0.000000e+00> : vector<16x32xf32>
    %7 = tpu.matmul %5, %6, %cst {dimension_numbers = #tpu.dot_dimension_numbers<[1], [0], [0], [1], [0, 0, 1, 1], [], []>} : vector<16x128xf32>, vector<128x32xf32>, vector<16x32xf32> -> vector<16x32xf32>
    %c0_3 = arith.constant 0 : index
    %c0_4 = arith.constant 0 : index
    %8 = vector.load %arg3[%c0_3, %c0_4] : memref<32x96xf32, #tpu.memory_space<vmem>>, vector<32x96xf32>
    %cst_5 = arith.constant dense<0.000000e+00> : vector<16x96xf32>
    %9 = tpu.matmul %7, %8, %cst_5 {dimension_numbers = #tpu.dot_dimension_numbers<[1], [0], [0], [1], [0, 0, 1, 1], [], []>} : vector<16x32xf32>, vector<32x96xf32>, vector<16x96xf32> -> vector<16x96xf32>
    %c0_6 = arith.constant 0 : index
    %c0_7 = arith.constant 0 : index
    %10 = vector.load %arg4[%c0_6, %c0_7] : memref<1x96xf32, #tpu.memory_space<vmem>>, vector<1x96xf32>
    %11 = vector.broadcast %10 : vector<1x96xf32> to vector<16x96xf32>
    %12 = arith.addf %9, %11 : vector<16x96xf32>
    %c0_8 = arith.constant 0 : index
    %c0_9 = arith.constant 0 : index
    %c0_10 = arith.constant 0 : index
    %13 = vector.load %arg1[%c0_8, %c0_9, %c0_10] : memref<4x2x32xf32, #tpu.memory_space<vmem>>, vector<1x2x32xf32>
    %14 = vector.shape_cast %13 : vector<1x2x32xf32> to vector<2x32xf32>
    %c1 = arith.constant 1 : index
    %c0_11 = arith.constant 0 : index
    %c0_12 = arith.constant 0 : index
    %15 = vector.load %arg1[%c1, %c0_11, %c0_12] : memref<4x2x32xf32, #tpu.memory_space<vmem>>, vector<1x2x32xf32>
    %16 = vector.shape_cast %15 : vector<1x2x32xf32> to vector<2x32xf32>
    %c2 = arith.constant 2 : index
    %c0_13 = arith.constant 0 : index
    %c0_14 = arith.constant 0 : index
    %17 = vector.load %arg1[%c2, %c0_13, %c0_14] : memref<4x2x32xf32, #tpu.memory_space<vmem>>, vector<1x2x32xf32>
    %18 = vector.shape_cast %17 : vector<1x2x32xf32> to vector<2x32xf32>
    %c3 = arith.constant 3 : index
    %c0_15 = arith.constant 0 : index
    %c0_16 = arith.constant 0 : index
    %19 = vector.load %arg1[%c3, %c0_15, %c0_16] : memref<4x2x32xf32, #tpu.memory_space<vmem>>, vector<1x2x32xf32>
    %20 = vector.shape_cast %19 : vector<1x2x32xf32> to vector<2x32xf32>
    %21 = vector.extract_strided_slice %12 {offsets = [0, 0], sizes = [2, 96], strides = [1, 1]} : vector<16x96xf32> to vector<2x96xf32>
    %c0_17 = arith.constant 0 : index
    %c0_18 = arith.constant 0 : index
    %22 = vector.load %arg5[%c0_17, %c0_18] : memref<32x96xf32, #tpu.memory_space<vmem>>, vector<32x96xf32>
    %cst_19 = arith.constant dense<0.000000e+00> : vector<2x96xf32>
    %23 = tpu.matmul %14, %22, %cst_19 {dimension_numbers = #tpu.dot_dimension_numbers<[1], [0], [0], [1], [0, 0, 1, 1], [], []>} : vector<2x32xf32>, vector<32x96xf32>, vector<2x96xf32> -> vector<2x96xf32>
    %c0_20 = arith.constant 0 : index
    %c0_21 = arith.constant 0 : index
    %24 = vector.load %arg6[%c0_20, %c0_21] : memref<1x96xf32, #tpu.memory_space<vmem>>, vector<1x96xf32>
    %25 = vector.broadcast %24 : vector<1x96xf32> to vector<2x96xf32>
    %26 = arith.addf %23, %25 : vector<2x96xf32>
    %27 = vector.extract_strided_slice %21 {offsets = [0, 0], sizes = [2, 64], strides = [1, 1]} : vector<2x96xf32> to vector<2x64xf32>
    %28 = vector.extract_strided_slice %26 {offsets = [0, 0], sizes = [2, 64], strides = [1, 1]} : vector<2x96xf32> to vector<2x64xf32>
    %29 = arith.addf %27, %28 : vector<2x64xf32>
    %30 = arith.negf %29 : vector<2x64xf32>
    %31 = math.exp %30 : vector<2x64xf32>
    %cst_22 = arith.constant 1.000000e+00 : f32
    %32 = vector.broadcast %cst_22 : f32 to vector<2x64xf32>
    %33 = arith.addf %32, %31 : vector<2x64xf32>
    %34 = arith.divf %32, %33 : vector<2x64xf32>
    %35 = vector.extract_strided_slice %34 {offsets = [0, 0], sizes = [2, 32], strides = [1, 1]} : vector<2x64xf32> to vector<2x32xf32>
    %36 = vector.extract_strided_slice %34 {offsets = [0, 32], sizes = [2, 32], strides = [1, 1]} : vector<2x64xf32> to vector<2x32xf32>
    %37 = vector.extract_strided_slice %21 {offsets = [0, 64], sizes = [2, 32], strides = [1, 1]} : vector<2x96xf32> to vector<2x32xf32>
    %38 = vector.extract_strided_slice %26 {offsets = [0, 64], sizes = [2, 32], strides = [1, 1]} : vector<2x96xf32> to vector<2x32xf32>
    %39 = arith.mulf %35, %38 : vector<2x32xf32>
    %40 = arith.addf %37, %39 : vector<2x32xf32>
    %41 = math.tanh %40 : vector<2x32xf32>
    %cst_23 = arith.constant 1.000000e+00 : f32
    %42 = vector.broadcast %cst_23 : f32 to vector<2x32xf32>
    %43 = arith.subf %42, %36 : vector<2x32xf32>
    %44 = arith.mulf %43, %41 : vector<2x32xf32>
    %45 = arith.mulf %36, %14 : vector<2x32xf32>
    %46 = arith.addf %44, %45 : vector<2x32xf32>
    %47 = tpu.concatenate %46, %16 in 1 : vector<2x32xf32>, vector<2x32xf32> -> vector<2x64xf32>
    %c0_24 = arith.constant 0 : index
    %c0_25 = arith.constant 0 : index
    %c0_26 = arith.constant 0 : index
    %48 = vector.load %arg7[%c0_24, %c0_25, %c0_26] : memref<3x64x128xf32, #tpu.memory_space<vmem>>, vector<1x64x128xf32>
    %49 = vector.shape_cast %48 : vector<1x64x128xf32> to vector<64x128xf32>
    %cst_27 = arith.constant dense<0.000000e+00> : vector<2x128xf32>
    %50 = tpu.matmul %47, %49, %cst_27 {dimension_numbers = #tpu.dot_dimension_numbers<[1], [0], [0], [1], [0, 0, 1, 1], [], []>} : vector<2x64xf32>, vector<64x128xf32>, vector<2x128xf32> -> vector<2x128xf32>
    %c0_28 = arith.constant 0 : index
    %c0_29 = arith.constant 0 : index
    %c0_30 = arith.constant 0 : index
    %51 = vector.load %arg8[%c0_28, %c0_29, %c0_30] : memref<3x1x128xf32, #tpu.memory_space<vmem>>, vector<1x1x128xf32>
    %52 = vector.shape_cast %51 : vector<1x1x128xf32> to vector<1x128xf32>
    %53 = vector.broadcast %52 : vector<1x128xf32> to vector<2x128xf32>
    %54 = arith.addf %50, %53 : vector<2x128xf32>
    %55 = vector.extract_strided_slice %54 {offsets = [0, 0], sizes = [2, 64], strides = [1, 1]} : vector<2x128xf32> to vector<2x64xf32>
    %56 = arith.negf %55 : vector<2x64xf32>
    %57 = math.exp %56 : vector<2x64xf32>
    %cst_31 = arith.constant 1.000000e+00 : f32
    %58 = vector.broadcast %cst_31 : f32 to vector<2x64xf32>
    %59 = arith.addf %58, %57 : vector<2x64xf32>
    %60 = arith.divf %58, %59 : vector<2x64xf32>
    %61 = vector.extract_strided_slice %60 {offsets = [0, 0], sizes = [2, 32], strides = [1, 1]} : vector<2x64xf32> to vector<2x32xf32>
    %62 = vector.extract_strided_slice %60 {offsets = [0, 32], sizes = [2, 32], strides = [1, 1]} : vector<2x64xf32> to vector<2x32xf32>
    %63 = vector.extract_strided_slice %54 {offsets = [0, 64], sizes = [2, 32], strides = [1, 1]} : vector<2x128xf32> to vector<2x32xf32>
    %64 = vector.extract_strided_slice %54 {offsets = [0, 96], sizes = [2, 32], strides = [1, 1]} : vector<2x128xf32> to vector<2x32xf32>
    %65 = arith.mulf %61, %64 : vector<2x32xf32>
    %66 = arith.addf %63, %65 : vector<2x32xf32>
    %67 = math.tanh %66 : vector<2x32xf32>
    %cst_32 = arith.constant 1.000000e+00 : f32
    %68 = vector.broadcast %cst_32 : f32 to vector<2x32xf32>
    %69 = arith.subf %68, %62 : vector<2x32xf32>
    %70 = arith.mulf %69, %67 : vector<2x32xf32>
    %71 = arith.mulf %62, %16 : vector<2x32xf32>
    %72 = arith.addf %70, %71 : vector<2x32xf32>
    %73 = tpu.concatenate %72, %18 in 1 : vector<2x32xf32>, vector<2x32xf32> -> vector<2x64xf32>
    %c1_33 = arith.constant 1 : index
    %c0_34 = arith.constant 0 : index
    %c0_35 = arith.constant 0 : index
    %74 = vector.load %arg7[%c1_33, %c0_34, %c0_35] : memref<3x64x128xf32, #tpu.memory_space<vmem>>, vector<1x64x128xf32>
    %75 = vector.shape_cast %74 : vector<1x64x128xf32> to vector<64x128xf32>
    %cst_36 = arith.constant dense<0.000000e+00> : vector<2x128xf32>
    %76 = tpu.matmul %73, %75, %cst_36 {dimension_numbers = #tpu.dot_dimension_numbers<[1], [0], [0], [1], [0, 0, 1, 1], [], []>} : vector<2x64xf32>, vector<64x128xf32>, vector<2x128xf32> -> vector<2x128xf32>
    %c1_37 = arith.constant 1 : index
    %c0_38 = arith.constant 0 : index
    %c0_39 = arith.constant 0 : index
    %77 = vector.load %arg8[%c1_37, %c0_38, %c0_39] : memref<3x1x128xf32, #tpu.memory_space<vmem>>, vector<1x1x128xf32>
    %78 = vector.shape_cast %77 : vector<1x1x128xf32> to vector<1x128xf32>
    %79 = vector.broadcast %78 : vector<1x128xf32> to vector<2x128xf32>
    %80 = arith.addf %76, %79 : vector<2x128xf32>
    %81 = vector.extract_strided_slice %80 {offsets = [0, 0], sizes = [2, 64], strides = [1, 1]} : vector<2x128xf32> to vector<2x64xf32>
    %82 = arith.negf %81 : vector<2x64xf32>
    %83 = math.exp %82 : vector<2x64xf32>
    %cst_40 = arith.constant 1.000000e+00 : f32
    %84 = vector.broadcast %cst_40 : f32 to vector<2x64xf32>
    %85 = arith.addf %84, %83 : vector<2x64xf32>
    %86 = arith.divf %84, %85 : vector<2x64xf32>
    %87 = vector.extract_strided_slice %86 {offsets = [0, 0], sizes = [2, 32], strides = [1, 1]} : vector<2x64xf32> to vector<2x32xf32>
    %88 = vector.extract_strided_slice %86 {offsets = [0, 32], sizes = [2, 32], strides = [1, 1]} : vector<2x64xf32> to vector<2x32xf32>
    %89 = vector.extract_strided_slice %80 {offsets = [0, 64], sizes = [2, 32], strides = [1, 1]} : vector<2x128xf32> to vector<2x32xf32>
    %90 = vector.extract_strided_slice %80 {offsets = [0, 96], sizes = [2, 32], strides = [1, 1]} : vector<2x128xf32> to vector<2x32xf32>
    %91 = arith.mulf %87, %90 : vector<2x32xf32>
    %92 = arith.addf %89, %91 : vector<2x32xf32>
    %93 = math.tanh %92 : vector<2x32xf32>
    %cst_41 = arith.constant 1.000000e+00 : f32
    %94 = vector.broadcast %cst_41 : f32 to vector<2x32xf32>
    %95 = arith.subf %94, %88 : vector<2x32xf32>
    %96 = arith.mulf %95, %93 : vector<2x32xf32>
    %97 = arith.mulf %88, %18 : vector<2x32xf32>
    %98 = arith.addf %96, %97 : vector<2x32xf32>
    %99 = tpu.concatenate %98, %20 in 1 : vector<2x32xf32>, vector<2x32xf32> -> vector<2x64xf32>
    %c2_42 = arith.constant 2 : index
    %c0_43 = arith.constant 0 : index
    %c0_44 = arith.constant 0 : index
    %100 = vector.load %arg7[%c2_42, %c0_43, %c0_44] : memref<3x64x128xf32, #tpu.memory_space<vmem>>, vector<1x64x128xf32>
    %101 = vector.shape_cast %100 : vector<1x64x128xf32> to vector<64x128xf32>
    %cst_45 = arith.constant dense<0.000000e+00> : vector<2x128xf32>
    %102 = tpu.matmul %99, %101, %cst_45 {dimension_numbers = #tpu.dot_dimension_numbers<[1], [0], [0], [1], [0, 0, 1, 1], [], []>} : vector<2x64xf32>, vector<64x128xf32>, vector<2x128xf32> -> vector<2x128xf32>
    %c2_46 = arith.constant 2 : index
    %c0_47 = arith.constant 0 : index
    %c0_48 = arith.constant 0 : index
    %103 = vector.load %arg8[%c2_46, %c0_47, %c0_48] : memref<3x1x128xf32, #tpu.memory_space<vmem>>, vector<1x1x128xf32>
    %104 = vector.shape_cast %103 : vector<1x1x128xf32> to vector<1x128xf32>
    %105 = vector.broadcast %104 : vector<1x128xf32> to vector<2x128xf32>
    %106 = arith.addf %102, %105 : vector<2x128xf32>
    %107 = vector.extract_strided_slice %106 {offsets = [0, 0], sizes = [2, 64], strides = [1, 1]} : vector<2x128xf32> to vector<2x64xf32>
    %108 = arith.negf %107 : vector<2x64xf32>
    %109 = math.exp %108 : vector<2x64xf32>
    %cst_49 = arith.constant 1.000000e+00 : f32
    %110 = vector.broadcast %cst_49 : f32 to vector<2x64xf32>
    %111 = arith.addf %110, %109 : vector<2x64xf32>
    %112 = arith.divf %110, %111 : vector<2x64xf32>
    %113 = vector.extract_strided_slice %112 {offsets = [0, 0], sizes = [2, 32], strides = [1, 1]} : vector<2x64xf32> to vector<2x32xf32>
    %114 = vector.extract_strided_slice %112 {offsets = [0, 32], sizes = [2, 32], strides = [1, 1]} : vector<2x64xf32> to vector<2x32xf32>
    %115 = vector.extract_strided_slice %106 {offsets = [0, 64], sizes = [2, 32], strides = [1, 1]} : vector<2x128xf32> to vector<2x32xf32>
    %116 = vector.extract_strided_slice %106 {offsets = [0, 96], sizes = [2, 32], strides = [1, 1]} : vector<2x128xf32> to vector<2x32xf32>
    %117 = arith.mulf %113, %116 : vector<2x32xf32>
    %118 = arith.addf %115, %117 : vector<2x32xf32>
    %119 = math.tanh %118 : vector<2x32xf32>
    %cst_50 = arith.constant 1.000000e+00 : f32
    %120 = vector.broadcast %cst_50 : f32 to vector<2x32xf32>
    %121 = arith.subf %120, %114 : vector<2x32xf32>
    %122 = arith.mulf %121, %119 : vector<2x32xf32>
    %123 = arith.mulf %114, %20 : vector<2x32xf32>
    %124 = arith.addf %122, %123 : vector<2x32xf32>
    %c0_51 = arith.constant 0 : index
    %c0_52 = arith.constant 0 : index
    %125 = vector.load %arg13[%c0_51, %c0_52] : memref<16x32xf32, #tpu.memory_space<vmem>>, vector<2x32xf32>
    tpu.vector_store %arg13[%c0_51, %c0_52], %124 {strides = array<i32>} : memref<16x32xf32, #tpu.memory_space<vmem>>, vector<2x32xf32>,
    %126 = vector.extract_strided_slice %12 {offsets = [2, 0], sizes = [2, 96], strides = [1, 1]} : vector<16x96xf32> to vector<2x96xf32>
    %c0_53 = arith.constant 0 : index
    %c0_54 = arith.constant 0 : index
    %127 = vector.load %arg5[%c0_53, %c0_54] : memref<32x96xf32, #tpu.memory_space<vmem>>, vector<32x96xf32>
    %cst_55 = arith.constant dense<0.000000e+00> : vector<2x96xf32>
    %128 = tpu.matmul %46, %127, %cst_55 {dimension_numbers = #tpu.dot_dimension_numbers<[1], [0], [0], [1], [0, 0, 1, 1], [], []>} : vector<2x32xf32>, vector<32x96xf32>, vector<2x96xf32> -> vector<2x96xf32>
    %c0_56 = arith.constant 0 : index
    %c0_57 = arith.constant 0 : index
    %129 = vector.load %arg6[%c0_56, %c0_57] : memref<1x96xf32, #tpu.memory_space<vmem>>, vector<1x96xf32>
    %130 = vector.broadcast %129 : vector<1x96xf32> to vector<2x96xf32>
    %131 = arith.addf %128, %130 : vector<2x96xf32>
    %132 = vector.extract_strided_slice %126 {offsets = [0, 0], sizes = [2, 64], strides = [1, 1]} : vector<2x96xf32> to vector<2x64xf32>
    %133 = vector.extract_strided_slice %131 {offsets = [0, 0], sizes = [2, 64], strides = [1, 1]} : vector<2x96xf32> to vector<2x64xf32>
    %134 = arith.addf %132, %133 : vector<2x64xf32>
    %135 = arith.negf %134 : vector<2x64xf32>
    %136 = math.exp %135 : vector<2x64xf32>
    %cst_58 = arith.constant 1.000000e+00 : f32
    %137 = vector.broadcast %cst_58 : f32 to vector<2x64xf32>
    %138 = arith.addf %137, %136 : vector<2x64xf32>
    %139 = arith.divf %137, %138 : vector<2x64xf32>
    %140 = vector.extract_strided_slice %139 {offsets = [0, 0], sizes = [2, 32], strides = [1, 1]} : vector<2x64xf32> to vector<2x32xf32>
    %141 = vector.extract_strided_slice %139 {offsets = [0, 32], sizes = [2, 32], strides = [1, 1]} : vector<2x64xf32> to vector<2x32xf32>
    %142 = vector.extract_strided_slice %126 {offsets = [0, 64], sizes = [2, 32], strides = [1, 1]} : vector<2x96xf32> to vector<2x32xf32>
    %143 = vector.extract_strided_slice %131 {offsets = [0, 64], sizes = [2, 32], strides = [1, 1]} : vector<2x96xf32> to vector<2x32xf32>
    %144 = arith.mulf %140, %143 : vector<2x32xf32>
    %145 = arith.addf %142, %144 : vector<2x32xf32>
    %146 = math.tanh %145 : vector<2x32xf32>
    %cst_59 = arith.constant 1.000000e+00 : f32
    %147 = vector.broadcast %cst_59 : f32 to vector<2x32xf32>
    %148 = arith.subf %147, %141 : vector<2x32xf32>
    %149 = arith.mulf %148, %146 : vector<2x32xf32>
    %150 = arith.mulf %141, %46 : vector<2x32xf32>
    %151 = arith.addf %149, %150 : vector<2x32xf32>
    %152 = tpu.concatenate %151, %72 in 1 : vector<2x32xf32>, vector<2x32xf32> -> vector<2x64xf32>
    %c0_60 = arith.constant 0 : index
    %c0_61 = arith.constant 0 : index
    %c0_62 = arith.constant 0 : index
    %153 = vector.load %arg7[%c0_60, %c0_61, %c0_62] : memref<3x64x128xf32, #tpu.memory_space<vmem>>, vector<1x64x128xf32>
    %154 = vector.shape_cast %153 : vector<1x64x128xf32> to vector<64x128xf32>
    %cst_63 = arith.constant dense<0.000000e+00> : vector<2x128xf32>
    %155 = tpu.matmul %152, %154, %cst_63 {dimension_numbers = #tpu.dot_dimension_numbers<[1], [0], [0], [1], [0, 0, 1, 1], [], []>} : vector<2x64xf32>, vector<64x128xf32>, vector<2x128xf32> -> vector<2x128xf32>
    %c0_64 = arith.constant 0 : index
    %c0_65 = arith.constant 0 : index
    %c0_66 = arith.constant 0 : index
    %156 = vector.load %arg8[%c0_64, %c0_65, %c0_66] : memref<3x1x128xf32, #tpu.memory_space<vmem>>, vector<1x1x128xf32>
    %157 = vector.shape_cast %156 : vector<1x1x128xf32> to vector<1x128xf32>
    %158 = vector.broadcast %157 : vector<1x128xf32> to vector<2x128xf32>
    %159 = arith.addf %155, %158 : vector<2x128xf32>
    %160 = vector.extract_strided_slice %159 {offsets = [0, 0], sizes = [2, 64], strides = [1, 1]} : vector<2x128xf32> to vector<2x64xf32>
    %161 = arith.negf %160 : vector<2x64xf32>
    %162 = math.exp %161 : vector<2x64xf32>
    %cst_67 = arith.constant 1.000000e+00 : f32
    %163 = vector.broadcast %cst_67 : f32 to vector<2x64xf32>
    %164 = arith.addf %163, %162 : vector<2x64xf32>
    %165 = arith.divf %163, %164 : vector<2x64xf32>
    %166 = vector.extract_strided_slice %165 {offsets = [0, 0], sizes = [2, 32], strides = [1, 1]} : vector<2x64xf32> to vector<2x32xf32>
    %167 = vector.extract_strided_slice %165 {offsets = [0, 32], sizes = [2, 32], strides = [1, 1]} : vector<2x64xf32> to vector<2x32xf32>
    %168 = vector.extract_strided_slice %159 {offsets = [0, 64], sizes = [2, 32], strides = [1, 1]} : vector<2x128xf32> to vector<2x32xf32>
    %169 = vector.extract_strided_slice %159 {offsets = [0, 96], sizes = [2, 32], strides = [1, 1]} : vector<2x128xf32> to vector<2x32xf32>
    %170 = arith.mulf %166, %169 : vector<2x32xf32>
    %171 = arith.addf %168, %170 : vector<2x32xf32>
    %172 = math.tanh %171 : vector<2x32xf32>
    %cst_68 = arith.constant 1.000000e+00 : f32
    %173 = vector.broadcast %cst_68 : f32 to vector<2x32xf32>
    %174 = arith.subf %173, %167 : vector<2x32xf32>
    %175 = arith.mulf %174, %172 : vector<2x32xf32>
    %176 = arith.mulf %167, %72 : vector<2x32xf32>
    %177 = arith.addf %175, %176 : vector<2x32xf32>
    %178 = tpu.concatenate %177, %98 in 1 : vector<2x32xf32>, vector<2x32xf32> -> vector<2x64xf32>
    %c1_69 = arith.constant 1 : index
    %c0_70 = arith.constant 0 : index
    %c0_71 = arith.constant 0 : index
    %179 = vector.load %arg7[%c1_69, %c0_70, %c0_71] : memref<3x64x128xf32, #tpu.memory_space<vmem>>, vector<1x64x128xf32>
    %180 = vector.shape_cast %179 : vector<1x64x128xf32> to vector<64x128xf32>
    %cst_72 = arith.constant dense<0.000000e+00> : vector<2x128xf32>
    %181 = tpu.matmul %178, %180, %cst_72 {dimension_numbers = #tpu.dot_dimension_numbers<[1], [0], [0], [1], [0, 0, 1, 1], [], []>} : vector<2x64xf32>, vector<64x128xf32>, vector<2x128xf32> -> vector<2x128xf32>
    %c1_73 = arith.constant 1 : index
    %c0_74 = arith.constant 0 : index
    %c0_75 = arith.constant 0 : index
    %182 = vector.load %arg8[%c1_73, %c0_74, %c0_75] : memref<3x1x128xf32, #tpu.memory_space<vmem>>, vector<1x1x128xf32>
    %183 = vector.shape_cast %182 : vector<1x1x128xf32> to vector<1x128xf32>
    %184 = vector.broadcast %183 : vector<1x128xf32> to vector<2x128xf32>
    %185 = arith.addf %181, %184 : vector<2x128xf32>
    %186 = vector.extract_strided_slice %185 {offsets = [0, 0], sizes = [2, 64], strides = [1, 1]} : vector<2x128xf32> to vector<2x64xf32>
    %187 = arith.negf %186 : vector<2x64xf32>
    %188 = math.exp %187 : vector<2x64xf32>
    %cst_76 = arith.constant 1.000000e+00 : f32
    %189 = vector.broadcast %cst_76 : f32 to vector<2x64xf32>
    %190 = arith.addf %189, %188 : vector<2x64xf32>
    %191 = arith.divf %189, %190 : vector<2x64xf32>
    %192 = vector.extract_strided_slice %191 {offsets = [0, 0], sizes = [2, 32], strides = [1, 1]} : vector<2x64xf32> to vector<2x32xf32>
    %193 = vector.extract_strided_slice %191 {offsets = [0, 32], sizes = [2, 32], strides = [1, 1]} : vector<2x64xf32> to vector<2x32xf32>
    %194 = vector.extract_strided_slice %185 {offsets = [0, 64], sizes = [2, 32], strides = [1, 1]} : vector<2x128xf32> to vector<2x32xf32>
    %195 = vector.extract_strided_slice %185 {offsets = [0, 96], sizes = [2, 32], strides = [1, 1]} : vector<2x128xf32> to vector<2x32xf32>
    %196 = arith.mulf %192, %195 : vector<2x32xf32>
    %197 = arith.addf %194, %196 : vector<2x32xf32>
    %198 = math.tanh %197 : vector<2x32xf32>
    %cst_77 = arith.constant 1.000000e+00 : f32
    %199 = vector.broadcast %cst_77 : f32 to vector<2x32xf32>
    %200 = arith.subf %199, %193 : vector<2x32xf32>
    %201 = arith.mulf %200, %198 : vector<2x32xf32>
    %202 = arith.mulf %193, %98 : vector<2x32xf32>
    %203 = arith.addf %201, %202 : vector<2x32xf32>
    %204 = tpu.concatenate %203, %124 in 1 : vector<2x32xf32>, vector<2x32xf32> -> vector<2x64xf32>
    %c2_78 = arith.constant 2 : index
    %c0_79 = arith.constant 0 : index
    %c0_80 = arith.constant 0 : index
    %205 = vector.load %arg7[%c2_78, %c0_79, %c0_80] : memref<3x64x128xf32, #tpu.memory_space<vmem>>, vector<1x64x128xf32>
    %206 = vector.shape_cast %205 : vector<1x64x128xf32> to vector<64x128xf32>
    %cst_81 = arith.constant dense<0.000000e+00> : vector<2x128xf32>
    %207 = tpu.matmul %204, %206, %cst_81 {dimension_numbers = #tpu.dot_dimension_numbers<[1], [0], [0], [1], [0, 0, 1, 1], [], []>} : vector<2x64xf32>, vector<64x128xf32>, vector<2x128xf32> -> vector<2x128xf32>
    %c2_82 = arith.constant 2 : index
    %c0_83 = arith.constant 0 : index
    %c0_84 = arith.constant 0 : index
    %208 = vector.load %arg8[%c2_82, %c0_83, %c0_84] : memref<3x1x128xf32, #tpu.memory_space<vmem>>, vector<1x1x128xf32>
    %209 = vector.shape_cast %208 : vector<1x1x128xf32> to vector<1x128xf32>
    %210 = vector.broadcast %209 : vector<1x128xf32> to vector<2x128xf32>
    %211 = arith.addf %207, %210 : vector<2x128xf32>
    %212 = vector.extract_strided_slice %211 {offsets = [0, 0], sizes = [2, 64], strides = [1, 1]} : vector<2x128xf32> to vector<2x64xf32>
    %213 = arith.negf %212 : vector<2x64xf32>
    %214 = math.exp %213 : vector<2x64xf32>
    %cst_85 = arith.constant 1.000000e+00 : f32
    %215 = vector.broadcast %cst_85 : f32 to vector<2x64xf32>
    %216 = arith.addf %215, %214 : vector<2x64xf32>
    %217 = arith.divf %215, %216 : vector<2x64xf32>
    %218 = vector.extract_strided_slice %217 {offsets = [0, 0], sizes = [2, 32], strides = [1, 1]} : vector<2x64xf32> to vector<2x32xf32>
    %219 = vector.extract_strided_slice %217 {offsets = [0, 32], sizes = [2, 32], strides = [1, 1]} : vector<2x64xf32> to vector<2x32xf32>
    %220 = vector.extract_strided_slice %211 {offsets = [0, 64], sizes = [2, 32], strides = [1, 1]} : vector<2x128xf32> to vector<2x32xf32>
    %221 = vector.extract_strided_slice %211 {offsets = [0, 96], sizes = [2, 32], strides = [1, 1]} : vector<2x128xf32> to vector<2x32xf32>
    %222 = arith.mulf %218, %221 : vector<2x32xf32>
    %223 = arith.addf %220, %222 : vector<2x32xf32>
    %224 = math.tanh %223 : vector<2x32xf32>
    %cst_86 = arith.constant 1.000000e+00 : f32
    %225 = vector.broadcast %cst_86 : f32 to vector<2x32xf32>
    %226 = arith.subf %225, %219 : vector<2x32xf32>
    %227 = arith.mulf %226, %224 : vector<2x32xf32>
    %228 = arith.mulf %219, %124 : vector<2x32xf32>
    %229 = arith.addf %227, %228 : vector<2x32xf32>
    %c2_87 = arith.constant 2 : index
    %c0_88 = arith.constant 0 : index
    %230 = vector.load %arg13[%c2_87, %c0_88] : memref<16x32xf32, #tpu.memory_space<vmem>>, vector<2x32xf32>
    tpu.vector_store %arg13[%c2_87, %c0_88], %229 {strides = array<i32>} : memref<16x32xf32, #tpu.memory_space<vmem>>, vector<2x32xf32>,
    %231 = vector.extract_strided_slice %12 {offsets = [4, 0], sizes = [2, 96], strides = [1, 1]} : vector<16x96xf32> to vector<2x96xf32>
    %c0_89 = arith.constant 0 : index
    %c0_90 = arith.constant 0 : index
    %232 = vector.load %arg5[%c0_89, %c0_90] : memref<32x96xf32, #tpu.memory_space<vmem>>, vector<32x96xf32>
    %cst_91 = arith.constant dense<0.000000e+00> : vector<2x96xf32>
    %233 = tpu.matmul %151, %232, %cst_91 {dimension_numbers = #tpu.dot_dimension_numbers<[1], [0], [0], [1], [0, 0, 1, 1], [], []>} : vector<2x32xf32>, vector<32x96xf32>, vector<2x96xf32> -> vector<2x96xf32>
    %c0_92 = arith.constant 0 : index
    %c0_93 = arith.constant 0 : index
    %234 = vector.load %arg6[%c0_92, %c0_93] : memref<1x96xf32, #tpu.memory_space<vmem>>, vector<1x96xf32>
    %235 = vector.broadcast %234 : vector<1x96xf32> to vector<2x96xf32>
    %236 = arith.addf %233, %235 : vector<2x96xf32>
    %237 = vector.extract_strided_slice %231 {offsets = [0, 0], sizes = [2, 64], strides = [1, 1]} : vector<2x96xf32> to vector<2x64xf32>
    %238 = vector.extract_strided_slice %236 {offsets = [0, 0], sizes = [2, 64], strides = [1, 1]} : vector<2x96xf32> to vector<2x64xf32>
    %239 = arith.addf %237, %238 : vector<2x64xf32>
    %240 = arith.negf %239 : vector<2x64xf32>
    %241 = math.exp %240 : vector<2x64xf32>
    %cst_94 = arith.constant 1.000000e+00 : f32
    %242 = vector.broadcast %cst_94 : f32 to vector<2x64xf32>
    %243 = arith.addf %242, %241 : vector<2x64xf32>
    %244 = arith.divf %242, %243 : vector<2x64xf32>
    %245 = vector.extract_strided_slice %244 {offsets = [0, 0], sizes = [2, 32], strides = [1, 1]} : vector<2x64xf32> to vector<2x32xf32>
    %246 = vector.extract_strided_slice %244 {offsets = [0, 32], sizes = [2, 32], strides = [1, 1]} : vector<2x64xf32> to vector<2x32xf32>
    %247 = vector.extract_strided_slice %231 {offsets = [0, 64], sizes = [2, 32], strides = [1, 1]} : vector<2x96xf32> to vector<2x32xf32>
    %248 = vector.extract_strided_slice %236 {offsets = [0, 64], sizes = [2, 32], strides = [1, 1]} : vector<2x96xf32> to vector<2x32xf32>
    %249 = arith.mulf %245, %248 : vector<2x32xf32>
    %250 = arith.addf %247, %249 : vector<2x32xf32>
    %251 = math.tanh %250 : vector<2x32xf32>
    %cst_95 = arith.constant 1.000000e+00 : f32
    %252 = vector.broadcast %cst_95 : f32 to vector<2x32xf32>
    %253 = arith.subf %252, %246 : vector<2x32xf32>
    %254 = arith.mulf %253, %251 : vector<2x32xf32>
    %255 = arith.mulf %246, %151 : vector<2x32xf32>
    %256 = arith.addf %254, %255 : vector<2x32xf32>
    %257 = tpu.concatenate %256, %177 in 1 : vector<2x32xf32>, vector<2x32xf32> -> vector<2x64xf32>
    %c0_96 = arith.constant 0 : index
    %c0_97 = arith.constant 0 : index
    %c0_98 = arith.constant 0 : index
    %258 = vector.load %arg7[%c0_96, %c0_97, %c0_98] : memref<3x64x128xf32, #tpu.memory_space<vmem>>, vector<1x64x128xf32>
    %259 = vector.shape_cast %258 : vector<1x64x128xf32> to vector<64x128xf32>
    %cst_99 = arith.constant dense<0.000000e+00> : vector<2x128xf32>
    %260 = tpu.matmul %257, %259, %cst_99 {dimension_numbers = #tpu.dot_dimension_numbers<[1], [0], [0], [1], [0, 0, 1, 1], [], []>} : vector<2x64xf32>, vector<64x128xf32>, vector<2x128xf32> -> vector<2x128xf32>
    %c0_100 = arith.constant 0 : index
    %c0_101 = arith.constant 0 : index
    %c0_102 = arith.constant 0 : index
    %261 = vector.load %arg8[%c0_100, %c0_101, %c0_102] : memref<3x1x128xf32, #tpu.memory_space<vmem>>, vector<1x1x128xf32>
    %262 = vector.shape_cast %261 : vector<1x1x128xf32> to vector<1x128xf32>
    %263 = vector.broadcast %262 : vector<1x128xf32> to vector<2x128xf32>
    %264 = arith.addf %260, %263 : vector<2x128xf32>
    %265 = vector.extract_strided_slice %264 {offsets = [0, 0], sizes = [2, 64], strides = [1, 1]} : vector<2x128xf32> to vector<2x64xf32>
    %266 = arith.negf %265 : vector<2x64xf32>
    %267 = math.exp %266 : vector<2x64xf32>
    %cst_103 = arith.constant 1.000000e+00 : f32
    %268 = vector.broadcast %cst_103 : f32 to vector<2x64xf32>
    %269 = arith.addf %268, %267 : vector<2x64xf32>
    %270 = arith.divf %268, %269 : vector<2x64xf32>
    %271 = vector.extract_strided_slice %270 {offsets = [0, 0], sizes = [2, 32], strides = [1, 1]} : vector<2x64xf32> to vector<2x32xf32>
    %272 = vector.extract_strided_slice %270 {offsets = [0, 32], sizes = [2, 32], strides = [1, 1]} : vector<2x64xf32> to vector<2x32xf32>
    %273 = vector.extract_strided_slice %264 {offsets = [0, 64], sizes = [2, 32], strides = [1, 1]} : vector<2x128xf32> to vector<2x32xf32>
    %274 = vector.extract_strided_slice %264 {offsets = [0, 96], sizes = [2, 32], strides = [1, 1]} : vector<2x128xf32> to vector<2x32xf32>
    %275 = arith.mulf %271, %274 : vector<2x32xf32>
    %276 = arith.addf %273, %275 : vector<2x32xf32>
    %277 = math.tanh %276 : vector<2x32xf32>
    %cst_104 = arith.constant 1.000000e+00 : f32
    %278 = vector.broadcast %cst_104 : f32 to vector<2x32xf32>
    %279 = arith.subf %278, %272 : vector<2x32xf32>
    %280 = arith.mulf %279, %277 : vector<2x32xf32>
    %281 = arith.mulf %272, %177 : vector<2x32xf32>
    %282 = arith.addf %280, %281 : vector<2x32xf32>
    %283 = tpu.concatenate %282, %203 in 1 : vector<2x32xf32>, vector<2x32xf32> -> vector<2x64xf32>
    %c1_105 = arith.constant 1 : index
    %c0_106 = arith.constant 0 : index
    %c0_107 = arith.constant 0 : index
    %284 = vector.load %arg7[%c1_105, %c0_106, %c0_107] : memref<3x64x128xf32, #tpu.memory_space<vmem>>, vector<1x64x128xf32>
    %285 = vector.shape_cast %284 : vector<1x64x128xf32> to vector<64x128xf32>
    %cst_108 = arith.constant dense<0.000000e+00> : vector<2x128xf32>
    %286 = tpu.matmul %283, %285, %cst_108 {dimension_numbers = #tpu.dot_dimension_numbers<[1], [0], [0], [1], [0, 0, 1, 1], [], []>} : vector<2x64xf32>, vector<64x128xf32>, vector<2x128xf32> -> vector<2x128xf32>
    %c1_109 = arith.constant 1 : index
    %c0_110 = arith.constant 0 : index
    %c0_111 = arith.constant 0 : index
    %287 = vector.load %arg8[%c1_109, %c0_110, %c0_111] : memref<3x1x128xf32, #tpu.memory_space<vmem>>, vector<1x1x128xf32>
    %288 = vector.shape_cast %287 : vector<1x1x128xf32> to vector<1x128xf32>
    %289 = vector.broadcast %288 : vector<1x128xf32> to vector<2x128xf32>
    %290 = arith.addf %286, %289 : vector<2x128xf32>
    %291 = vector.extract_strided_slice %290 {offsets = [0, 0], sizes = [2, 64], strides = [1, 1]} : vector<2x128xf32> to vector<2x64xf32>
    %292 = arith.negf %291 : vector<2x64xf32>
    %293 = math.exp %292 : vector<2x64xf32>
    %cst_112 = arith.constant 1.000000e+00 : f32
    %294 = vector.broadcast %cst_112 : f32 to vector<2x64xf32>
    %295 = arith.addf %294, %293 : vector<2x64xf32>
    %296 = arith.divf %294, %295 : vector<2x64xf32>
    %297 = vector.extract_strided_slice %296 {offsets = [0, 0], sizes = [2, 32], strides = [1, 1]} : vector<2x64xf32> to vector<2x32xf32>
    %298 = vector.extract_strided_slice %296 {offsets = [0, 32], sizes = [2, 32], strides = [1, 1]} : vector<2x64xf32> to vector<2x32xf32>
    %299 = vector.extract_strided_slice %290 {offsets = [0, 64], sizes = [2, 32], strides = [1, 1]} : vector<2x128xf32> to vector<2x32xf32>
    %300 = vector.extract_strided_slice %290 {offsets = [0, 96], sizes = [2, 32], strides = [1, 1]} : vector<2x128xf32> to vector<2x32xf32>
    %301 = arith.mulf %297, %300 : vector<2x32xf32>
    %302 = arith.addf %299, %301 : vector<2x32xf32>
    %303 = math.tanh %302 : vector<2x32xf32>
    %cst_113 = arith.constant 1.000000e+00 : f32
    %304 = vector.broadcast %cst_113 : f32 to vector<2x32xf32>
    %305 = arith.subf %304, %298 : vector<2x32xf32>
    %306 = arith.mulf %305, %303 : vector<2x32xf32>
    %307 = arith.mulf %298, %203 : vector<2x32xf32>
    %308 = arith.addf %306, %307 : vector<2x32xf32>
    %309 = tpu.concatenate %308, %229 in 1 : vector<2x32xf32>, vector<2x32xf32> -> vector<2x64xf32>
    %c2_114 = arith.constant 2 : index
    %c0_115 = arith.constant 0 : index
    %c0_116 = arith.constant 0 : index
    %310 = vector.load %arg7[%c2_114, %c0_115, %c0_116] : memref<3x64x128xf32, #tpu.memory_space<vmem>>, vector<1x64x128xf32>
    %311 = vector.shape_cast %310 : vector<1x64x128xf32> to vector<64x128xf32>
    %cst_117 = arith.constant dense<0.000000e+00> : vector<2x128xf32>
    %312 = tpu.matmul %309, %311, %cst_117 {dimension_numbers = #tpu.dot_dimension_numbers<[1], [0], [0], [1], [0, 0, 1, 1], [], []>} : vector<2x64xf32>, vector<64x128xf32>, vector<2x128xf32> -> vector<2x128xf32>
    %c2_118 = arith.constant 2 : index
    %c0_119 = arith.constant 0 : index
    %c0_120 = arith.constant 0 : index
    %313 = vector.load %arg8[%c2_118, %c0_119, %c0_120] : memref<3x1x128xf32, #tpu.memory_space<vmem>>, vector<1x1x128xf32>
    %314 = vector.shape_cast %313 : vector<1x1x128xf32> to vector<1x128xf32>
    %315 = vector.broadcast %314 : vector<1x128xf32> to vector<2x128xf32>
    %316 = arith.addf %312, %315 : vector<2x128xf32>
    %317 = vector.extract_strided_slice %316 {offsets = [0, 0], sizes = [2, 64], strides = [1, 1]} : vector<2x128xf32> to vector<2x64xf32>
    %318 = arith.negf %317 : vector<2x64xf32>
    %319 = math.exp %318 : vector<2x64xf32>
    %cst_121 = arith.constant 1.000000e+00 : f32
    %320 = vector.broadcast %cst_121 : f32 to vector<2x64xf32>
    %321 = arith.addf %320, %319 : vector<2x64xf32>
    %322 = arith.divf %320, %321 : vector<2x64xf32>
    %323 = vector.extract_strided_slice %322 {offsets = [0, 0], sizes = [2, 32], strides = [1, 1]} : vector<2x64xf32> to vector<2x32xf32>
    %324 = vector.extract_strided_slice %322 {offsets = [0, 32], sizes = [2, 32], strides = [1, 1]} : vector<2x64xf32> to vector<2x32xf32>
    %325 = vector.extract_strided_slice %316 {offsets = [0, 64], sizes = [2, 32], strides = [1, 1]} : vector<2x128xf32> to vector<2x32xf32>
    %326 = vector.extract_strided_slice %316 {offsets = [0, 96], sizes = [2, 32], strides = [1, 1]} : vector<2x128xf32> to vector<2x32xf32>
    %327 = arith.mulf %323, %326 : vector<2x32xf32>
    %328 = arith.addf %325, %327 : vector<2x32xf32>
    %329 = math.tanh %328 : vector<2x32xf32>
    %cst_122 = arith.constant 1.000000e+00 : f32
    %330 = vector.broadcast %cst_122 : f32 to vector<2x32xf32>
    %331 = arith.subf %330, %324 : vector<2x32xf32>
    %332 = arith.mulf %331, %329 : vector<2x32xf32>
    %333 = arith.mulf %324, %229 : vector<2x32xf32>
    %334 = arith.addf %332, %333 : vector<2x32xf32>
    %c4 = arith.constant 4 : index
    %c0_123 = arith.constant 0 : index
    %335 = vector.load %arg13[%c4, %c0_123] : memref<16x32xf32, #tpu.memory_space<vmem>>, vector<2x32xf32>
    tpu.vector_store %arg13[%c4, %c0_123], %334 {strides = array<i32>} : memref<16x32xf32, #tpu.memory_space<vmem>>, vector<2x32xf32>,
    %336 = vector.extract_strided_slice %12 {offsets = [6, 0], sizes = [2, 96], strides = [1, 1]} : vector<16x96xf32> to vector<2x96xf32>
    %c0_124 = arith.constant 0 : index
    %c0_125 = arith.constant 0 : index
    %337 = vector.load %arg5[%c0_124, %c0_125] : memref<32x96xf32, #tpu.memory_space<vmem>>, vector<32x96xf32>
    %cst_126 = arith.constant dense<0.000000e+00> : vector<2x96xf32>
    %338 = tpu.matmul %256, %337, %cst_126 {dimension_numbers = #tpu.dot_dimension_numbers<[1], [0], [0], [1], [0, 0, 1, 1], [], []>} : vector<2x32xf32>, vector<32x96xf32>, vector<2x96xf32> -> vector<2x96xf32>
    %c0_127 = arith.constant 0 : index
    %c0_128 = arith.constant 0 : index
    %339 = vector.load %arg6[%c0_127, %c0_128] : memref<1x96xf32, #tpu.memory_space<vmem>>, vector<1x96xf32>
    %340 = vector.broadcast %339 : vector<1x96xf32> to vector<2x96xf32>
    %341 = arith.addf %338, %340 : vector<2x96xf32>
    %342 = vector.extract_strided_slice %336 {offsets = [0, 0], sizes = [2, 64], strides = [1, 1]} : vector<2x96xf32> to vector<2x64xf32>
    %343 = vector.extract_strided_slice %341 {offsets = [0, 0], sizes = [2, 64], strides = [1, 1]} : vector<2x96xf32> to vector<2x64xf32>
    %344 = arith.addf %342, %343 : vector<2x64xf32>
    %345 = arith.negf %344 : vector<2x64xf32>
    %346 = math.exp %345 : vector<2x64xf32>
    %cst_129 = arith.constant 1.000000e+00 : f32
    %347 = vector.broadcast %cst_129 : f32 to vector<2x64xf32>
    %348 = arith.addf %347, %346 : vector<2x64xf32>
    %349 = arith.divf %347, %348 : vector<2x64xf32>
    %350 = vector.extract_strided_slice %349 {offsets = [0, 0], sizes = [2, 32], strides = [1, 1]} : vector<2x64xf32> to vector<2x32xf32>
    %351 = vector.extract_strided_slice %349 {offsets = [0, 32], sizes = [2, 32], strides = [1, 1]} : vector<2x64xf32> to vector<2x32xf32>
    %352 = vector.extract_strided_slice %336 {offsets = [0, 64], sizes = [2, 32], strides = [1, 1]} : vector<2x96xf32> to vector<2x32xf32>
    %353 = vector.extract_strided_slice %341 {offsets = [0, 64], sizes = [2, 32], strides = [1, 1]} : vector<2x96xf32> to vector<2x32xf32>
    %354 = arith.mulf %350, %353 : vector<2x32xf32>
    %355 = arith.addf %352, %354 : vector<2x32xf32>
    %356 = math.tanh %355 : vector<2x32xf32>
    %cst_130 = arith.constant 1.000000e+00 : f32
    %357 = vector.broadcast %cst_130 : f32 to vector<2x32xf32>
    %358 = arith.subf %357, %351 : vector<2x32xf32>
    %359 = arith.mulf %358, %356 : vector<2x32xf32>
    %360 = arith.mulf %351, %256 : vector<2x32xf32>
    %361 = arith.addf %359, %360 : vector<2x32xf32>
    %362 = tpu.concatenate %361, %282 in 1 : vector<2x32xf32>, vector<2x32xf32> -> vector<2x64xf32>
    %c0_131 = arith.constant 0 : index
    %c0_132 = arith.constant 0 : index
    %c0_133 = arith.constant 0 : index
    %363 = vector.load %arg7[%c0_131, %c0_132, %c0_133] : memref<3x64x128xf32, #tpu.memory_space<vmem>>, vector<1x64x128xf32>
    %364 = vector.shape_cast %363 : vector<1x64x128xf32> to vector<64x128xf32>
    %cst_134 = arith.constant dense<0.000000e+00> : vector<2x128xf32>
    %365 = tpu.matmul %362, %364, %cst_134 {dimension_numbers = #tpu.dot_dimension_numbers<[1], [0], [0], [1], [0, 0, 1, 1], [], []>} : vector<2x64xf32>, vector<64x128xf32>, vector<2x128xf32> -> vector<2x128xf32>
    %c0_135 = arith.constant 0 : index
    %c0_136 = arith.constant 0 : index
    %c0_137 = arith.constant 0 : index
    %366 = vector.load %arg8[%c0_135, %c0_136, %c0_137] : memref<3x1x128xf32, #tpu.memory_space<vmem>>, vector<1x1x128xf32>
    %367 = vector.shape_cast %366 : vector<1x1x128xf32> to vector<1x128xf32>
    %368 = vector.broadcast %367 : vector<1x128xf32> to vector<2x128xf32>
    %369 = arith.addf %365, %368 : vector<2x128xf32>
    %370 = vector.extract_strided_slice %369 {offsets = [0, 0], sizes = [2, 64], strides = [1, 1]} : vector<2x128xf32> to vector<2x64xf32>
    %371 = arith.negf %370 : vector<2x64xf32>
    %372 = math.exp %371 : vector<2x64xf32>
    %cst_138 = arith.constant 1.000000e+00 : f32
    %373 = vector.broadcast %cst_138 : f32 to vector<2x64xf32>
    %374 = arith.addf %373, %372 : vector<2x64xf32>
    %375 = arith.divf %373, %374 : vector<2x64xf32>
    %376 = vector.extract_strided_slice %375 {offsets = [0, 0], sizes = [2, 32], strides = [1, 1]} : vector<2x64xf32> to vector<2x32xf32>
    %377 = vector.extract_strided_slice %375 {offsets = [0, 32], sizes = [2, 32], strides = [1, 1]} : vector<2x64xf32> to vector<2x32xf32>
    %378 = vector.extract_strided_slice %369 {offsets = [0, 64], sizes = [2, 32], strides = [1, 1]} : vector<2x128xf32> to vector<2x32xf32>
    %379 = vector.extract_strided_slice %369 {offsets = [0, 96], sizes = [2, 32], strides = [1, 1]} : vector<2x128xf32> to vector<2x32xf32>
    %380 = arith.mulf %376, %379 : vector<2x32xf32>
    %381 = arith.addf %378, %380 : vector<2x32xf32>
    %382 = math.tanh %381 : vector<2x32xf32>
    %cst_139 = arith.constant 1.000000e+00 : f32
    %383 = vector.broadcast %cst_139 : f32 to vector<2x32xf32>
    %384 = arith.subf %383, %377 : vector<2x32xf32>
    %385 = arith.mulf %384, %382 : vector<2x32xf32>
    %386 = arith.mulf %377, %282 : vector<2x32xf32>
    %387 = arith.addf %385, %386 : vector<2x32xf32>
    %388 = tpu.concatenate %387, %308 in 1 : vector<2x32xf32>, vector<2x32xf32> -> vector<2x64xf32>
    %c1_140 = arith.constant 1 : index
    %c0_141 = arith.constant 0 : index
    %c0_142 = arith.constant 0 : index
    %389 = vector.load %arg7[%c1_140, %c0_141, %c0_142] : memref<3x64x128xf32, #tpu.memory_space<vmem>>, vector<1x64x128xf32>
    %390 = vector.shape_cast %389 : vector<1x64x128xf32> to vector<64x128xf32>
    %cst_143 = arith.constant dense<0.000000e+00> : vector<2x128xf32>
    %391 = tpu.matmul %388, %390, %cst_143 {dimension_numbers = #tpu.dot_dimension_numbers<[1], [0], [0], [1], [0, 0, 1, 1], [], []>} : vector<2x64xf32>, vector<64x128xf32>, vector<2x128xf32> -> vector<2x128xf32>
    %c1_144 = arith.constant 1 : index
    %c0_145 = arith.constant 0 : index
    %c0_146 = arith.constant 0 : index
    %392 = vector.load %arg8[%c1_144, %c0_145, %c0_146] : memref<3x1x128xf32, #tpu.memory_space<vmem>>, vector<1x1x128xf32>
    %393 = vector.shape_cast %392 : vector<1x1x128xf32> to vector<1x128xf32>
    %394 = vector.broadcast %393 : vector<1x128xf32> to vector<2x128xf32>
    %395 = arith.addf %391, %394 : vector<2x128xf32>
    %396 = vector.extract_strided_slice %395 {offsets = [0, 0], sizes = [2, 64], strides = [1, 1]} : vector<2x128xf32> to vector<2x64xf32>
    %397 = arith.negf %396 : vector<2x64xf32>
    %398 = math.exp %397 : vector<2x64xf32>
    %cst_147 = arith.constant 1.000000e+00 : f32
    %399 = vector.broadcast %cst_147 : f32 to vector<2x64xf32>
    %400 = arith.addf %399, %398 : vector<2x64xf32>
    %401 = arith.divf %399, %400 : vector<2x64xf32>
    %402 = vector.extract_strided_slice %401 {offsets = [0, 0], sizes = [2, 32], strides = [1, 1]} : vector<2x64xf32> to vector<2x32xf32>
    %403 = vector.extract_strided_slice %401 {offsets = [0, 32], sizes = [2, 32], strides = [1, 1]} : vector<2x64xf32> to vector<2x32xf32>
    %404 = vector.extract_strided_slice %395 {offsets = [0, 64], sizes = [2, 32], strides = [1, 1]} : vector<2x128xf32> to vector<2x32xf32>
    %405 = vector.extract_strided_slice %395 {offsets = [0, 96], sizes = [2, 32], strides = [1, 1]} : vector<2x128xf32> to vector<2x32xf32>
    %406 = arith.mulf %402, %405 : vector<2x32xf32>
    %407 = arith.addf %404, %406 : vector<2x32xf32>
    %408 = math.tanh %407 : vector<2x32xf32>
    %cst_148 = arith.constant 1.000000e+00 : f32
    %409 = vector.broadcast %cst_148 : f32 to vector<2x32xf32>
    %410 = arith.subf %409, %403 : vector<2x32xf32>
    %411 = arith.mulf %410, %408 : vector<2x32xf32>
    %412 = arith.mulf %403, %308 : vector<2x32xf32>
    %413 = arith.addf %411, %412 : vector<2x32xf32>
    %414 = tpu.concatenate %413, %334 in 1 : vector<2x32xf32>, vector<2x32xf32> -> vector<2x64xf32>
    %c2_149 = arith.constant 2 : index
    %c0_150 = arith.constant 0 : index
    %c0_151 = arith.constant 0 : index
    %415 = vector.load %arg7[%c2_149, %c0_150, %c0_151] : memref<3x64x128xf32, #tpu.memory_space<vmem>>, vector<1x64x128xf32>
    %416 = vector.shape_cast %415 : vector<1x64x128xf32> to vector<64x128xf32>
    %cst_152 = arith.constant dense<0.000000e+00> : vector<2x128xf32>
    %417 = tpu.matmul %414, %416, %cst_152 {dimension_numbers = #tpu.dot_dimension_numbers<[1], [0], [0], [1], [0, 0, 1, 1], [], []>} : vector<2x64xf32>, vector<64x128xf32>, vector<2x128xf32> -> vector<2x128xf32>
    %c2_153 = arith.constant 2 : index
    %c0_154 = arith.constant 0 : index
    %c0_155 = arith.constant 0 : index
    %418 = vector.load %arg8[%c2_153, %c0_154, %c0_155] : memref<3x1x128xf32, #tpu.memory_space<vmem>>, vector<1x1x128xf32>
    %419 = vector.shape_cast %418 : vector<1x1x128xf32> to vector<1x128xf32>
    %420 = vector.broadcast %419 : vector<1x128xf32> to vector<2x128xf32>
    %421 = arith.addf %417, %420 : vector<2x128xf32>
    %422 = vector.extract_strided_slice %421 {offsets = [0, 0], sizes = [2, 64], strides = [1, 1]} : vector<2x128xf32> to vector<2x64xf32>
    %423 = arith.negf %422 : vector<2x64xf32>
    %424 = math.exp %423 : vector<2x64xf32>
    %cst_156 = arith.constant 1.000000e+00 : f32
    %425 = vector.broadcast %cst_156 : f32 to vector<2x64xf32>
    %426 = arith.addf %425, %424 : vector<2x64xf32>
    %427 = arith.divf %425, %426 : vector<2x64xf32>
    %428 = vector.extract_strided_slice %427 {offsets = [0, 0], sizes = [2, 32], strides = [1, 1]} : vector<2x64xf32> to vector<2x32xf32>
    %429 = vector.extract_strided_slice %427 {offsets = [0, 32], sizes = [2, 32], strides = [1, 1]} : vector<2x64xf32> to vector<2x32xf32>
    %430 = vector.extract_strided_slice %421 {offsets = [0, 64], sizes = [2, 32], strides = [1, 1]} : vector<2x128xf32> to vector<2x32xf32>
    %431 = vector.extract_strided_slice %421 {offsets = [0, 96], sizes = [2, 32], strides = [1, 1]} : vector<2x128xf32> to vector<2x32xf32>
    %432 = arith.mulf %428, %431 : vector<2x32xf32>
    %433 = arith.addf %430, %432 : vector<2x32xf32>
    %434 = math.tanh %433 : vector<2x32xf32>
    %cst_157 = arith.constant 1.000000e+00 : f32
    %435 = vector.broadcast %cst_157 : f32 to vector<2x32xf32>
    %436 = arith.subf %435, %429 : vector<2x32xf32>
    %437 = arith.mulf %436, %434 : vector<2x32xf32>
    %438 = arith.mulf %429, %334 : vector<2x32xf32>
    %439 = arith.addf %437, %438 : vector<2x32xf32>
    %c6 = arith.constant 6 : index
    %c0_158 = arith.constant 0 : index
    %440 = vector.load %arg13[%c6, %c0_158] : memref<16x32xf32, #tpu.memory_space<vmem>>, vector<2x32xf32>
    tpu.vector_store %arg13[%c6, %c0_158], %439 {strides = array<i32>} : memref<16x32xf32, #tpu.memory_space<vmem>>, vector<2x32xf32>,
    %441 = vector.extract_strided_slice %12 {offsets = [8, 0], sizes = [2, 96], strides = [1, 1]} : vector<16x96xf32> to vector<2x96xf32>
    %c0_159 = arith.constant 0 : index
    %c0_160 = arith.constant 0 : index
    %442 = vector.load %arg5[%c0_159, %c0_160] : memref<32x96xf32, #tpu.memory_space<vmem>>, vector<32x96xf32>
    %cst_161 = arith.constant dense<0.000000e+00> : vector<2x96xf32>
    %443 = tpu.matmul %361, %442, %cst_161 {dimension_numbers = #tpu.dot_dimension_numbers<[1], [0], [0], [1], [0, 0, 1, 1], [], []>} : vector<2x32xf32>, vector<32x96xf32>, vector<2x96xf32> -> vector<2x96xf32>
    %c0_162 = arith.constant 0 : index
    %c0_163 = arith.constant 0 : index
    %444 = vector.load %arg6[%c0_162, %c0_163] : memref<1x96xf32, #tpu.memory_space<vmem>>, vector<1x96xf32>
    %445 = vector.broadcast %444 : vector<1x96xf32> to vector<2x96xf32>
    %446 = arith.addf %443, %445 : vector<2x96xf32>
    %447 = vector.extract_strided_slice %441 {offsets = [0, 0], sizes = [2, 64], strides = [1, 1]} : vector<2x96xf32> to vector<2x64xf32>
    %448 = vector.extract_strided_slice %446 {offsets = [0, 0], sizes = [2, 64], strides = [1, 1]} : vector<2x96xf32> to vector<2x64xf32>
    %449 = arith.addf %447, %448 : vector<2x64xf32>
    %450 = arith.negf %449 : vector<2x64xf32>
    %451 = math.exp %450 : vector<2x64xf32>
    %cst_164 = arith.constant 1.000000e+00 : f32
    %452 = vector.broadcast %cst_164 : f32 to vector<2x64xf32>
    %453 = arith.addf %452, %451 : vector<2x64xf32>
    %454 = arith.divf %452, %453 : vector<2x64xf32>
    %455 = vector.extract_strided_slice %454 {offsets = [0, 0], sizes = [2, 32], strides = [1, 1]} : vector<2x64xf32> to vector<2x32xf32>
    %456 = vector.extract_strided_slice %454 {offsets = [0, 32], sizes = [2, 32], strides = [1, 1]} : vector<2x64xf32> to vector<2x32xf32>
    %457 = vector.extract_strided_slice %441 {offsets = [0, 64], sizes = [2, 32], strides = [1, 1]} : vector<2x96xf32> to vector<2x32xf32>
    %458 = vector.extract_strided_slice %446 {offsets = [0, 64], sizes = [2, 32], strides = [1, 1]} : vector<2x96xf32> to vector<2x32xf32>
    %459 = arith.mulf %455, %458 : vector<2x32xf32>
    %460 = arith.addf %457, %459 : vector<2x32xf32>
    %461 = math.tanh %460 : vector<2x32xf32>
    %cst_165 = arith.constant 1.000000e+00 : f32
    %462 = vector.broadcast %cst_165 : f32 to vector<2x32xf32>
    %463 = arith.subf %462, %456 : vector<2x32xf32>
    %464 = arith.mulf %463, %461 : vector<2x32xf32>
    %465 = arith.mulf %456, %361 : vector<2x32xf32>
    %466 = arith.addf %464, %465 : vector<2x32xf32>
    %467 = tpu.concatenate %466, %387 in 1 : vector<2x32xf32>, vector<2x32xf32> -> vector<2x64xf32>
    %c0_166 = arith.constant 0 : index
    %c0_167 = arith.constant 0 : index
    %c0_168 = arith.constant 0 : index
    %468 = vector.load %arg7[%c0_166, %c0_167, %c0_168] : memref<3x64x128xf32, #tpu.memory_space<vmem>>, vector<1x64x128xf32>
    %469 = vector.shape_cast %468 : vector<1x64x128xf32> to vector<64x128xf32>
    %cst_169 = arith.constant dense<0.000000e+00> : vector<2x128xf32>
    %470 = tpu.matmul %467, %469, %cst_169 {dimension_numbers = #tpu.dot_dimension_numbers<[1], [0], [0], [1], [0, 0, 1, 1], [], []>} : vector<2x64xf32>, vector<64x128xf32>, vector<2x128xf32> -> vector<2x128xf32>
    %c0_170 = arith.constant 0 : index
    %c0_171 = arith.constant 0 : index
    %c0_172 = arith.constant 0 : index
    %471 = vector.load %arg8[%c0_170, %c0_171, %c0_172] : memref<3x1x128xf32, #tpu.memory_space<vmem>>, vector<1x1x128xf32>
    %472 = vector.shape_cast %471 : vector<1x1x128xf32> to vector<1x128xf32>
    %473 = vector.broadcast %472 : vector<1x128xf32> to vector<2x128xf32>
    %474 = arith.addf %470, %473 : vector<2x128xf32>
    %475 = vector.extract_strided_slice %474 {offsets = [0, 0], sizes = [2, 64], strides = [1, 1]} : vector<2x128xf32> to vector<2x64xf32>
    %476 = arith.negf %475 : vector<2x64xf32>
    %477 = math.exp %476 : vector<2x64xf32>
    %cst_173 = arith.constant 1.000000e+00 : f32
    %478 = vector.broadcast %cst_173 : f32 to vector<2x64xf32>
    %479 = arith.addf %478, %477 : vector<2x64xf32>
    %480 = arith.divf %478, %479 : vector<2x64xf32>
    %481 = vector.extract_strided_slice %480 {offsets = [0, 0], sizes = [2, 32], strides = [1, 1]} : vector<2x64xf32> to vector<2x32xf32>
    %482 = vector.extract_strided_slice %480 {offsets = [0, 32], sizes = [2, 32], strides = [1, 1]} : vector<2x64xf32> to vector<2x32xf32>
    %483 = vector.extract_strided_slice %474 {offsets = [0, 64], sizes = [2, 32], strides = [1, 1]} : vector<2x128xf32> to vector<2x32xf32>
    %484 = vector.extract_strided_slice %474 {offsets = [0, 96], sizes = [2, 32], strides = [1, 1]} : vector<2x128xf32> to vector<2x32xf32>
    %485 = arith.mulf %481, %484 : vector<2x32xf32>
    %486 = arith.addf %483, %485 : vector<2x32xf32>
    %487 = math.tanh %486 : vector<2x32xf32>
    %cst_174 = arith.constant 1.000000e+00 : f32
    %488 = vector.broadcast %cst_174 : f32 to vector<2x32xf32>
    %489 = arith.subf %488, %482 : vector<2x32xf32>
    %490 = arith.mulf %489, %487 : vector<2x32xf32>
    %491 = arith.mulf %482, %387 : vector<2x32xf32>
    %492 = arith.addf %490, %491 : vector<2x32xf32>
    %493 = tpu.concatenate %492, %413 in 1 : vector<2x32xf32>, vector<2x32xf32> -> vector<2x64xf32>
    %c1_175 = arith.constant 1 : index
    %c0_176 = arith.constant 0 : index
    %c0_177 = arith.constant 0 : index
    %494 = vector.load %arg7[%c1_175, %c0_176, %c0_177] : memref<3x64x128xf32, #tpu.memory_space<vmem>>, vector<1x64x128xf32>
    %495 = vector.shape_cast %494 : vector<1x64x128xf32> to vector<64x128xf32>
    %cst_178 = arith.constant dense<0.000000e+00> : vector<2x128xf32>
    %496 = tpu.matmul %493, %495, %cst_178 {dimension_numbers = #tpu.dot_dimension_numbers<[1], [0], [0], [1], [0, 0, 1, 1], [], []>} : vector<2x64xf32>, vector<64x128xf32>, vector<2x128xf32> -> vector<2x128xf32>
    %c1_179 = arith.constant 1 : index
    %c0_180 = arith.constant 0 : index
    %c0_181 = arith.constant 0 : index
    %497 = vector.load %arg8[%c1_179, %c0_180, %c0_181] : memref<3x1x128xf32, #tpu.memory_space<vmem>>, vector<1x1x128xf32>
    %498 = vector.shape_cast %497 : vector<1x1x128xf32> to vector<1x128xf32>
    %499 = vector.broadcast %498 : vector<1x128xf32> to vector<2x128xf32>
    %500 = arith.addf %496, %499 : vector<2x128xf32>
    %501 = vector.extract_strided_slice %500 {offsets = [0, 0], sizes = [2, 64], strides = [1, 1]} : vector<2x128xf32> to vector<2x64xf32>
    %502 = arith.negf %501 : vector<2x64xf32>
    %503 = math.exp %502 : vector<2x64xf32>
    %cst_182 = arith.constant 1.000000e+00 : f32
    %504 = vector.broadcast %cst_182 : f32 to vector<2x64xf32>
    %505 = arith.addf %504, %503 : vector<2x64xf32>
    %506 = arith.divf %504, %505 : vector<2x64xf32>
    %507 = vector.extract_strided_slice %506 {offsets = [0, 0], sizes = [2, 32], strides = [1, 1]} : vector<2x64xf32> to vector<2x32xf32>
    %508 = vector.extract_strided_slice %506 {offsets = [0, 32], sizes = [2, 32], strides = [1, 1]} : vector<2x64xf32> to vector<2x32xf32>
    %509 = vector.extract_strided_slice %500 {offsets = [0, 64], sizes = [2, 32], strides = [1, 1]} : vector<2x128xf32> to vector<2x32xf32>
    %510 = vector.extract_strided_slice %500 {offsets = [0, 96], sizes = [2, 32], strides = [1, 1]} : vector<2x128xf32> to vector<2x32xf32>
    %511 = arith.mulf %507, %510 : vector<2x32xf32>
    %512 = arith.addf %509, %511 : vector<2x32xf32>
    %513 = math.tanh %512 : vector<2x32xf32>
    %cst_183 = arith.constant 1.000000e+00 : f32
    %514 = vector.broadcast %cst_183 : f32 to vector<2x32xf32>
    %515 = arith.subf %514, %508 : vector<2x32xf32>
    %516 = arith.mulf %515, %513 : vector<2x32xf32>
    %517 = arith.mulf %508, %413 : vector<2x32xf32>
    %518 = arith.addf %516, %517 : vector<2x32xf32>
    %519 = tpu.concatenate %518, %439 in 1 : vector<2x32xf32>, vector<2x32xf32> -> vector<2x64xf32>
    %c2_184 = arith.constant 2 : index
    %c0_185 = arith.constant 0 : index
    %c0_186 = arith.constant 0 : index
    %520 = vector.load %arg7[%c2_184, %c0_185, %c0_186] : memref<3x64x128xf32, #tpu.memory_space<vmem>>, vector<1x64x128xf32>
    %521 = vector.shape_cast %520 : vector<1x64x128xf32> to vector<64x128xf32>
    %cst_187 = arith.constant dense<0.000000e+00> : vector<2x128xf32>
    %522 = tpu.matmul %519, %521, %cst_187 {dimension_numbers = #tpu.dot_dimension_numbers<[1], [0], [0], [1], [0, 0, 1, 1], [], []>} : vector<2x64xf32>, vector<64x128xf32>, vector<2x128xf32> -> vector<2x128xf32>
    %c2_188 = arith.constant 2 : index
    %c0_189 = arith.constant 0 : index
    %c0_190 = arith.constant 0 : index
    %523 = vector.load %arg8[%c2_188, %c0_189, %c0_190] : memref<3x1x128xf32, #tpu.memory_space<vmem>>, vector<1x1x128xf32>
    %524 = vector.shape_cast %523 : vector<1x1x128xf32> to vector<1x128xf32>
    %525 = vector.broadcast %524 : vector<1x128xf32> to vector<2x128xf32>
    %526 = arith.addf %522, %525 : vector<2x128xf32>
    %527 = vector.extract_strided_slice %526 {offsets = [0, 0], sizes = [2, 64], strides = [1, 1]} : vector<2x128xf32> to vector<2x64xf32>
    %528 = arith.negf %527 : vector<2x64xf32>
    %529 = math.exp %528 : vector<2x64xf32>
    %cst_191 = arith.constant 1.000000e+00 : f32
    %530 = vector.broadcast %cst_191 : f32 to vector<2x64xf32>
    %531 = arith.addf %530, %529 : vector<2x64xf32>
    %532 = arith.divf %530, %531 : vector<2x64xf32>
    %533 = vector.extract_strided_slice %532 {offsets = [0, 0], sizes = [2, 32], strides = [1, 1]} : vector<2x64xf32> to vector<2x32xf32>
    %534 = vector.extract_strided_slice %532 {offsets = [0, 32], sizes = [2, 32], strides = [1, 1]} : vector<2x64xf32> to vector<2x32xf32>
    %535 = vector.extract_strided_slice %526 {offsets = [0, 64], sizes = [2, 32], strides = [1, 1]} : vector<2x128xf32> to vector<2x32xf32>
    %536 = vector.extract_strided_slice %526 {offsets = [0, 96], sizes = [2, 32], strides = [1, 1]} : vector<2x128xf32> to vector<2x32xf32>
    %537 = arith.mulf %533, %536 : vector<2x32xf32>
    %538 = arith.addf %535, %537 : vector<2x32xf32>
    %539 = math.tanh %538 : vector<2x32xf32>
    %cst_192 = arith.constant 1.000000e+00 : f32
    %540 = vector.broadcast %cst_192 : f32 to vector<2x32xf32>
    %541 = arith.subf %540, %534 : vector<2x32xf32>
    %542 = arith.mulf %541, %539 : vector<2x32xf32>
    %543 = arith.mulf %534, %439 : vector<2x32xf32>
    %544 = arith.addf %542, %543 : vector<2x32xf32>
    %c8 = arith.constant 8 : index
    %c0_193 = arith.constant 0 : index
    %545 = vector.load %arg13[%c8, %c0_193] : memref<16x32xf32, #tpu.memory_space<vmem>>, vector<2x32xf32>
    tpu.vector_store %arg13[%c8, %c0_193], %544 {strides = array<i32>} : memref<16x32xf32, #tpu.memory_space<vmem>>, vector<2x32xf32>,
    %546 = vector.extract_strided_slice %12 {offsets = [10, 0], sizes = [2, 96], strides = [1, 1]} : vector<16x96xf32> to vector<2x96xf32>
    %c0_194 = arith.constant 0 : index
    %c0_195 = arith.constant 0 : index
    %547 = vector.load %arg5[%c0_194, %c0_195] : memref<32x96xf32, #tpu.memory_space<vmem>>, vector<32x96xf32>
    %cst_196 = arith.constant dense<0.000000e+00> : vector<2x96xf32>
    %548 = tpu.matmul %466, %547, %cst_196 {dimension_numbers = #tpu.dot_dimension_numbers<[1], [0], [0], [1], [0, 0, 1, 1], [], []>} : vector<2x32xf32>, vector<32x96xf32>, vector<2x96xf32> -> vector<2x96xf32>
    %c0_197 = arith.constant 0 : index
    %c0_198 = arith.constant 0 : index
    %549 = vector.load %arg6[%c0_197, %c0_198] : memref<1x96xf32, #tpu.memory_space<vmem>>, vector<1x96xf32>
    %550 = vector.broadcast %549 : vector<1x96xf32> to vector<2x96xf32>
    %551 = arith.addf %548, %550 : vector<2x96xf32>
    %552 = vector.extract_strided_slice %546 {offsets = [0, 0], sizes = [2, 64], strides = [1, 1]} : vector<2x96xf32> to vector<2x64xf32>
    %553 = vector.extract_strided_slice %551 {offsets = [0, 0], sizes = [2, 64], strides = [1, 1]} : vector<2x96xf32> to vector<2x64xf32>
    %554 = arith.addf %552, %553 : vector<2x64xf32>
    %555 = arith.negf %554 : vector<2x64xf32>
    %556 = math.exp %555 : vector<2x64xf32>
    %cst_199 = arith.constant 1.000000e+00 : f32
    %557 = vector.broadcast %cst_199 : f32 to vector<2x64xf32>
    %558 = arith.addf %557, %556 : vector<2x64xf32>
    %559 = arith.divf %557, %558 : vector<2x64xf32>
    %560 = vector.extract_strided_slice %559 {offsets = [0, 0], sizes = [2, 32], strides = [1, 1]} : vector<2x64xf32> to vector<2x32xf32>
    %561 = vector.extract_strided_slice %559 {offsets = [0, 32], sizes = [2, 32], strides = [1, 1]} : vector<2x64xf32> to vector<2x32xf32>
    %562 = vector.extract_strided_slice %546 {offsets = [0, 64], sizes = [2, 32], strides = [1, 1]} : vector<2x96xf32> to vector<2x32xf32>
    %563 = vector.extract_strided_slice %551 {offsets = [0, 64], sizes = [2, 32], strides = [1, 1]} : vector<2x96xf32> to vector<2x32xf32>
    %564 = arith.mulf %560, %563 : vector<2x32xf32>
    %565 = arith.addf %562, %564 : vector<2x32xf32>
    %566 = math.tanh %565 : vector<2x32xf32>
    %cst_200 = arith.constant 1.000000e+00 : f32
    %567 = vector.broadcast %cst_200 : f32 to vector<2x32xf32>
    %568 = arith.subf %567, %561 : vector<2x32xf32>
    %569 = arith.mulf %568, %566 : vector<2x32xf32>
    %570 = arith.mulf %561, %466 : vector<2x32xf32>
    %571 = arith.addf %569, %570 : vector<2x32xf32>
    %572 = tpu.concatenate %571, %492 in 1 : vector<2x32xf32>, vector<2x32xf32> -> vector<2x64xf32>
    %c0_201 = arith.constant 0 : index
    %c0_202 = arith.constant 0 : index
    %c0_203 = arith.constant 0 : index
    %573 = vector.load %arg7[%c0_201, %c0_202, %c0_203] : memref<3x64x128xf32, #tpu.memory_space<vmem>>, vector<1x64x128xf32>
    %574 = vector.shape_cast %573 : vector<1x64x128xf32> to vector<64x128xf32>
    %cst_204 = arith.constant dense<0.000000e+00> : vector<2x128xf32>
    %575 = tpu.matmul %572, %574, %cst_204 {dimension_numbers = #tpu.dot_dimension_numbers<[1], [0], [0], [1], [0, 0, 1, 1], [], []>} : vector<2x64xf32>, vector<64x128xf32>, vector<2x128xf32> -> vector<2x128xf32>
    %c0_205 = arith.constant 0 : index
    %c0_206 = arith.constant 0 : index
    %c0_207 = arith.constant 0 : index
    %576 = vector.load %arg8[%c0_205, %c0_206, %c0_207] : memref<3x1x128xf32, #tpu.memory_space<vmem>>, vector<1x1x128xf32>
    %577 = vector.shape_cast %576 : vector<1x1x128xf32> to vector<1x128xf32>
    %578 = vector.broadcast %577 : vector<1x128xf32> to vector<2x128xf32>
    %579 = arith.addf %575, %578 : vector<2x128xf32>
    %580 = vector.extract_strided_slice %579 {offsets = [0, 0], sizes = [2, 64], strides = [1, 1]} : vector<2x128xf32> to vector<2x64xf32>
    %581 = arith.negf %580 : vector<2x64xf32>
    %582 = math.exp %581 : vector<2x64xf32>
    %cst_208 = arith.constant 1.000000e+00 : f32
    %583 = vector.broadcast %cst_208 : f32 to vector<2x64xf32>
    %584 = arith.addf %583, %582 : vector<2x64xf32>
    %585 = arith.divf %583, %584 : vector<2x64xf32>
    %586 = vector.extract_strided_slice %585 {offsets = [0, 0], sizes = [2, 32], strides = [1, 1]} : vector<2x64xf32> to vector<2x32xf32>
    %587 = vector.extract_strided_slice %585 {offsets = [0, 32], sizes = [2, 32], strides = [1, 1]} : vector<2x64xf32> to vector<2x32xf32>
    %588 = vector.extract_strided_slice %579 {offsets = [0, 64], sizes = [2, 32], strides = [1, 1]} : vector<2x128xf32> to vector<2x32xf32>
    %589 = vector.extract_strided_slice %579 {offsets = [0, 96], sizes = [2, 32], strides = [1, 1]} : vector<2x128xf32> to vector<2x32xf32>
    %590 = arith.mulf %586, %589 : vector<2x32xf32>
    %591 = arith.addf %588, %590 : vector<2x32xf32>
    %592 = math.tanh %591 : vector<2x32xf32>
    %cst_209 = arith.constant 1.000000e+00 : f32
    %593 = vector.broadcast %cst_209 : f32 to vector<2x32xf32>
    %594 = arith.subf %593, %587 : vector<2x32xf32>
    %595 = arith.mulf %594, %592 : vector<2x32xf32>
    %596 = arith.mulf %587, %492 : vector<2x32xf32>
    %597 = arith.addf %595, %596 : vector<2x32xf32>
    %598 = tpu.concatenate %597, %518 in 1 : vector<2x32xf32>, vector<2x32xf32> -> vector<2x64xf32>
    %c1_210 = arith.constant 1 : index
    %c0_211 = arith.constant 0 : index
    %c0_212 = arith.constant 0 : index
    %599 = vector.load %arg7[%c1_210, %c0_211, %c0_212] : memref<3x64x128xf32, #tpu.memory_space<vmem>>, vector<1x64x128xf32>
    %600 = vector.shape_cast %599 : vector<1x64x128xf32> to vector<64x128xf32>
    %cst_213 = arith.constant dense<0.000000e+00> : vector<2x128xf32>
    %601 = tpu.matmul %598, %600, %cst_213 {dimension_numbers = #tpu.dot_dimension_numbers<[1], [0], [0], [1], [0, 0, 1, 1], [], []>} : vector<2x64xf32>, vector<64x128xf32>, vector<2x128xf32> -> vector<2x128xf32>
    %c1_214 = arith.constant 1 : index
    %c0_215 = arith.constant 0 : index
    %c0_216 = arith.constant 0 : index
    %602 = vector.load %arg8[%c1_214, %c0_215, %c0_216] : memref<3x1x128xf32, #tpu.memory_space<vmem>>, vector<1x1x128xf32>
    %603 = vector.shape_cast %602 : vector<1x1x128xf32> to vector<1x128xf32>
    %604 = vector.broadcast %603 : vector<1x128xf32> to vector<2x128xf32>
    %605 = arith.addf %601, %604 : vector<2x128xf32>
    %606 = vector.extract_strided_slice %605 {offsets = [0, 0], sizes = [2, 64], strides = [1, 1]} : vector<2x128xf32> to vector<2x64xf32>
    %607 = arith.negf %606 : vector<2x64xf32>
    %608 = math.exp %607 : vector<2x64xf32>
    %cst_217 = arith.constant 1.000000e+00 : f32
    %609 = vector.broadcast %cst_217 : f32 to vector<2x64xf32>
    %610 = arith.addf %609, %608 : vector<2x64xf32>
    %611 = arith.divf %609, %610 : vector<2x64xf32>
    %612 = vector.extract_strided_slice %611 {offsets = [0, 0], sizes = [2, 32], strides = [1, 1]} : vector<2x64xf32> to vector<2x32xf32>
    %613 = vector.extract_strided_slice %611 {offsets = [0, 32], sizes = [2, 32], strides = [1, 1]} : vector<2x64xf32> to vector<2x32xf32>
    %614 = vector.extract_strided_slice %605 {offsets = [0, 64], sizes = [2, 32], strides = [1, 1]} : vector<2x128xf32> to vector<2x32xf32>
    %615 = vector.extract_strided_slice %605 {offsets = [0, 96], sizes = [2, 32], strides = [1, 1]} : vector<2x128xf32> to vector<2x32xf32>
    %616 = arith.mulf %612, %615 : vector<2x32xf32>
    %617 = arith.addf %614, %616 : vector<2x32xf32>
    %618 = math.tanh %617 : vector<2x32xf32>
    %cst_218 = arith.constant 1.000000e+00 : f32
    %619 = vector.broadcast %cst_218 : f32 to vector<2x32xf32>
    %620 = arith.subf %619, %613 : vector<2x32xf32>
    %621 = arith.mulf %620, %618 : vector<2x32xf32>
    %622 = arith.mulf %613, %518 : vector<2x32xf32>
    %623 = arith.addf %621, %622 : vector<2x32xf32>
    %624 = tpu.concatenate %623, %544 in 1 : vector<2x32xf32>, vector<2x32xf32> -> vector<2x64xf32>
    %c2_219 = arith.constant 2 : index
    %c0_220 = arith.constant 0 : index
    %c0_221 = arith.constant 0 : index
    %625 = vector.load %arg7[%c2_219, %c0_220, %c0_221] : memref<3x64x128xf32, #tpu.memory_space<vmem>>, vector<1x64x128xf32>
    %626 = vector.shape_cast %625 : vector<1x64x128xf32> to vector<64x128xf32>
    %cst_222 = arith.constant dense<0.000000e+00> : vector<2x128xf32>
    %627 = tpu.matmul %624, %626, %cst_222 {dimension_numbers = #tpu.dot_dimension_numbers<[1], [0], [0], [1], [0, 0, 1, 1], [], []>} : vector<2x64xf32>, vector<64x128xf32>, vector<2x128xf32> -> vector<2x128xf32>
    %c2_223 = arith.constant 2 : index
    %c0_224 = arith.constant 0 : index
    %c0_225 = arith.constant 0 : index
    %628 = vector.load %arg8[%c2_223, %c0_224, %c0_225] : memref<3x1x128xf32, #tpu.memory_space<vmem>>, vector<1x1x128xf32>
    %629 = vector.shape_cast %628 : vector<1x1x128xf32> to vector<1x128xf32>
    %630 = vector.broadcast %629 : vector<1x128xf32> to vector<2x128xf32>
    %631 = arith.addf %627, %630 : vector<2x128xf32>
    %632 = vector.extract_strided_slice %631 {offsets = [0, 0], sizes = [2, 64], strides = [1, 1]} : vector<2x128xf32> to vector<2x64xf32>
    %633 = arith.negf %632 : vector<2x64xf32>
    %634 = math.exp %633 : vector<2x64xf32>
    %cst_226 = arith.constant 1.000000e+00 : f32
    %635 = vector.broadcast %cst_226 : f32 to vector<2x64xf32>
    %636 = arith.addf %635, %634 : vector<2x64xf32>
    %637 = arith.divf %635, %636 : vector<2x64xf32>
    %638 = vector.extract_strided_slice %637 {offsets = [0, 0], sizes = [2, 32], strides = [1, 1]} : vector<2x64xf32> to vector<2x32xf32>
    %639 = vector.extract_strided_slice %637 {offsets = [0, 32], sizes = [2, 32], strides = [1, 1]} : vector<2x64xf32> to vector<2x32xf32>
    %640 = vector.extract_strided_slice %631 {offsets = [0, 64], sizes = [2, 32], strides = [1, 1]} : vector<2x128xf32> to vector<2x32xf32>
    %641 = vector.extract_strided_slice %631 {offsets = [0, 96], sizes = [2, 32], strides = [1, 1]} : vector<2x128xf32> to vector<2x32xf32>
    %642 = arith.mulf %638, %641 : vector<2x32xf32>
    %643 = arith.addf %640, %642 : vector<2x32xf32>
    %644 = math.tanh %643 : vector<2x32xf32>
    %cst_227 = arith.constant 1.000000e+00 : f32
    %645 = vector.broadcast %cst_227 : f32 to vector<2x32xf32>
    %646 = arith.subf %645, %639 : vector<2x32xf32>
    %647 = arith.mulf %646, %644 : vector<2x32xf32>
    %648 = arith.mulf %639, %544 : vector<2x32xf32>
    %649 = arith.addf %647, %648 : vector<2x32xf32>
    %c10 = arith.constant 10 : index
    %c0_228 = arith.constant 0 : index
    %650 = vector.load %arg13[%c10, %c0_228] : memref<16x32xf32, #tpu.memory_space<vmem>>, vector<2x32xf32>
    tpu.vector_store %arg13[%c10, %c0_228], %649 {strides = array<i32>} : memref<16x32xf32, #tpu.memory_space<vmem>>, vector<2x32xf32>,
    %651 = vector.extract_strided_slice %12 {offsets = [12, 0], sizes = [2, 96], strides = [1, 1]} : vector<16x96xf32> to vector<2x96xf32>
    %c0_229 = arith.constant 0 : index
    %c0_230 = arith.constant 0 : index
    %652 = vector.load %arg5[%c0_229, %c0_230] : memref<32x96xf32, #tpu.memory_space<vmem>>, vector<32x96xf32>
    %cst_231 = arith.constant dense<0.000000e+00> : vector<2x96xf32>
    %653 = tpu.matmul %571, %652, %cst_231 {dimension_numbers = #tpu.dot_dimension_numbers<[1], [0], [0], [1], [0, 0, 1, 1], [], []>} : vector<2x32xf32>, vector<32x96xf32>, vector<2x96xf32> -> vector<2x96xf32>
    %c0_232 = arith.constant 0 : index
    %c0_233 = arith.constant 0 : index
    %654 = vector.load %arg6[%c0_232, %c0_233] : memref<1x96xf32, #tpu.memory_space<vmem>>, vector<1x96xf32>
    %655 = vector.broadcast %654 : vector<1x96xf32> to vector<2x96xf32>
    %656 = arith.addf %653, %655 : vector<2x96xf32>
    %657 = vector.extract_strided_slice %651 {offsets = [0, 0], sizes = [2, 64], strides = [1, 1]} : vector<2x96xf32> to vector<2x64xf32>
    %658 = vector.extract_strided_slice %656 {offsets = [0, 0], sizes = [2, 64], strides = [1, 1]} : vector<2x96xf32> to vector<2x64xf32>
    %659 = arith.addf %657, %658 : vector<2x64xf32>
    %660 = arith.negf %659 : vector<2x64xf32>
    %661 = math.exp %660 : vector<2x64xf32>
    %cst_234 = arith.constant 1.000000e+00 : f32
    %662 = vector.broadcast %cst_234 : f32 to vector<2x64xf32>
    %663 = arith.addf %662, %661 : vector<2x64xf32>
    %664 = arith.divf %662, %663 : vector<2x64xf32>
    %665 = vector.extract_strided_slice %664 {offsets = [0, 0], sizes = [2, 32], strides = [1, 1]} : vector<2x64xf32> to vector<2x32xf32>
    %666 = vector.extract_strided_slice %664 {offsets = [0, 32], sizes = [2, 32], strides = [1, 1]} : vector<2x64xf32> to vector<2x32xf32>
    %667 = vector.extract_strided_slice %651 {offsets = [0, 64], sizes = [2, 32], strides = [1, 1]} : vector<2x96xf32> to vector<2x32xf32>
    %668 = vector.extract_strided_slice %656 {offsets = [0, 64], sizes = [2, 32], strides = [1, 1]} : vector<2x96xf32> to vector<2x32xf32>
    %669 = arith.mulf %665, %668 : vector<2x32xf32>
    %670 = arith.addf %667, %669 : vector<2x32xf32>
    %671 = math.tanh %670 : vector<2x32xf32>
    %cst_235 = arith.constant 1.000000e+00 : f32
    %672 = vector.broadcast %cst_235 : f32 to vector<2x32xf32>
    %673 = arith.subf %672, %666 : vector<2x32xf32>
    %674 = arith.mulf %673, %671 : vector<2x32xf32>
    %675 = arith.mulf %666, %571 : vector<2x32xf32>
    %676 = arith.addf %674, %675 : vector<2x32xf32>
    %677 = tpu.concatenate %676, %597 in 1 : vector<2x32xf32>, vector<2x32xf32> -> vector<2x64xf32>
    %c0_236 = arith.constant 0 : index
    %c0_237 = arith.constant 0 : index
    %c0_238 = arith.constant 0 : index
    %678 = vector.load %arg7[%c0_236, %c0_237, %c0_238] : memref<3x64x128xf32, #tpu.memory_space<vmem>>, vector<1x64x128xf32>
    %679 = vector.shape_cast %678 : vector<1x64x128xf32> to vector<64x128xf32>
    %cst_239 = arith.constant dense<0.000000e+00> : vector<2x128xf32>
    %680 = tpu.matmul %677, %679, %cst_239 {dimension_numbers = #tpu.dot_dimension_numbers<[1], [0], [0], [1], [0, 0, 1, 1], [], []>} : vector<2x64xf32>, vector<64x128xf32>, vector<2x128xf32> -> vector<2x128xf32>
    %c0_240 = arith.constant 0 : index
    %c0_241 = arith.constant 0 : index
    %c0_242 = arith.constant 0 : index
    %681 = vector.load %arg8[%c0_240, %c0_241, %c0_242] : memref<3x1x128xf32, #tpu.memory_space<vmem>>, vector<1x1x128xf32>
    %682 = vector.shape_cast %681 : vector<1x1x128xf32> to vector<1x128xf32>
    %683 = vector.broadcast %682 : vector<1x128xf32> to vector<2x128xf32>
    %684 = arith.addf %680, %683 : vector<2x128xf32>
    %685 = vector.extract_strided_slice %684 {offsets = [0, 0], sizes = [2, 64], strides = [1, 1]} : vector<2x128xf32> to vector<2x64xf32>
    %686 = arith.negf %685 : vector<2x64xf32>
    %687 = math.exp %686 : vector<2x64xf32>
    %cst_243 = arith.constant 1.000000e+00 : f32
    %688 = vector.broadcast %cst_243 : f32 to vector<2x64xf32>
    %689 = arith.addf %688, %687 : vector<2x64xf32>
    %690 = arith.divf %688, %689 : vector<2x64xf32>
    %691 = vector.extract_strided_slice %690 {offsets = [0, 0], sizes = [2, 32], strides = [1, 1]} : vector<2x64xf32> to vector<2x32xf32>
    %692 = vector.extract_strided_slice %690 {offsets = [0, 32], sizes = [2, 32], strides = [1, 1]} : vector<2x64xf32> to vector<2x32xf32>
    %693 = vector.extract_strided_slice %684 {offsets = [0, 64], sizes = [2, 32], strides = [1, 1]} : vector<2x128xf32> to vector<2x32xf32>
    %694 = vector.extract_strided_slice %684 {offsets = [0, 96], sizes = [2, 32], strides = [1, 1]} : vector<2x128xf32> to vector<2x32xf32>
    %695 = arith.mulf %691, %694 : vector<2x32xf32>
    %696 = arith.addf %693, %695 : vector<2x32xf32>
    %697 = math.tanh %696 : vector<2x32xf32>
    %cst_244 = arith.constant 1.000000e+00 : f32
    %698 = vector.broadcast %cst_244 : f32 to vector<2x32xf32>
    %699 = arith.subf %698, %692 : vector<2x32xf32>
    %700 = arith.mulf %699, %697 : vector<2x32xf32>
    %701 = arith.mulf %692, %597 : vector<2x32xf32>
    %702 = arith.addf %700, %701 : vector<2x32xf32>
    %703 = tpu.concatenate %702, %623 in 1 : vector<2x32xf32>, vector<2x32xf32> -> vector<2x64xf32>
    %c1_245 = arith.constant 1 : index
    %c0_246 = arith.constant 0 : index
    %c0_247 = arith.constant 0 : index
    %704 = vector.load %arg7[%c1_245, %c0_246, %c0_247] : memref<3x64x128xf32, #tpu.memory_space<vmem>>, vector<1x64x128xf32>
    %705 = vector.shape_cast %704 : vector<1x64x128xf32> to vector<64x128xf32>
    %cst_248 = arith.constant dense<0.000000e+00> : vector<2x128xf32>
    %706 = tpu.matmul %703, %705, %cst_248 {dimension_numbers = #tpu.dot_dimension_numbers<[1], [0], [0], [1], [0, 0, 1, 1], [], []>} : vector<2x64xf32>, vector<64x128xf32>, vector<2x128xf32> -> vector<2x128xf32>
    %c1_249 = arith.constant 1 : index
    %c0_250 = arith.constant 0 : index
    %c0_251 = arith.constant 0 : index
    %707 = vector.load %arg8[%c1_249, %c0_250, %c0_251] : memref<3x1x128xf32, #tpu.memory_space<vmem>>, vector<1x1x128xf32>
    %708 = vector.shape_cast %707 : vector<1x1x128xf32> to vector<1x128xf32>
    %709 = vector.broadcast %708 : vector<1x128xf32> to vector<2x128xf32>
    %710 = arith.addf %706, %709 : vector<2x128xf32>
    %711 = vector.extract_strided_slice %710 {offsets = [0, 0], sizes = [2, 64], strides = [1, 1]} : vector<2x128xf32> to vector<2x64xf32>
    %712 = arith.negf %711 : vector<2x64xf32>
    %713 = math.exp %712 : vector<2x64xf32>
    %cst_252 = arith.constant 1.000000e+00 : f32
    %714 = vector.broadcast %cst_252 : f32 to vector<2x64xf32>
    %715 = arith.addf %714, %713 : vector<2x64xf32>
    %716 = arith.divf %714, %715 : vector<2x64xf32>
    %717 = vector.extract_strided_slice %716 {offsets = [0, 0], sizes = [2, 32], strides = [1, 1]} : vector<2x64xf32> to vector<2x32xf32>
    %718 = vector.extract_strided_slice %716 {offsets = [0, 32], sizes = [2, 32], strides = [1, 1]} : vector<2x64xf32> to vector<2x32xf32>
    %719 = vector.extract_strided_slice %710 {offsets = [0, 64], sizes = [2, 32], strides = [1, 1]} : vector<2x128xf32> to vector<2x32xf32>
    %720 = vector.extract_strided_slice %710 {offsets = [0, 96], sizes = [2, 32], strides = [1, 1]} : vector<2x128xf32> to vector<2x32xf32>
    %721 = arith.mulf %717, %720 : vector<2x32xf32>
    %722 = arith.addf %719, %721 : vector<2x32xf32>
    %723 = math.tanh %722 : vector<2x32xf32>
    %cst_253 = arith.constant 1.000000e+00 : f32
    %724 = vector.broadcast %cst_253 : f32 to vector<2x32xf32>
    %725 = arith.subf %724, %718 : vector<2x32xf32>
    %726 = arith.mulf %725, %723 : vector<2x32xf32>
    %727 = arith.mulf %718, %623 : vector<2x32xf32>
    %728 = arith.addf %726, %727 : vector<2x32xf32>
    %729 = tpu.concatenate %728, %649 in 1 : vector<2x32xf32>, vector<2x32xf32> -> vector<2x64xf32>
    %c2_254 = arith.constant 2 : index
    %c0_255 = arith.constant 0 : index
    %c0_256 = arith.constant 0 : index
    %730 = vector.load %arg7[%c2_254, %c0_255, %c0_256] : memref<3x64x128xf32, #tpu.memory_space<vmem>>, vector<1x64x128xf32>
    %731 = vector.shape_cast %730 : vector<1x64x128xf32> to vector<64x128xf32>
    %cst_257 = arith.constant dense<0.000000e+00> : vector<2x128xf32>
    %732 = tpu.matmul %729, %731, %cst_257 {dimension_numbers = #tpu.dot_dimension_numbers<[1], [0], [0], [1], [0, 0, 1, 1], [], []>} : vector<2x64xf32>, vector<64x128xf32>, vector<2x128xf32> -> vector<2x128xf32>
    %c2_258 = arith.constant 2 : index
    %c0_259 = arith.constant 0 : index
    %c0_260 = arith.constant 0 : index
    %733 = vector.load %arg8[%c2_258, %c0_259, %c0_260] : memref<3x1x128xf32, #tpu.memory_space<vmem>>, vector<1x1x128xf32>
    %734 = vector.shape_cast %733 : vector<1x1x128xf32> to vector<1x128xf32>
    %735 = vector.broadcast %734 : vector<1x128xf32> to vector<2x128xf32>
    %736 = arith.addf %732, %735 : vector<2x128xf32>
    %737 = vector.extract_strided_slice %736 {offsets = [0, 0], sizes = [2, 64], strides = [1, 1]} : vector<2x128xf32> to vector<2x64xf32>
    %738 = arith.negf %737 : vector<2x64xf32>
    %739 = math.exp %738 : vector<2x64xf32>
    %cst_261 = arith.constant 1.000000e+00 : f32
    %740 = vector.broadcast %cst_261 : f32 to vector<2x64xf32>
    %741 = arith.addf %740, %739 : vector<2x64xf32>
    %742 = arith.divf %740, %741 : vector<2x64xf32>
    %743 = vector.extract_strided_slice %742 {offsets = [0, 0], sizes = [2, 32], strides = [1, 1]} : vector<2x64xf32> to vector<2x32xf32>
    %744 = vector.extract_strided_slice %742 {offsets = [0, 32], sizes = [2, 32], strides = [1, 1]} : vector<2x64xf32> to vector<2x32xf32>
    %745 = vector.extract_strided_slice %736 {offsets = [0, 64], sizes = [2, 32], strides = [1, 1]} : vector<2x128xf32> to vector<2x32xf32>
    %746 = vector.extract_strided_slice %736 {offsets = [0, 96], sizes = [2, 32], strides = [1, 1]} : vector<2x128xf32> to vector<2x32xf32>
    %747 = arith.mulf %743, %746 : vector<2x32xf32>
    %748 = arith.addf %745, %747 : vector<2x32xf32>
    %749 = math.tanh %748 : vector<2x32xf32>
    %cst_262 = arith.constant 1.000000e+00 : f32
    %750 = vector.broadcast %cst_262 : f32 to vector<2x32xf32>
    %751 = arith.subf %750, %744 : vector<2x32xf32>
    %752 = arith.mulf %751, %749 : vector<2x32xf32>
    %753 = arith.mulf %744, %649 : vector<2x32xf32>
    %754 = arith.addf %752, %753 : vector<2x32xf32>
    %c12 = arith.constant 12 : index
    %c0_263 = arith.constant 0 : index
    %755 = vector.load %arg13[%c12, %c0_263] : memref<16x32xf32, #tpu.memory_space<vmem>>, vector<2x32xf32>
    tpu.vector_store %arg13[%c12, %c0_263], %754 {strides = array<i32>} : memref<16x32xf32, #tpu.memory_space<vmem>>, vector<2x32xf32>,
    %756 = vector.extract_strided_slice %12 {offsets = [14, 0], sizes = [2, 96], strides = [1, 1]} : vector<16x96xf32> to vector<2x96xf32>
    %c0_264 = arith.constant 0 : index
    %c0_265 = arith.constant 0 : index
    %757 = vector.load %arg5[%c0_264, %c0_265] : memref<32x96xf32, #tpu.memory_space<vmem>>, vector<32x96xf32>
    %cst_266 = arith.constant dense<0.000000e+00> : vector<2x96xf32>
    %758 = tpu.matmul %676, %757, %cst_266 {dimension_numbers = #tpu.dot_dimension_numbers<[1], [0], [0], [1], [0, 0, 1, 1], [], []>} : vector<2x32xf32>, vector<32x96xf32>, vector<2x96xf32> -> vector<2x96xf32>
    %c0_267 = arith.constant 0 : index
    %c0_268 = arith.constant 0 : index
    %759 = vector.load %arg6[%c0_267, %c0_268] : memref<1x96xf32, #tpu.memory_space<vmem>>, vector<1x96xf32>
    %760 = vector.broadcast %759 : vector<1x96xf32> to vector<2x96xf32>
    %761 = arith.addf %758, %760 : vector<2x96xf32>
    %762 = vector.extract_strided_slice %756 {offsets = [0, 0], sizes = [2, 64], strides = [1, 1]} : vector<2x96xf32> to vector<2x64xf32>
    %763 = vector.extract_strided_slice %761 {offsets = [0, 0], sizes = [2, 64], strides = [1, 1]} : vector<2x96xf32> to vector<2x64xf32>
    %764 = arith.addf %762, %763 : vector<2x64xf32>
    %765 = arith.negf %764 : vector<2x64xf32>
    %766 = math.exp %765 : vector<2x64xf32>
    %cst_269 = arith.constant 1.000000e+00 : f32
    %767 = vector.broadcast %cst_269 : f32 to vector<2x64xf32>
    %768 = arith.addf %767, %766 : vector<2x64xf32>
    %769 = arith.divf %767, %768 : vector<2x64xf32>
    %770 = vector.extract_strided_slice %769 {offsets = [0, 0], sizes = [2, 32], strides = [1, 1]} : vector<2x64xf32> to vector<2x32xf32>
    %771 = vector.extract_strided_slice %769 {offsets = [0, 32], sizes = [2, 32], strides = [1, 1]} : vector<2x64xf32> to vector<2x32xf32>
    %772 = vector.extract_strided_slice %756 {offsets = [0, 64], sizes = [2, 32], strides = [1, 1]} : vector<2x96xf32> to vector<2x32xf32>
    %773 = vector.extract_strided_slice %761 {offsets = [0, 64], sizes = [2, 32], strides = [1, 1]} : vector<2x96xf32> to vector<2x32xf32>
    %774 = arith.mulf %770, %773 : vector<2x32xf32>
    %775 = arith.addf %772, %774 : vector<2x32xf32>
    %776 = math.tanh %775 : vector<2x32xf32>
    %cst_270 = arith.constant 1.000000e+00 : f32
    %777 = vector.broadcast %cst_270 : f32 to vector<2x32xf32>
    %778 = arith.subf %777, %771 : vector<2x32xf32>
    %779 = arith.mulf %778, %776 : vector<2x32xf32>
    %780 = arith.mulf %771, %676 : vector<2x32xf32>
    %781 = arith.addf %779, %780 : vector<2x32xf32>
    %782 = tpu.concatenate %781, %702 in 1 : vector<2x32xf32>, vector<2x32xf32> -> vector<2x64xf32>
    %c0_271 = arith.constant 0 : index
    %c0_272 = arith.constant 0 : index
    %c0_273 = arith.constant 0 : index
    %783 = vector.load %arg7[%c0_271, %c0_272, %c0_273] : memref<3x64x128xf32, #tpu.memory_space<vmem>>, vector<1x64x128xf32>
    %784 = vector.shape_cast %783 : vector<1x64x128xf32> to vector<64x128xf32>
    %cst_274 = arith.constant dense<0.000000e+00> : vector<2x128xf32>
    %785 = tpu.matmul %782, %784, %cst_274 {dimension_numbers = #tpu.dot_dimension_numbers<[1], [0], [0], [1], [0, 0, 1, 1], [], []>} : vector<2x64xf32>, vector<64x128xf32>, vector<2x128xf32> -> vector<2x128xf32>
    %c0_275 = arith.constant 0 : index
    %c0_276 = arith.constant 0 : index
    %c0_277 = arith.constant 0 : index
    %786 = vector.load %arg8[%c0_275, %c0_276, %c0_277] : memref<3x1x128xf32, #tpu.memory_space<vmem>>, vector<1x1x128xf32>
    %787 = vector.shape_cast %786 : vector<1x1x128xf32> to vector<1x128xf32>
    %788 = vector.broadcast %787 : vector<1x128xf32> to vector<2x128xf32>
    %789 = arith.addf %785, %788 : vector<2x128xf32>
    %790 = vector.extract_strided_slice %789 {offsets = [0, 0], sizes = [2, 64], strides = [1, 1]} : vector<2x128xf32> to vector<2x64xf32>
    %791 = arith.negf %790 : vector<2x64xf32>
    %792 = math.exp %791 : vector<2x64xf32>
    %cst_278 = arith.constant 1.000000e+00 : f32
    %793 = vector.broadcast %cst_278 : f32 to vector<2x64xf32>
    %794 = arith.addf %793, %792 : vector<2x64xf32>
    %795 = arith.divf %793, %794 : vector<2x64xf32>
    %796 = vector.extract_strided_slice %795 {offsets = [0, 0], sizes = [2, 32], strides = [1, 1]} : vector<2x64xf32> to vector<2x32xf32>
    %797 = vector.extract_strided_slice %795 {offsets = [0, 32], sizes = [2, 32], strides = [1, 1]} : vector<2x64xf32> to vector<2x32xf32>
    %798 = vector.extract_strided_slice %789 {offsets = [0, 64], sizes = [2, 32], strides = [1, 1]} : vector<2x128xf32> to vector<2x32xf32>
    %799 = vector.extract_strided_slice %789 {offsets = [0, 96], sizes = [2, 32], strides = [1, 1]} : vector<2x128xf32> to vector<2x32xf32>
    %800 = arith.mulf %796, %799 : vector<2x32xf32>
    %801 = arith.addf %798, %800 : vector<2x32xf32>
    %802 = math.tanh %801 : vector<2x32xf32>
    %cst_279 = arith.constant 1.000000e+00 : f32
    %803 = vector.broadcast %cst_279 : f32 to vector<2x32xf32>
    %804 = arith.subf %803, %797 : vector<2x32xf32>
    %805 = arith.mulf %804, %802 : vector<2x32xf32>
    %806 = arith.mulf %797, %702 : vector<2x32xf32>
    %807 = arith.addf %805, %806 : vector<2x32xf32>
    %808 = tpu.concatenate %807, %728 in 1 : vector<2x32xf32>, vector<2x32xf32> -> vector<2x64xf32>
    %c1_280 = arith.constant 1 : index
    %c0_281 = arith.constant 0 : index
    %c0_282 = arith.constant 0 : index
    %809 = vector.load %arg7[%c1_280, %c0_281, %c0_282] : memref<3x64x128xf32, #tpu.memory_space<vmem>>, vector<1x64x128xf32>
    %810 = vector.shape_cast %809 : vector<1x64x128xf32> to vector<64x128xf32>
    %cst_283 = arith.constant dense<0.000000e+00> : vector<2x128xf32>
    %811 = tpu.matmul %808, %810, %cst_283 {dimension_numbers = #tpu.dot_dimension_numbers<[1], [0], [0], [1], [0, 0, 1, 1], [], []>} : vector<2x64xf32>, vector<64x128xf32>, vector<2x128xf32> -> vector<2x128xf32>
    %c1_284 = arith.constant 1 : index
    %c0_285 = arith.constant 0 : index
    %c0_286 = arith.constant 0 : index
    %812 = vector.load %arg8[%c1_284, %c0_285, %c0_286] : memref<3x1x128xf32, #tpu.memory_space<vmem>>, vector<1x1x128xf32>
    %813 = vector.shape_cast %812 : vector<1x1x128xf32> to vector<1x128xf32>
    %814 = vector.broadcast %813 : vector<1x128xf32> to vector<2x128xf32>
    %815 = arith.addf %811, %814 : vector<2x128xf32>
    %816 = vector.extract_strided_slice %815 {offsets = [0, 0], sizes = [2, 64], strides = [1, 1]} : vector<2x128xf32> to vector<2x64xf32>
    %817 = arith.negf %816 : vector<2x64xf32>
    %818 = math.exp %817 : vector<2x64xf32>
    %cst_287 = arith.constant 1.000000e+00 : f32
    %819 = vector.broadcast %cst_287 : f32 to vector<2x64xf32>
    %820 = arith.addf %819, %818 : vector<2x64xf32>
    %821 = arith.divf %819, %820 : vector<2x64xf32>
    %822 = vector.extract_strided_slice %821 {offsets = [0, 0], sizes = [2, 32], strides = [1, 1]} : vector<2x64xf32> to vector<2x32xf32>
    %823 = vector.extract_strided_slice %821 {offsets = [0, 32], sizes = [2, 32], strides = [1, 1]} : vector<2x64xf32> to vector<2x32xf32>
    %824 = vector.extract_strided_slice %815 {offsets = [0, 64], sizes = [2, 32], strides = [1, 1]} : vector<2x128xf32> to vector<2x32xf32>
    %825 = vector.extract_strided_slice %815 {offsets = [0, 96], sizes = [2, 32], strides = [1, 1]} : vector<2x128xf32> to vector<2x32xf32>
    %826 = arith.mulf %822, %825 : vector<2x32xf32>
    %827 = arith.addf %824, %826 : vector<2x32xf32>
    %828 = math.tanh %827 : vector<2x32xf32>
    %cst_288 = arith.constant 1.000000e+00 : f32
    %829 = vector.broadcast %cst_288 : f32 to vector<2x32xf32>
    %830 = arith.subf %829, %823 : vector<2x32xf32>
    %831 = arith.mulf %830, %828 : vector<2x32xf32>
    %832 = arith.mulf %823, %728 : vector<2x32xf32>
    %833 = arith.addf %831, %832 : vector<2x32xf32>
    %834 = tpu.concatenate %833, %754 in 1 : vector<2x32xf32>, vector<2x32xf32> -> vector<2x64xf32>
    %c2_289 = arith.constant 2 : index
    %c0_290 = arith.constant 0 : index
    %c0_291 = arith.constant 0 : index
    %835 = vector.load %arg7[%c2_289, %c0_290, %c0_291] : memref<3x64x128xf32, #tpu.memory_space<vmem>>, vector<1x64x128xf32>
    %836 = vector.shape_cast %835 : vector<1x64x128xf32> to vector<64x128xf32>
    %cst_292 = arith.constant dense<0.000000e+00> : vector<2x128xf32>
    %837 = tpu.matmul %834, %836, %cst_292 {dimension_numbers = #tpu.dot_dimension_numbers<[1], [0], [0], [1], [0, 0, 1, 1], [], []>} : vector<2x64xf32>, vector<64x128xf32>, vector<2x128xf32> -> vector<2x128xf32>
    %c2_293 = arith.constant 2 : index
    %c0_294 = arith.constant 0 : index
    %c0_295 = arith.constant 0 : index
    %838 = vector.load %arg8[%c2_293, %c0_294, %c0_295] : memref<3x1x128xf32, #tpu.memory_space<vmem>>, vector<1x1x128xf32>
    %839 = vector.shape_cast %838 : vector<1x1x128xf32> to vector<1x128xf32>
    %840 = vector.broadcast %839 : vector<1x128xf32> to vector<2x128xf32>
    %841 = arith.addf %837, %840 : vector<2x128xf32>
    %842 = vector.extract_strided_slice %841 {offsets = [0, 0], sizes = [2, 64], strides = [1, 1]} : vector<2x128xf32> to vector<2x64xf32>
    %843 = arith.negf %842 : vector<2x64xf32>
    %844 = math.exp %843 : vector<2x64xf32>
    %cst_296 = arith.constant 1.000000e+00 : f32
    %845 = vector.broadcast %cst_296 : f32 to vector<2x64xf32>
    %846 = arith.addf %845, %844 : vector<2x64xf32>
    %847 = arith.divf %845, %846 : vector<2x64xf32>
    %848 = vector.extract_strided_slice %847 {offsets = [0, 0], sizes = [2, 32], strides = [1, 1]} : vector<2x64xf32> to vector<2x32xf32>
    %849 = vector.extract_strided_slice %847 {offsets = [0, 32], sizes = [2, 32], strides = [1, 1]} : vector<2x64xf32> to vector<2x32xf32>
    %850 = vector.extract_strided_slice %841 {offsets = [0, 64], sizes = [2, 32], strides = [1, 1]} : vector<2x128xf32> to vector<2x32xf32>
    %851 = vector.extract_strided_slice %841 {offsets = [0, 96], sizes = [2, 32], strides = [1, 1]} : vector<2x128xf32> to vector<2x32xf32>
    %852 = arith.mulf %848, %851 : vector<2x32xf32>
    %853 = arith.addf %850, %852 : vector<2x32xf32>
    %854 = math.tanh %853 : vector<2x32xf32>
    %cst_297 = arith.constant 1.000000e+00 : f32
    %855 = vector.broadcast %cst_297 : f32 to vector<2x32xf32>
    %856 = arith.subf %855, %849 : vector<2x32xf32>
    %857 = arith.mulf %856, %854 : vector<2x32xf32>
    %858 = arith.mulf %849, %754 : vector<2x32xf32>
    %859 = arith.addf %857, %858 : vector<2x32xf32>
    %c14 = arith.constant 14 : index
    %c0_298 = arith.constant 0 : index
    %860 = vector.load %arg13[%c14, %c0_298] : memref<16x32xf32, #tpu.memory_space<vmem>>, vector<2x32xf32>
    tpu.vector_store %arg13[%c14, %c0_298], %859 {strides = array<i32>} : memref<16x32xf32, #tpu.memory_space<vmem>>, vector<2x32xf32>,
    %c0_299 = arith.constant 0 : index
    %c0_300 = arith.constant 0 : index
    %861 = vector.load %arg13[%c0_299, %c0_300] : memref<16x32xf32, #tpu.memory_space<vmem>>, vector<16x32xf32>
    %c0_301 = arith.constant 0 : index
    %c0_302 = arith.constant 0 : index
    %862 = vector.load %arg9[%c0_301, %c0_302] : memref<32x128xf32, #tpu.memory_space<vmem>>, vector<32x128xf32>
    %cst_303 = arith.constant dense<0.000000e+00> : vector<16x128xf32>
    %863 = tpu.matmul %861, %862, %cst_303 {dimension_numbers = #tpu.dot_dimension_numbers<[1], [0], [0], [1], [0, 0, 1, 1], [], []>} : vector<16x32xf32>, vector<32x128xf32>, vector<16x128xf32> -> vector<16x128xf32>
    %c0_304 = arith.constant 0 : index
    %c0_305 = arith.constant 0 : index
    %864 = vector.load %arg10[%c0_304, %c0_305] : memref<1x128xf32, #tpu.memory_space<vmem>>, vector<1x128xf32>
    %865 = vector.broadcast %864 : vector<1x128xf32> to vector<16x128xf32>
    %866 = arith.addf %863, %865 : vector<16x128xf32>
    %c0_306 = arith.constant 0 : index
    %c0_307 = arith.constant 0 : index
    %867 = vector.load %arg11[%c0_306, %c0_307] : memref<16x128xf32, #tpu.memory_space<vmem>>, vector<16x128xf32>
    tpu.vector_store %arg11[%c0_306, %c0_307], %866 {strides = array<i32>} : memref<16x128xf32, #tpu.memory_space<vmem>>, vector<16x128xf32>,
    %c0_308 = arith.constant 0 : index
    %c0_309 = arith.constant 0 : index
    %c0_310 = arith.constant 0 : index
    %868 = vector.load %arg12[%c0_308, %c0_309, %c0_310] : memref<4x2x32xf32, #tpu.memory_space<vmem>>, vector<1x2x32xf32>
    %869 = vector.shape_cast %868 : vector<1x2x32xf32> to vector<2x32xf32>
    %870 = vector.shape_cast %781 : vector<2x32xf32> to vector<1x2x32xf32>
    tpu.vector_store %arg12[%c0_308, %c0_309, %c0_310], %870 {strides = array<i32>} : memref<4x2x32xf32, #tpu.memory_space<vmem>>, vector<1x2x32xf32>,
    %c1_311 = arith.constant 1 : index
    %c0_312 = arith.constant 0 : index
    %c0_313 = arith.constant 0 : index
    %871 = vector.load %arg12[%c1_311, %c0_312, %c0_313] : memref<4x2x32xf32, #tpu.memory_space<vmem>>, vector<1x2x32xf32>
    %872 = vector.shape_cast %871 : vector<1x2x32xf32> to vector<2x32xf32>
    %873 = vector.shape_cast %807 : vector<2x32xf32> to vector<1x2x32xf32>
    tpu.vector_store %arg12[%c1_311, %c0_312, %c0_313], %873 {strides = array<i32>} : memref<4x2x32xf32, #tpu.memory_space<vmem>>, vector<1x2x32xf32>,
    %c2_314 = arith.constant 2 : index
    %c0_315 = arith.constant 0 : index
    %c0_316 = arith.constant 0 : index
    %874 = vector.load %arg12[%c2_314, %c0_315, %c0_316] : memref<4x2x32xf32, #tpu.memory_space<vmem>>, vector<1x2x32xf32>
    %875 = vector.shape_cast %874 : vector<1x2x32xf32> to vector<2x32xf32>
    %876 = vector.shape_cast %833 : vector<2x32xf32> to vector<1x2x32xf32>
    tpu.vector_store %arg12[%c2_314, %c0_315, %c0_316], %876 {strides = array<i32>} : memref<4x2x32xf32, #tpu.memory_space<vmem>>, vector<1x2x32xf32>,
    %c3_317 = arith.constant 3 : index
    %c0_318 = arith.constant 0 : index
    %c0_319 = arith.constant 0 : index
    %877 = vector.load %arg12[%c3_317, %c0_318, %c0_319] : memref<4x2x32xf32, #tpu.memory_space<vmem>>, vector<1x2x32xf32>
    %878 = vector.shape_cast %877 : vector<1x2x32xf32> to vector<2x32xf32>
    %879 = vector.shape_cast %859 : vector<2x32xf32> to vector<1x2x32xf32>
    tpu.vector_store %arg12[%c3_317, %c0_318, %c0_319], %879 {strides = array<i32>} : memref<4x2x32xf32, #tpu.memory_space<vmem>>, vector<1x2x32xf32>,
    return
  }
}

</mosaic_0001>

<llo_original>
// kernel: squeeze.0
$region0: #{squeeze.0}
  %s0 = inlined_call_operand.vmem [shape: s32[8,2,1], index: 0, kind: input, shape index: {}]
  %s1 = inlined_call_operand.vmem [shape: s32[16,1], index: 1, kind: output, shape index: {}]
  %v2 = vld [vmem:[%s0] sm:$0xff]
  %vm3 = vcmask 7168
  %4 = vst.msk [vmem:[%s1] ss:$2 sm:$0xff] %vm3, %v2
  %v5 = vld [vmem:[%s0] sm:$0xff]
  %6 = vrot.lane.b32.xlu0 %v5, 127
  %v7 = vpop.permute.xlu0 %6
  %vm8 = vcmask 7168
  %s9 = scalar_lea.vmem %s1, 1
  %10 = vst.msk [vmem:[%s9] ss:$2 sm:$0xff] %vm8, %v7

// kernel: model_forward.1
$region0: #{model_forward.1}
  #allocation0 [shape = 'u32[]', space=smem, size = 0x4, offset = 0x4, fixed_abs, tag = 'smem constant byte address 0x4 - core index']
  #allocation1 [shape = 'u32[72,128]{1,0:T(1,128)}', space=vmem, size = 0x9000, scoped, tag = 'internal scratch']
  #allocation2 [shape = 'f32[16,32]{1,0:T(8,128)}', space=vmem, size = 0x2000, scoped, tag = 'scratch operand']
  %s0 = inlined_call_operand.vmem [shape: s32[16,1], index: 0, kind: input, shape index: {}]
  %s1 = inlined_call_operand.vmem [shape: f32[4,2,32], index: 1, kind: input, shape index: {}]
  %s2 = inlined_call_operand.vmem [shape: f32[128,32], index: 2, kind: input, shape index: {}]
  %s3 = inlined_call_operand.vmem [shape: f32[32,96], index: 3, kind: input, shape index: {}]
  %s4 = inlined_call_operand.vmem [shape: f32[1,96], index: 4, kind: input, shape index: {}]
  %s5 = inlined_call_operand.vmem [shape: f32[32,96], index: 5, kind: input, shape index: {}]
  %s6 = inlined_call_operand.vmem [shape: f32[1,96], index: 6, kind: input, shape index: {}]
  %s7 = inlined_call_operand.vmem [shape: f32[3,64,128], index: 7, kind: input, shape index: {}]
  %s8 = inlined_call_operand.vmem [shape: f32[3,1,128], index: 8, kind: input, shape index: {}]
  %s9 = inlined_call_operand.vmem [shape: f32[32,128], index: 9, kind: input, shape index: {}]
  %s10 = inlined_call_operand.vmem [shape: f32[1,128], index: 10, kind: input, shape index: {}]
  %s11 = inlined_call_operand.hbm [shape: f32[16,128], index: 11, kind: output, shape index: {0}]
  %s12 = inlined_call_operand.hbm [shape: f32[4,2,32], index: 12, kind: output, shape index: {1}]
  %13 = xla_tuple %s11, %s12
  %s14 = sld [smem:[#allocation0]]
  $region62: #{model_forward.1} parent=0
    _
  %s16 = ssub.s32 1, %s14
  %s17 = scalar_select 0, %s16, %s14
  $region1: #{model_forward.1} parent=0
    #allocation3 [shape = 'u8[8192]{0}', space=vmem, size = 0x2000, scoped, tag = 'output window, operand 0, single buffered']
    #allocation4 [shape = 's32[1]{0}', space=sflag, size = 0x4, scoped, tag = 'scoped memory for model_forward.1']
    #allocation5 [shape = 'u8[4096]{0}', space=vmem, size = 0x1000, scoped, tag = 'output window, operand 1, single buffered']
    #allocation6 [shape = 's32[1]{0}', space=sflag, size = 0x4, scoped, tag = 'scoped memory for model_forward.1']
    %18 = vsyncpa [#allocation4], 0
    %19 = vsyncpa [#allocation6], 0
    // Predicated region
    $region2: #{model_forward.1} parent=1 // pred_check
      _
    $region3: #{model_forward.1} parent=1 // pred_check_branch
      %21 = sbr.rel (0) target = $region5
    $region4: #{model_forward.1} parent=1 // pred_region
      _
    $region5: #{model_forward.1} parent=1 // pred_fallthru
      _
    // Predicated region
    $region6: #{model_forward.1} parent=1 // pred_check
      _
    $region7: #{model_forward.1} parent=1 // pred_check_branch
      %23 = sbr.rel (0) target = $region9
    $region8: #{model_forward.1} parent=1 // pred_region
      _
    $region9: #{model_forward.1} parent=1 // pred_fallthru
      _
    // Predicated region
    $region10: #{model_forward.1} parent=1 // pred_check
      _
    $region11: #{model_forward.1} parent=1 // pred_check_branch
      %25 = sbr.rel (0) target = $region13
    $region12: #{model_forward.1} parent=1 // pred_region
      _
    $region13: #{model_forward.1} parent=1 // pred_fallthru
      _
    // Predicated region
    $region14: #{model_forward.1} parent=1 // pred_check
      _
    $region15: #{model_forward.1} parent=1 // pred_check_branch
      %27 = sbr.rel (0) target = $region17
    $region16: #{model_forward.1} parent=1 // pred_region
      _
    $region17: #{model_forward.1} parent=1 // pred_fallthru
      _
    // Predicated region
    $region18: #{model_forward.1} parent=1 // pred_check
      _
    $region19: #{model_forward.1} parent=1 // pred_check_branch
      %29 = sbr.rel (0) target = $region21
    $region20: #{model_forward.1} parent=1 // pred_region
      _
    $region21: #{model_forward.1} parent=1 // pred_fallthru
      _
    // Predicated region
    $region22: #{model_forward.1} parent=1 // pred_check
      _
    $region23: #{model_forward.1} parent=1 // pred_check_branch
      %31 = sbr.rel (0) target = $region25
    $region24: #{model_forward.1} parent=1 // pred_region
      _
    $region25: #{model_forward.1} parent=1 // pred_fallthru
      _
    // Predicated region
    $region26: #{model_forward.1} parent=1 // pred_check
      _
    $region27: #{model_forward.1} parent=1 // pred_check_branch
      %33 = sbr.rel (0) target = $region29
    $region28: #{model_forward.1} parent=1 // pred_region
      _
    $region29: #{model_forward.1} parent=1 // pred_fallthru
      _
    // Predicated region
    $region30: #{model_forward.1} parent=1 // pred_check
      _
    $region31: #{model_forward.1} parent=1 // pred_check_branch
      %35 = sbr.rel (0) target = $region33
    $region32: #{model_forward.1} parent=1 // pred_region
      _
    $region33: #{model_forward.1} parent=1 // pred_fallthru
      _
    // Predicated region
    $region34: #{model_forward.1} parent=1 // pred_check
      _
    $region35: #{model_forward.1} parent=1 // pred_check_branch
      %37 = sbr.rel (0) target = $region37
    $region36: #{model_forward.1} parent=1 // pred_region
      _
    $region37: #{model_forward.1} parent=1 // pred_fallthru
      _
    // Predicated region
    $region38: #{model_forward.1} parent=1 // pred_check
      _
    $region39: #{model_forward.1} parent=1 // pred_check_branch
      %39 = sbr.rel (0) target = $region41
    $region40: #{model_forward.1} parent=1 // pred_region
      _
    $region41: #{model_forward.1} parent=1 // pred_fallthru
      _
    // Predicated region
    $region42: #{model_forward.1} parent=1 // pred_check
      _
    $region43: #{model_forward.1} parent=1 // pred_check_branch
      %41 = sbr.rel (0) target = $region45
    $region44: #{model_forward.1} parent=1 // pred_region
      _
    $region45: #{model_forward.1} parent=1 // pred_fallthru
      _
    %v42 = vlaneseq
    %v43 = vand.u32 %v42, 127
    %v44 = vld [vmem:[%s0] sm:$0xff]
    %v45 = vld [vmem:[%s0 + $0x8] sm:$0xff]
    %46 = vset.pattern.permute.xlu0 0
    %47 = vperm.xlu0 %46, %v44
    %v48 = vpop.permute.xlu0 %47
    %49 = vset.pattern.permute.xlu0 0
    %50 = vperm.xlu0 %49, %v45
    %v51 = vpop.permute.xlu0 %50
    %vm52 = vcmp.eq.s32.totalorder %v43, %v48
    %vm53 = vcmp.eq.s32.totalorder %v43, %v51
    %v54 = vsel %vm52, 1, 0
    %v55 = vsel %vm53, 1, 0
    %v56 = vcvt.s32.f32 %v54
    %v57 = vcvt.s32.f32 %v55
    %v58 = vld [vmem:[%s2] sm:$0xff]
    %v59 = vld [vmem:[%s2 + $0x8] sm:$0xff]
    %v60 = vld [vmem:[%s2 + $0x10] sm:$0xff]
    %v61 = vld [vmem:[%s2 + $0x18] sm:$0xff]
    %v62 = vld [vmem:[%s2 + $0x20] sm:$0xff]
    %v63 = vld [vmem:[%s2 + $0x28] sm:$0xff]
    %v64 = vld [vmem:[%s2 + $0x30] sm:$0xff]
    %v65 = vld [vmem:[%s2 + $0x38] sm:$0xff]
    %v66 = vld [vmem:[%s2 + $0x40] sm:$0xff]
    %v67 = vld [vmem:[%s2 + $0x48] sm:$0xff]
    %v68 = vld [vmem:[%s2 + $0x50] sm:$0xff]
    %v69 = vld [vmem:[%s2 + $0x58] sm:$0xff]
    %v70 = vld [vmem:[%s2 + $0x60] sm:$0xff]
    %v71 = vld [vmem:[%s2 + $0x68] sm:$0xff]
    %v72 = vld [vmem:[%s2 + $0x70] sm:$0xff]
    %v73 = vld [vmem:[%s2 + $0x78] sm:$0xff]
    %74 = vmatpush.msra.mxu0 %v73
    %75 = vmatpush.msra.mxu0 %v72
    %76 = vmatpush.msra.mxu0 %v71
    %77 = vmatpush.msra.mxu0 %v70
    %78 = vmatpush.msra.mxu0 %v69
    %79 = vmatpush.msra.mxu0 %v68
    %80 = vmatpush.msra.mxu0 %v67
    %81 = vmatpush.msra.mxu0 %v66
    %82 = vmatpush.msra.mxu0 %v65
    %83 = vmatpush.msra.mxu0 %v64
    %84 = vmatpush.msra.mxu0 %v63
    %85 = vmatpush.msra.mxu0 %v62
    %86 = vmatpush.msra.mxu0 %v61
    %87 = vmatpush.msra.mxu0 %v60
    %88 = vmatpush.msra.mxu0 %v59
    %89 = vmatpush.msra.mxu0 %v58
    %90 = vmatmul.f32.gmra.mxu0 %v56
    %v91 = vpop.f32.mrf.mxu0
    %v92 = vadd.f32 0.0, %v91
    %93 = vmatmul.f32.gmra.mxu0 %v57
    %v94 = vpop.f32.mrf.mxu0
    %v95 = vadd.f32 0.0, %v94
    %96 = vdwg.mxu0
    %v97 = vld [vmem:[%s3] sm:$0xff]
    %v98 = vld [vmem:[%s3 + $0x8] sm:$0xff]
    %v99 = vld [vmem:[%s3 + $0x10] sm:$0xff]
    %v100 = vld [vmem:[%s3 + $0x18] sm:$0xff]
    %v101 = vld [vmem:[%s4] sm:$0x1]
    %v103 = vperm.slane %v101, 0
    %vm105 = vcmask 261120
    %v107 = vsel %vm105, %v92, 0
    %v110 = vsel %vm105, %v95, 0
    %112 = vmatpush.msra.mxu0 0.0
    %113 = vmatpush.msra.mxu0 0.0
    %114 = vmatpush.msra.mxu0 0.0
    %115 = vmatpush.msra.mxu0 0.0
    %116 = vmatpush.msra.mxu0 0.0
    %117 = vmatpush.msra.mxu0 0.0
    %118 = vmatpush.msra.mxu0 0.0
    %119 = vmatpush.msra.mxu0 0.0
    %120 = vmatpush.msra.mxu0 0.0
    %121 = vmatpush.msra.mxu0 0.0
    %122 = vmatpush.msra.mxu0 0.0
    %123 = vmatpush.msra.mxu0 0.0
    %124 = vmatpush.msra.mxu0 %v100
    %125 = vmatpush.msra.mxu0 %v99
    %126 = vmatpush.msra.mxu0 %v98
    %127 = vmatpush.msra.mxu0 %v97
    %128 = vmatmul.f32.gmra.mxu0 %v107
    %v129 = vpop.f32.mrf.mxu0
    %v130 = vadd.f32 %v103, %v129
    %131 = vmatmul.f32.gmra.mxu0 %v110
    %v132 = vpop.f32.mrf.mxu0
    %v133 = vadd.f32 %v103, %v132
    %134 = vdwg.mxu0
    %v135 = vld [vmem:[%s1] sm:$0x3]
    %s136 = scalar_lea.vmem %s1, 2
    %v137 = vld [vmem:[%s136] sm:$0x3]
    %s138 = scalar_lea.vmem %s1, 4
    %v139 = vld [vmem:[%s138] sm:$0x3]
    %s140 = scalar_lea.vmem %s1, 6
    %v141 = vld [vmem:[%s140] sm:$0x3]
    %v142 = vld [vmem:[%s5] sm:$0xff]
    %v143 = vld [vmem:[%s5 + $0x8] sm:$0xff]
    %v144 = vld [vmem:[%s5 + $0x10] sm:$0xff]
    %v145 = vld [vmem:[%s5 + $0x18] sm:$0xff]
    %v146 = vld [vmem:[%s6] sm:$0x1]
    %v148 = vperm.slane %v146, 0
    %v151 = vsel %vm105, %v135, 0
    %153 = vmatpush.msra.mxu0 0.0
    %154 = vmatpush.msra.mxu0 0.0
    %155 = vmatpush.msra.mxu0 0.0
    %156 = vmatpush.msra.mxu0 0.0
    %157 = vmatpush.msra.mxu0 0.0
    %158 = vmatpush.msra.mxu0 0.0
    %159 = vmatpush.msra.mxu0 0.0
    %160 = vmatpush.msra.mxu0 0.0
    %161 = vmatpush.msra.mxu0 0.0
    %162 = vmatpush.msra.mxu0 0.0
    %163 = vmatpush.msra.mxu0 0.0
    %164 = vmatpush.msra.mxu0 0.0
    %165 = vmatpush.msra.mxu0 %v145
    %166 = vmatpush.msra.mxu0 %v144
    %167 = vmatpush.msra.mxu0 %v143
    %168 = vmatpush.msra.mxu0 %v142
    %169 = vmatmul.f32.gmra.mxu0 %v151
    %v170 = vpop.f32.mrf.mxu0
    %v171 = vadd.f32 %v148, %v170
    %172 = vdwg.mxu0
    %v173 = vadd.f32 %v130, %v171
    %v174 = vxor.u32 %v173, 2147483648
    %v175 = vmul.f32 %v174, 1.442695
    %v176 = vpow.pop %v175
    %v177 = vadd.f32 %v176, 1.0
    %v178 = vrcp.pop %v177
    %v179 = vmul.f32 %v177, %v178
    %v180 = vsub.f32 1.0, %v179
    %v181 = vmul.f32 %v178, %v180
    %v182 = vadd.f32 %v178, %v181
    %vm183 = vweird.f32 %v177
    %vm184 = vweird.f32 %v178
    %vm185 = vmor %vm183, %vm184
    %v186 = vsel %vm185, %v178, %v182
    %v187 = vand.u32 2147483647, %v177
    %vm188 = vcmp.eq.f32.partialorder %v187, 8.507059e+37
    %v189 = vand.u32 %v177, 2147483648
    %v190 = vor.u32 1.1754944e-38, %v189
    %v191 = vsel %vm188, %v190, %v186
    %v192 = vmul.f32 1.0, %v191
    %194 = vrot.lane.b32.xlu0 %v171, 64
    %v195 = vpop.permute.xlu0 %194
    %v197 = vmul.f32 %v192, %v195
    %199 = vrot.lane.b32.xlu0 %v197, 64
    %v200 = vpop.permute.xlu0 %199
    %v202 = vadd.f32 %v130, %v200
    %v203 = vtanh.pop %v202
    %v204 = vsub.f32 1.0, %v192
    %206 = vrot.lane.b32.xlu0 %v203, 96
    %v207 = vpop.permute.xlu0 %206
    %v209 = vmul.f32 %v204, %v207
    %210 = vrot.lane.b32.xlu0 %v135, 32
    %v211 = vpop.permute.xlu0 %210
    %v213 = vmul.f32 %v192, %v211
    %v214 = vadd.f32 %v209, %v213
    %216 = vrot.lane.b32.xlu0 %v214, 96
    %v217 = vpop.permute.xlu0 %216
    %220 = vrot.lane.b32.xlu0 %v137, 32
    %v221 = vpop.permute.xlu0 %220
    %v223 = vsel %vm105, %v217, %v221
    %v224 = vld [vmem:[%s7] sm:$0xff]
    %v225 = vld [vmem:[%s7 + $0x8] sm:$0xff]
    %v226 = vld [vmem:[%s7 + $0x10] sm:$0xff]
    %v227 = vld [vmem:[%s7 + $0x18] sm:$0xff]
    %v228 = vld [vmem:[%s7 + $0x20] sm:$0xff]
    %v229 = vld [vmem:[%s7 + $0x28] sm:$0xff]
    %v230 = vld [vmem:[%s7 + $0x30] sm:$0xff]
    %v231 = vld [vmem:[%s7 + $0x38] sm:$0xff]
    %v232 = vld [vmem:[%s8] sm:$0x1]
    %v234 = vperm.slane %v232, 0
    %vm236 = vcmask 523264
    %v238 = vsel %vm236, %v223, 0
    %240 = vmatpush.msra.mxu0 0.0
    %241 = vmatpush.msra.mxu0 0.0
    %242 = vmatpush.msra.mxu0 0.0
    %243 = vmatpush.msra.mxu0 0.0
    %244 = vmatpush.msra.mxu0 0.0
    %245 = vmatpush.msra.mxu0 0.0
    %246 = vmatpush.msra.mxu0 0.0
    %247 = vmatpush.msra.mxu0 0.0
    %248 = vmatpush.msra.mxu0 %v231
    %249 = vmatpush.msra.mxu0 %v230
    %250 = vmatpush.msra.mxu0 %v229
    %251 = vmatpush.msra.mxu0 %v228
    %252 = vmatpush.msra.mxu0 %v227
    %253 = vmatpush.msra.mxu0 %v226
    %254 = vmatpush.msra.mxu0 %v225
    %255 = vmatpush.msra.mxu0 %v224
    %256 = vmatmul.f32.gmra.mxu0 %v238
    %v257 = vpop.f32.mrf.mxu0
    %v258 = vadd.f32 %v234, %v257
    %259 = vdwg.mxu0
    %v260 = vxor.u32 %v258, 2147483648
    %v261 = vmul.f32 %v260, 1.442695
    %v262 = vpow.pop %v261
    %v263 = vadd.f32 %v262, 1.0
    %v264 = vrcp.pop %v263
    %v265 = vmul.f32 %v263, %v264
    %v266 = vsub.f32 1.0, %v265
    %v267 = vmul.f32 %v264, %v266
    %v268 = vadd.f32 %v264, %v267
    %vm269 = vweird.f32 %v263
    %vm270 = vweird.f32 %v264
    %vm271 = vmor %vm269, %vm270
    %v272 = vsel %vm271, %v264, %v268
    %v273 = vand.u32 2147483647, %v263
    %vm274 = vcmp.eq.f32.partialorder %v273, 8.507059e+37
    %v275 = vand.u32 %v263, 2147483648
    %v276 = vor.u32 1.1754944e-38, %v275
    %v277 = vsel %vm274, %v276, %v272
    %v278 = vmul.f32 1.0, %v277
    %280 = vrot.lane.b32.xlu0 %v258, 32
    %v281 = vpop.permute.xlu0 %280
    %v283 = vmul.f32 %v278, %v281
    %285 = vrot.lane.b32.xlu0 %v283, 64
    %v286 = vpop.permute.xlu0 %285
    %v288 = vadd.f32 %v258, %v286
    %v289 = vtanh.pop %v288
    %v290 = vsub.f32 1.0, %v278
    %292 = vrot.lane.b32.xlu0 %v289, 96
    %v293 = vpop.permute.xlu0 %292
    %v295 = vmul.f32 %v290, %v293
    %v296 = vmul.f32 %v278, %v221
    %v297 = vadd.f32 %v295, %v296
    %299 = vrot.lane.b32.xlu0 %v297, 96
    %v300 = vpop.permute.xlu0 %299
    %303 = vrot.lane.b32.xlu0 %v139, 32
    %v304 = vpop.permute.xlu0 %303
    %v306 = vsel %vm105, %v300, %v304
    %s307 = scalar_lea.vmem %s7, 64
    %v308 = vld [vmem:[%s307] sm:$0xff]
    %v309 = vld [vmem:[%s307 + $0x8] sm:$0xff]
    %v310 = vld [vmem:[%s307 + $0x10] sm:$0xff]
    %v311 = vld [vmem:[%s307 + $0x18] sm:$0xff]
    %v312 = vld [vmem:[%s307 + $0x20] sm:$0xff]
    %v313 = vld [vmem:[%s307 + $0x28] sm:$0xff]
    %v314 = vld [vmem:[%s307 + $0x30] sm:$0xff]
    %v315 = vld [vmem:[%s307 + $0x38] sm:$0xff]
    %s316 = scalar_lea.vmem %s8, 1
    %v317 = vld [vmem:[%s316] sm:$0x1]
    %v319 = vperm.slane %v317, 0
    %v322 = vsel %vm236, %v306, 0
    %324 = vmatpush.msra.mxu0 0.0
    %325 = vmatpush.msra.mxu0 0.0
    %326 = vmatpush.msra.mxu0 0.0
    %327 = vmatpush.msra.mxu0 0.0
    %328 = vmatpush.msra.mxu0 0.0
    %329 = vmatpush.msra.mxu0 0.0
    %330 = vmatpush.msra.mxu0 0.0
    %331 = vmatpush.msra.mxu0 0.0
    %332 = vmatpush.msra.mxu0 %v315
    %333 = vmatpush.msra.mxu0 %v314
    %334 = vmatpush.msra.mxu0 %v313
    %335 = vmatpush.msra.mxu0 %v312
    %336 = vmatpush.msra.mxu0 %v311
    %337 = vmatpush.msra.mxu0 %v310
    %338 = vmatpush.msra.mxu0 %v309
    %339 = vmatpush.msra.mxu0 %v308
    %340 = vmatmul.f32.gmra.mxu0 %v322
    %v341 = vpop.f32.mrf.mxu0
    %v342 = vadd.f32 %v319, %v341
    %343 = vdwg.mxu0
    %v344 = vxor.u32 %v342, 2147483648
    %v345 = vmul.f32 %v344, 1.442695
    %v346 = vpow.pop %v345
    %v347 = vadd.f32 %v346, 1.0
    %v348 = vrcp.pop %v347
    %v349 = vmul.f32 %v347, %v348
    %v350 = vsub.f32 1.0, %v349
    %v351 = vmul.f32 %v348, %v350
    %v352 = vadd.f32 %v348, %v351
    %vm353 = vweird.f32 %v347
    %vm354 = vweird.f32 %v348
    %vm355 = vmor %vm353, %vm354
    %v356 = vsel %vm355, %v348, %v352
    %v357 = vand.u32 2147483647, %v347
    %vm358 = vcmp.eq.f32.partialorder %v357, 8.507059e+37
    %v359 = vand.u32 %v347, 2147483648
    %v360 = vor.u32 1.1754944e-38, %v359
    %v361 = vsel %vm358, %v360, %v356
    %v362 = vmul.f32 1.0, %v361
    %364 = vrot.lane.b32.xlu0 %v342, 32
    %v365 = vpop.permute.xlu0 %364
    %v367 = vmul.f32 %v362, %v365
    %369 = vrot.lane.b32.xlu0 %v367, 64
    %v370 = vpop.permute.xlu0 %369
    %v372 = vadd.f32 %v342, %v370
    %v373 = vtanh.pop %v372
    %v374 = vsub.f32 1.0, %v362
    %376 = vrot.lane.b32.xlu0 %v373, 96
    %v377 = vpop.permute.xlu0 %376
    %v379 = vmul.f32 %v374, %v377
    %v380 = vmul.f32 %v362, %v304
    %v381 = vadd.f32 %v379, %v380
    %383 = vrot.lane.b32.xlu0 %v381, 96
    %v384 = vpop.permute.xlu0 %383
    %387 = vrot.lane.b32.xlu0 %v141, 32
    %v388 = vpop.permute.xlu0 %387
    %v390 = vsel %vm105, %v384, %v388
    %s391 = scalar_lea.vmem %s7, 128
    %v392 = vld [vmem:[%s391] sm:$0xff]
    %v393 = vld [vmem:[%s391 + $0x8] sm:$0xff]
    %v394 = vld [vmem:[%s391 + $0x10] sm:$0xff]
    %v395 = vld [vmem:[%s391 + $0x18] sm:$0xff]
    %v396 = vld [vmem:[%s391 + $0x20] sm:$0xff]
    %v397 = vld [vmem:[%s391 + $0x28] sm:$0xff]
    %v398 = vld [vmem:[%s391 + $0x30] sm:$0xff]
    %v399 = vld [vmem:[%s391 + $0x38] sm:$0xff]
    %s400 = scalar_lea.vmem %s8, 2
    %v401 = vld [vmem:[%s400] sm:$0x1]
    %v403 = vperm.slane %v401, 0
    %v406 = vsel %vm236, %v390, 0
    %408 = vmatpush.msra.mxu0 0.0
    %409 = vmatpush.msra.mxu0 0.0
    %410 = vmatpush.msra.mxu0 0.0
    %411 = vmatpush.msra.mxu0 0.0
    %412 = vmatpush.msra.mxu0 0.0
    %413 = vmatpush.msra.mxu0 0.0
    %414 = vmatpush.msra.mxu0 0.0
    %415 = vmatpush.msra.mxu0 0.0
    %416 = vmatpush.msra.mxu0 %v399
    %417 = vmatpush.msra.mxu0 %v398
    %418 = vmatpush.msra.mxu0 %v397
    %419 = vmatpush.msra.mxu0 %v396
    %420 = vmatpush.msra.mxu0 %v395
    %421 = vmatpush.msra.mxu0 %v394
    %422 = vmatpush.msra.mxu0 %v393
    %423 = vmatpush.msra.mxu0 %v392
    %424 = vmatmul.f32.gmra.mxu0 %v406
    %v425 = vpop.f32.mrf.mxu0
    %v426 = vadd.f32 %v403, %v425
    %427 = vdwg.mxu0
    %v428 = vxor.u32 %v426, 2147483648
    %v429 = vmul.f32 %v428, 1.442695
    %v430 = vpow.pop %v429
    %v431 = vadd.f32 %v430, 1.0
    %v432 = vrcp.pop %v431
    %v433 = vmul.f32 %v431, %v432
    %v434 = vsub.f32 1.0, %v433
    %v435 = vmul.f32 %v432, %v434
    %v436 = vadd.f32 %v432, %v435
    %vm437 = vweird.f32 %v431
    %vm438 = vweird.f32 %v432
    %vm439 = vmor %vm437, %vm438
    %v440 = vsel %vm439, %v432, %v436
    %v441 = vand.u32 2147483647, %v431
    %vm442 = vcmp.eq.f32.partialorder %v441, 8.507059e+37
    %v443 = vand.u32 %v431, 2147483648
    %v444 = vor.u32 1.1754944e-38, %v443
    %v445 = vsel %vm442, %v444, %v440
    %v446 = vmul.f32 1.0, %v445
    %448 = vrot.lane.b32.xlu0 %v426, 32
    %v449 = vpop.permute.xlu0 %448
    %v451 = vmul.f32 %v446, %v449
    %453 = vrot.lane.b32.xlu0 %v451, 64
    %v454 = vpop.permute.xlu0 %453
    %v456 = vadd.f32 %v426, %v454
    %v457 = vtanh.pop %v456
    %v458 = vsub.f32 1.0, %v446
    %460 = vrot.lane.b32.xlu0 %v457, 96
    %v461 = vpop.permute.xlu0 %460
    %v463 = vmul.f32 %v458, %v461
    %v464 = vmul.f32 %v446, %v388
    %v465 = vadd.f32 %v463, %v464
    %467 = vrot.lane.b32.xlu0 %v465, 96
    %v468 = vpop.permute.xlu0 %467
    %vm470 = vcmask 254976
    %471 = vst.msk [vmem:[#allocation2] sm:$0x3] %vm470, %v468
    %v472 = vld [vmem:[%s5] sm:$0xff]
    %v473 = vld [vmem:[%s5 + $0x8] sm:$0xff]
    %v474 = vld [vmem:[%s5 + $0x10] sm:$0xff]
    %v475 = vld [vmem:[%s5 + $0x18] sm:$0xff]
    %v476 = vld [vmem:[%s6] sm:$0x1]
    %v478 = vperm.slane %v476, 0
    %v480 = vsel %vm105, %v217, 0
    %482 = vmatpush.msra.mxu0 0.0
    %483 = vmatpush.msra.mxu0 0.0
    %484 = vmatpush.msra.mxu0 0.0
    %485 = vmatpush.msra.mxu0 0.0
    %486 = vmatpush.msra.mxu0 0.0
    %487 = vmatpush.msra.mxu0 0.0
    %488 = vmatpush.msra.mxu0 0.0
    %489 = vmatpush.msra.mxu0 0.0
    %490 = vmatpush.msra.mxu0 0.0
    %491 = vmatpush.msra.mxu0 0.0
    %492 = vmatpush.msra.mxu0 0.0
    %493 = vmatpush.msra.mxu0 0.0
    %494 = vmatpush.msra.mxu0 %v475
    %495 = vmatpush.msra.mxu0 %v474
    %496 = vmatpush.msra.mxu0 %v473
    %497 = vmatpush.msra.mxu0 %v472
    %498 = vmatmul.f32.gmra.mxu0 %v480
    %v499 = vpop.f32.mrf.mxu0
    %v500 = vadd.f32 %v478, %v499
    %501 = vdwg.mxu0
    %v503 = vrot.slane %v500, 6
    %v505 = vadd.f32 %v130, %v503
    %v506 = vxor.u32 %v505, 2147483648
    %v507 = vmul.f32 %v506, 1.442695
    %v508 = vpow.pop %v507
    %v509 = vadd.f32 %v508, 1.0
    %v510 = vrcp.pop %v509
    %v511 = vmul.f32 %v509, %v510
    %v512 = vsub.f32 1.0, %v511
    %v513 = vmul.f32 %v510, %v512
    %v514 = vadd.f32 %v510, %v513
    %vm515 = vweird.f32 %v509
    %vm516 = vweird.f32 %v510
    %vm517 = vmor %vm515, %vm516
    %v518 = vsel %vm517, %v510, %v514
    %v519 = vand.u32 2147483647, %v509
    %vm520 = vcmp.eq.f32.partialorder %v519, 8.507059e+37
    %v521 = vand.u32 %v509, 2147483648
    %v522 = vor.u32 1.1754944e-38, %v521
    %v523 = vsel %vm520, %v522, %v518
    %v524 = vmul.f32 1.0, %v523
    %525 = vrot.lane.b32.xlu0 %v503, 64
    %v526 = vpop.permute.xlu0 %525
    %v528 = vmul.f32 %v524, %v526
    %530 = vrot.lane.b32.xlu0 %v528, 64
    %v531 = vpop.permute.xlu0 %530
    %v533 = vadd.f32 %v130, %v531
    %v534 = vtanh.pop %v533
    %v535 = vsub.f32 1.0, %v524
    %537 = vrot.lane.b32.xlu0 %v534, 96
    %v538 = vpop.permute.xlu0 %537
    %v540 = vmul.f32 %v535, %v538
    %v541 = vrot.slane %v214, 6
    %v543 = vmul.f32 %v524, %v541
    %v544 = vadd.f32 %v540, %v543
    %546 = vrot.lane.b32.xlu0 %v544, 96
    %v547 = vpop.permute.xlu0 %546
    %v549 = vrot.slane %v297, 6
    %v551 = vsel %vm105, %v547, %v549
    %v552 = vld [vmem:[%s7] sm:$0xff]
    %v553 = vld [vmem:[%s7 + $0x8] sm:$0xff]
    %v554 = vld [vmem:[%s7 + $0x10] sm:$0xff]
    %v555 = vld [vmem:[%s7 + $0x18] sm:$0xff]
    %v556 = vld [vmem:[%s7 + $0x20] sm:$0xff]
    %v557 = vld [vmem:[%s7 + $0x28] sm:$0xff]
    %v558 = vld [vmem:[%s7 + $0x30] sm:$0xff]
    %v559 = vld [vmem:[%s7 + $0x38] sm:$0xff]
    %v560 = vld [vmem:[%s8] sm:$0x1]
    %v562 = vperm.slane %v560, 0
    %v565 = vrot.slane %v551, 2
    %v566 = vsel %vm236, %v565, 0
    %568 = vmatpush.msra.mxu0 0.0
    %569 = vmatpush.msra.mxu0 0.0
    %570 = vmatpush.msra.mxu0 0.0
    %571 = vmatpush.msra.mxu0 0.0
    %572 = vmatpush.msra.mxu0 0.0
    %573 = vmatpush.msra.mxu0 0.0
    %574 = vmatpush.msra.mxu0 0.0
    %575 = vmatpush.msra.mxu0 0.0
    %576 = vmatpush.msra.mxu0 %v559
    %577 = vmatpush.msra.mxu0 %v558
    %578 = vmatpush.msra.mxu0 %v557
    %579 = vmatpush.msra.mxu0 %v556
    %580 = vmatpush.msra.mxu0 %v555
    %581 = vmatpush.msra.mxu0 %v554
    %582 = vmatpush.msra.mxu0 %v553
    %583 = vmatpush.msra.mxu0 %v552
    %584 = vmatmul.f32.gmra.mxu0 %v566
    %v585 = vpop.f32.mrf.mxu0
    %v586 = vadd.f32 %v562, %v585
    %587 = vdwg.mxu0
    %v588 = vxor.u32 %v586, 2147483648
    %v589 = vmul.f32 %v588, 1.442695
    %v590 = vpow.pop %v589
    %v591 = vadd.f32 %v590, 1.0
    %v592 = vrcp.pop %v591
    %v593 = vmul.f32 %v591, %v592
    %v594 = vsub.f32 1.0, %v593
    %v595 = vmul.f32 %v592, %v594
    %v596 = vadd.f32 %v592, %v595
    %vm597 = vweird.f32 %v591
    %vm598 = vweird.f32 %v592
    %vm599 = vmor %vm597, %vm598
    %v600 = vsel %vm599, %v592, %v596
    %v601 = vand.u32 2147483647, %v591
    %vm602 = vcmp.eq.f32.partialorder %v601, 8.507059e+37
    %v603 = vand.u32 %v591, 2147483648
    %v604 = vor.u32 1.1754944e-38, %v603
    %v605 = vsel %vm602, %v604, %v600
    %v606 = vmul.f32 1.0, %v605
    %608 = vrot.lane.b32.xlu0 %v586, 32
    %v609 = vpop.permute.xlu0 %608
    %v611 = vmul.f32 %v606, %v609
    %613 = vrot.lane.b32.xlu0 %v611, 64
    %v614 = vpop.permute.xlu0 %613
    %v616 = vadd.f32 %v586, %v614
    %v617 = vtanh.pop %v616
    %v618 = vsub.f32 1.0, %v606
    %620 = vrot.lane.b32.xlu0 %v617, 96
    %v621 = vpop.permute.xlu0 %620
    %v623 = vmul.f32 %v618, %v621
    %v624 = vmul.f32 %v606, %v297
    %v625 = vadd.f32 %v623, %v624
    %627 = vrot.lane.b32.xlu0 %v625, 96
    %v628 = vpop.permute.xlu0 %627
    %v630 = vsel %vm105, %v628, %v381
    %v631 = vld [vmem:[%s307] sm:$0xff]
    %v632 = vld [vmem:[%s307 + $0x8] sm:$0xff]
    %v633 = vld [vmem:[%s307 + $0x10] sm:$0xff]
    %v634 = vld [vmem:[%s307 + $0x18] sm:$0xff]
    %v635 = vld [vmem:[%s307 + $0x20] sm:$0xff]
    %v636 = vld [vmem:[%s307 + $0x28] sm:$0xff]
    %v637 = vld [vmem:[%s307 + $0x30] sm:$0xff]
    %v638 = vld [vmem:[%s307 + $0x38] sm:$0xff]
    %v639 = vld [vmem:[%s316] sm:$0x1]
    %v641 = vperm.slane %v639, 0
    %v644 = vsel %vm236, %v630, 0
    %646 = vmatpush.msra.mxu0 0.0
    %647 = vmatpush.msra.mxu0 0.0
    %648 = vmatpush.msra.mxu0 0.0
    %649 = vmatpush.msra.mxu0 0.0
    %650 = vmatpush.msra.mxu0 0.0
    %651 = vmatpush.msra.mxu0 0.0
    %652 = vmatpush.msra.mxu0 0.0
    %653 = vmatpush.msra.mxu0 0.0
    %654 = vmatpush.msra.mxu0 %v638
    %655 = vmatpush.msra.mxu0 %v637
    %656 = vmatpush.msra.mxu0 %v636
    %657 = vmatpush.msra.mxu0 %v635
    %658 = vmatpush.msra.mxu0 %v634
    %659 = vmatpush.msra.mxu0 %v633
    %660 = vmatpush.msra.mxu0 %v632
    %661 = vmatpush.msra.mxu0 %v631
    %662 = vmatmul.f32.gmra.mxu0 %v644
    %v663 = vpop.f32.mrf.mxu0
    %v664 = vadd.f32 %v641, %v663
    %665 = vdwg.mxu0
    %v666 = vxor.u32 %v664, 2147483648
    %v667 = vmul.f32 %v666, 1.442695
    %v668 = vpow.pop %v667
    %v669 = vadd.f32 %v668, 1.0
    %v670 = vrcp.pop %v669
    %v671 = vmul.f32 %v669, %v670
    %v672 = vsub.f32 1.0, %v671
    %v673 = vmul.f32 %v670, %v672
    %v674 = vadd.f32 %v670, %v673
    %vm675 = vweird.f32 %v669
    %vm676 = vweird.f32 %v670
    %vm677 = vmor %vm675, %vm676
    %v678 = vsel %vm677, %v670, %v674
    %v679 = vand.u32 2147483647, %v669
    %vm680 = vcmp.eq.f32.partialorder %v679, 8.507059e+37
    %v681 = vand.u32 %v669, 2147483648
    %v682 = vor.u32 1.1754944e-38, %v681
    %v683 = vsel %vm680, %v682, %v678
    %v684 = vmul.f32 1.0, %v683
    %686 = vrot.lane.b32.xlu0 %v664, 32
    %v687 = vpop.permute.xlu0 %686
    %v689 = vmul.f32 %v684, %v687
    %691 = vrot.lane.b32.xlu0 %v689, 64
    %v692 = vpop.permute.xlu0 %691
    %v694 = vadd.f32 %v664, %v692
    %v695 = vtanh.pop %v694
    %v696 = vsub.f32 1.0, %v684
    %698 = vrot.lane.b32.xlu0 %v695, 96
    %v699 = vpop.permute.xlu0 %698
    %v701 = vmul.f32 %v696, %v699
    %v702 = vmul.f32 %v684, %v381
    %v703 = vadd.f32 %v701, %v702
    %705 = vrot.lane.b32.xlu0 %v703, 96
    %v706 = vpop.permute.xlu0 %705
    %v708 = vsel %vm105, %v706, %v465
    %v709 = vld [vmem:[%s391] sm:$0xff]
    %v710 = vld [vmem:[%s391 + $0x8] sm:$0xff]
    %v711 = vld [vmem:[%s391 + $0x10] sm:$0xff]
    %v712 = vld [vmem:[%s391 + $0x18] sm:$0xff]
    %v713 = vld [vmem:[%s391 + $0x20] sm:$0xff]
    %v714 = vld [vmem:[%s391 + $0x28] sm:$0xff]
    %v715 = vld [vmem:[%s391 + $0x30] sm:$0xff]
    %v716 = vld [vmem:[%s391 + $0x38] sm:$0xff]
    %v717 = vld [vmem:[%s400] sm:$0x1]
    %v719 = vperm.slane %v717, 0
    %v722 = vsel %vm236, %v708, 0
    %724 = vmatpush.msra.mxu0 0.0
    %725 = vmatpush.msra.mxu0 0.0
    %726 = vmatpush.msra.mxu0 0.0
    %727 = vmatpush.msra.mxu0 0.0
    %728 = vmatpush.msra.mxu0 0.0
    %729 = vmatpush.msra.mxu0 0.0
    %730 = vmatpush.msra.mxu0 0.0
    %731 = vmatpush.msra.mxu0 0.0
    %732 = vmatpush.msra.mxu0 %v716
    %733 = vmatpush.msra.mxu0 %v715
    %734 = vmatpush.msra.mxu0 %v714
    %735 = vmatpush.msra.mxu0 %v713
    %736 = vmatpush.msra.mxu0 %v712
    %737 = vmatpush.msra.mxu0 %v711
    %738 = vmatpush.msra.mxu0 %v710
    %739 = vmatpush.msra.mxu0 %v709
    %740 = vmatmul.f32.gmra.mxu0 %v722
    %v741 = vpop.f32.mrf.mxu0
    %v742 = vadd.f32 %v719, %v741
    %743 = vdwg.mxu0
    %v744 = vxor.u32 %v742, 2147483648
    %v745 = vmul.f32 %v744, 1.442695
    %v746 = vpow.pop %v745
    %v747 = vadd.f32 %v746, 1.0
    %v748 = vrcp.pop %v747
    %v749 = vmul.f32 %v747, %v748
    %v750 = vsub.f32 1.0, %v749
    %v751 = vmul.f32 %v748, %v750
    %v752 = vadd.f32 %v748, %v751
    %vm753 = vweird.f32 %v747
    %vm754 = vweird.f32 %v748
    %vm755 = vmor %vm753, %vm754
    %v756 = vsel %vm755, %v748, %v752
    %v757 = vand.u32 2147483647, %v747
    %vm758 = vcmp.eq.f32.partialorder %v757, 8.507059e+37
    %v759 = vand.u32 %v747, 2147483648
    %v760 = vor.u32 1.1754944e-38, %v759
    %v761 = vsel %vm758, %v760, %v756
    %v762 = vmul.f32 1.0, %v761
    %764 = vrot.lane.b32.xlu0 %v742, 32
    %v765 = vpop.permute.xlu0 %764
    %v767 = vmul.f32 %v762, %v765
    %769 = vrot.lane.b32.xlu0 %v767, 64
    %v770 = vpop.permute.xlu0 %769
    %v772 = vadd.f32 %v742, %v770
    %v773 = vtanh.pop %v772
    %v774 = vsub.f32 1.0, %v762
    %776 = vrot.lane.b32.xlu0 %v773, 96
    %v777 = vpop.permute.xlu0 %776
    %v779 = vmul.f32 %v774, %v777
    %v780 = vmul.f32 %v762, %v465
    %v781 = vadd.f32 %v779, %v780
    %783 = vrot.lane.b32.xlu0 %v781, 96
    %v784 = vpop.permute.xlu0 %783
    %786 = vst.msk [vmem:[#allocation2 + $0x2] sm:$0x3] %vm470, %v784
    %v787 = vld [vmem:[%s5] sm:$0xff]
    %v788 = vld [vmem:[%s5 + $0x8] sm:$0xff]
    %v789 = vld [vmem:[%s5 + $0x10] sm:$0xff]
    %v790 = vld [vmem:[%s5 + $0x18] sm:$0xff]
    %v791 = vld [vmem:[%s6] sm:$0x1]
    %v793 = vperm.slane %v791, 0
    %v795 = vrot.slane %v544, 2
    %796 = vrot.lane.b32.xlu0 %v795, 96
    %v797 = vpop.permute.xlu0 %796
    %v798 = vsel %vm105, %v797, 0
    %800 = vmatpush.msra.mxu0 0.0
    %801 = vmatpush.msra.mxu0 0.0
    %802 = vmatpush.msra.mxu0 0.0
    %803 = vmatpush.msra.mxu0 0.0
    %804 = vmatpush.msra.mxu0 0.0
    %805 = vmatpush.msra.mxu0 0.0
    %806 = vmatpush.msra.mxu0 0.0
    %807 = vmatpush.msra.mxu0 0.0
    %808 = vmatpush.msra.mxu0 0.0
    %809 = vmatpush.msra.mxu0 0.0
    %810 = vmatpush.msra.mxu0 0.0
    %811 = vmatpush.msra.mxu0 0.0
    %812 = vmatpush.msra.mxu0 %v790
    %813 = vmatpush.msra.mxu0 %v789
    %814 = vmatpush.msra.mxu0 %v788
    %815 = vmatpush.msra.mxu0 %v787
    %816 = vmatmul.f32.gmra.mxu0 %v798
    %v817 = vpop.f32.mrf.mxu0
    %v818 = vadd.f32 %v793, %v817
    %819 = vdwg.mxu0
    %v821 = vrot.slane %v818, 4
    %v823 = vadd.f32 %v130, %v821
    %v824 = vxor.u32 %v823, 2147483648
    %v825 = vmul.f32 %v824, 1.442695
    %v826 = vpow.pop %v825
    %v827 = vadd.f32 %v826, 1.0
    %v828 = vrcp.pop %v827
    %v829 = vmul.f32 %v827, %v828
    %v830 = vsub.f32 1.0, %v829
    %v831 = vmul.f32 %v828, %v830
    %v832 = vadd.f32 %v828, %v831
    %vm833 = vweird.f32 %v827
    %vm834 = vweird.f32 %v828
    %vm835 = vmor %vm833, %vm834
    %v836 = vsel %vm835, %v828, %v832
    %v837 = vand.u32 2147483647, %v827
    %vm838 = vcmp.eq.f32.partialorder %v837, 8.507059e+37
    %v839 = vand.u32 %v827, 2147483648
    %v840 = vor.u32 1.1754944e-38, %v839
    %v841 = vsel %vm838, %v840, %v836
    %v842 = vmul.f32 1.0, %v841
    %843 = vrot.lane.b32.xlu0 %v821, 64
    %v844 = vpop.permute.xlu0 %843
    %v846 = vmul.f32 %v842, %v844
    %848 = vrot.lane.b32.xlu0 %v846, 64
    %v849 = vpop.permute.xlu0 %848
    %v851 = vadd.f32 %v130, %v849
    %v852 = vtanh.pop %v851
    %v853 = vsub.f32 1.0, %v842
    %855 = vrot.lane.b32.xlu0 %v852, 96
    %v856 = vpop.permute.xlu0 %855
    %v858 = vmul.f32 %v853, %v856
    %v859 = vrot.slane %v544, 6
    %v861 = vmul.f32 %v842, %v859
    %v862 = vadd.f32 %v858, %v861
    %864 = vrot.lane.b32.xlu0 %v862, 96
    %v865 = vpop.permute.xlu0 %864
    %v867 = vrot.slane %v625, 4
    %v869 = vsel %vm105, %v865, %v867
    %v870 = vld [vmem:[%s7] sm:$0xff]
    %v871 = vld [vmem:[%s7 + $0x8] sm:$0xff]
    %v872 = vld [vmem:[%s7 + $0x10] sm:$0xff]
    %v873 = vld [vmem:[%s7 + $0x18] sm:$0xff]
    %v874 = vld [vmem:[%s7 + $0x20] sm:$0xff]
    %v875 = vld [vmem:[%s7 + $0x28] sm:$0xff]
    %v876 = vld [vmem:[%s7 + $0x30] sm:$0xff]
    %v877 = vld [vmem:[%s7 + $0x38] sm:$0xff]
    %v878 = vld [vmem:[%s8] sm:$0x1]
    %v880 = vperm.slane %v878, 0
    %v883 = vrot.slane %v869, 4
    %v884 = vsel %vm236, %v883, 0
    %886 = vmatpush.msra.mxu0 0.0
    %887 = vmatpush.msra.mxu0 0.0
    %888 = vmatpush.msra.mxu0 0.0
    %889 = vmatpush.msra.mxu0 0.0
    %890 = vmatpush.msra.mxu0 0.0
    %891 = vmatpush.msra.mxu0 0.0
    %892 = vmatpush.msra.mxu0 0.0
    %893 = vmatpush.msra.mxu0 0.0
    %894 = vmatpush.msra.mxu0 %v877
    %895 = vmatpush.msra.mxu0 %v876
    %896 = vmatpush.msra.mxu0 %v875
    %897 = vmatpush.msra.mxu0 %v874
    %898 = vmatpush.msra.mxu0 %v873
    %899 = vmatpush.msra.mxu0 %v872
    %900 = vmatpush.msra.mxu0 %v871
    %901 = vmatpush.msra.mxu0 %v870
    %902 = vmatmul.f32.gmra.mxu0 %v884
    %v903 = vpop.f32.mrf.mxu0
    %v904 = vadd.f32 %v880, %v903
    %905 = vdwg.mxu0
    %v906 = vxor.u32 %v904, 2147483648
    %v907 = vmul.f32 %v906, 1.442695
    %v908 = vpow.pop %v907
    %v909 = vadd.f32 %v908, 1.0
    %v910 = vrcp.pop %v909
    %v911 = vmul.f32 %v909, %v910
    %v912 = vsub.f32 1.0, %v911
    %v913 = vmul.f32 %v910, %v912
    %v914 = vadd.f32 %v910, %v913
    %vm915 = vweird.f32 %v909
    %vm916 = vweird.f32 %v910
    %vm917 = vmor %vm915, %vm916
    %v918 = vsel %vm917, %v910, %v914
    %v919 = vand.u32 2147483647, %v909
    %vm920 = vcmp.eq.f32.partialorder %v919, 8.507059e+37
    %v921 = vand.u32 %v909, 2147483648
    %v922 = vor.u32 1.1754944e-38, %v921
    %v923 = vsel %vm920, %v922, %v918
    %v924 = vmul.f32 1.0, %v923
    %926 = vrot.lane.b32.xlu0 %v904, 32
    %v927 = vpop.permute.xlu0 %926
    %v929 = vmul.f32 %v924, %v927
    %931 = vrot.lane.b32.xlu0 %v929, 64
    %v932 = vpop.permute.xlu0 %931
    %v934 = vadd.f32 %v904, %v932
    %v935 = vtanh.pop %v934
    %v936 = vsub.f32 1.0, %v924
    %938 = vrot.lane.b32.xlu0 %v935, 96
    %v939 = vpop.permute.xlu0 %938
    %v941 = vmul.f32 %v936, %v939
    %v942 = vmul.f32 %v924, %v625
    %v943 = vadd.f32 %v941, %v942
    %945 = vrot.lane.b32.xlu0 %v943, 96
    %v946 = vpop.permute.xlu0 %945
    %v948 = vsel %vm105, %v946, %v703
    %v949 = vld [vmem:[%s307] sm:$0xff]
    %v950 = vld [vmem:[%s307 + $0x8] sm:$0xff]
    %v951 = vld [vmem:[%s307 + $0x10] sm:$0xff]
    %v952 = vld [vmem:[%s307 + $0x18] sm:$0xff]
    %v953 = vld [vmem:[%s307 + $0x20] sm:$0xff]
    %v954 = vld [vmem:[%s307 + $0x28] sm:$0xff]
    %v955 = vld [vmem:[%s307 + $0x30] sm:$0xff]
    %v956 = vld [vmem:[%s307 + $0x38] sm:$0xff]
    %v957 = vld [vmem:[%s316] sm:$0x1]
    %v959 = vperm.slane %v957, 0
    %v962 = vsel %vm236, %v948, 0
    %964 = vmatpush.msra.mxu0 0.0
    %965 = vmatpush.msra.mxu0 0.0
    %966 = vmatpush.msra.mxu0 0.0
    %967 = vmatpush.msra.mxu0 0.0
    %968 = vmatpush.msra.mxu0 0.0
    %969 = vmatpush.msra.mxu0 0.0
    %970 = vmatpush.msra.mxu0 0.0
    %971 = vmatpush.msra.mxu0 0.0
    %972 = vmatpush.msra.mxu0 %v956
    %973 = vmatpush.msra.mxu0 %v955
    %974 = vmatpush.msra.mxu0 %v954
    %975 = vmatpush.msra.mxu0 %v953
    %976 = vmatpush.msra.mxu0 %v952
    %977 = vmatpush.msra.mxu0 %v951
    %978 = vmatpush.msra.mxu0 %v950
    %979 = vmatpush.msra.mxu0 %v949
    %980 = vmatmul.f32.gmra.mxu0 %v962
    %v981 = vpop.f32.mrf.mxu0
    %v982 = vadd.f32 %v959, %v981
    %983 = vdwg.mxu0
    %v984 = vxor.u32 %v982, 2147483648
    %v985 = vmul.f32 %v984, 1.442695
    %v986 = vpow.pop %v985
    %v987 = vadd.f32 %v986, 1.0
    %v988 = vrcp.pop %v987
    %v989 = vmul.f32 %v987, %v988
    %v990 = vsub.f32 1.0, %v989
    %v991 = vmul.f32 %v988, %v990
    %v992 = vadd.f32 %v988, %v991
    %vm993 = vweird.f32 %v987
    %vm994 = vweird.f32 %v988
    %vm995 = vmor %vm993, %vm994
    %v996 = vsel %vm995, %v988, %v992
    %v997 = vand.u32 2147483647, %v987
    %vm998 = vcmp.eq.f32.partialorder %v997, 8.507059e+37
    %v999 = vand.u32 %v987, 2147483648
    %v1000 = vor.u32 1.1754944e-38, %v999
    %v1001 = vsel %vm998, %v1000, %v996
    %v1002 = vmul.f32 1.0, %v1001
    %1004 = vrot.lane.b32.xlu0 %v982, 32
    %v1005 = vpop.permute.xlu0 %1004
    %v1007 = vmul.f32 %v1002, %v1005
    %1009 = vrot.lane.b32.xlu0 %v1007, 64
    %v1010 = vpop.permute.xlu0 %1009
    %v1012 = vadd.f32 %v982, %v1010
    %v1013 = vtanh.pop %v1012
    %v1014 = vsub.f32 1.0, %v1002
    %1016 = vrot.lane.b32.xlu0 %v1013, 96
    %v1017 = vpop.permute.xlu0 %1016
    %v1019 = vmul.f32 %v1014, %v1017
    %v1020 = vmul.f32 %v1002, %v703
    %v1021 = vadd.f32 %v1019, %v1020
    %1023 = vrot.lane.b32.xlu0 %v1021, 96
    %v1024 = vpop.permute.xlu0 %1023
    %v1026 = vsel %vm105, %v1024, %v781
    %v1027 = vld [vmem:[%s391] sm:$0xff]
    %v1028 = vld [vmem:[%s391 + $0x8] sm:$0xff]
    %v1029 = vld [vmem:[%s391 + $0x10] sm:$0xff]
    %v1030 = vld [vmem:[%s391 + $0x18] sm:$0xff]
    %v1031 = vld [vmem:[%s391 + $0x20] sm:$0xff]
    %v1032 = vld [vmem:[%s391 + $0x28] sm:$0xff]
    %v1033 = vld [vmem:[%s391 + $0x30] sm:$0xff]
    %v1034 = vld [vmem:[%s391 + $0x38] sm:$0xff]
    %v1035 = vld [vmem:[%s400] sm:$0x1]
    %v1037 = vperm.slane %v1035, 0
    %v1040 = vsel %vm236, %v1026, 0
    %1042 = vmatpush.msra.mxu0 0.0
    %1043 = vmatpush.msra.mxu0 0.0
    %1044 = vmatpush.msra.mxu0 0.0
    %1045 = vmatpush.msra.mxu0 0.0
    %1046 = vmatpush.msra.mxu0 0.0
    %1047 = vmatpush.msra.mxu0 0.0
    %1048 = vmatpush.msra.mxu0 0.0
    %1049 = vmatpush.msra.mxu0 0.0
    %1050 = vmatpush.msra.mxu0 %v1034
    %1051 = vmatpush.msra.mxu0 %v1033
    %1052 = vmatpush.msra.mxu0 %v1032
    %1053 = vmatpush.msra.mxu0 %v1031
    %1054 = vmatpush.msra.mxu0 %v1030
    %1055 = vmatpush.msra.mxu0 %v1029
    %1056 = vmatpush.msra.mxu0 %v1028
    %1057 = vmatpush.msra.mxu0 %v1027
    %1058 = vmatmul.f32.gmra.mxu0 %v1040
    %v1059 = vpop.f32.mrf.mxu0
    %v1060 = vadd.f32 %v1037, %v1059
    %1061 = vdwg.mxu0
    %v1062 = vxor.u32 %v1060, 2147483648
    %v1063 = vmul.f32 %v1062, 1.442695
    %v1064 = vpow.pop %v1063
    %v1065 = vadd.f32 %v1064, 1.0
    %v1066 = vrcp.pop %v1065
    %v1067 = vmul.f32 %v1065, %v1066
    %v1068 = vsub.f32 1.0, %v1067
    %v1069 = vmul.f32 %v1066, %v1068
    %v1070 = vadd.f32 %v1066, %v1069
    %vm1071 = vweird.f32 %v1065
    %vm1072 = vweird.f32 %v1066
    %vm1073 = vmor %vm1071, %vm1072
    %v1074 = vsel %vm1073, %v1066, %v1070
    %v1075 = vand.u32 2147483647, %v1065
    %vm1076 = vcmp.eq.f32.partialorder %v1075, 8.507059e+37
    %v1077 = vand.u32 %v1065, 2147483648
    %v1078 = vor.u32 1.1754944e-38, %v1077
    %v1079 = vsel %vm1076, %v1078, %v1074
    %v1080 = vmul.f32 1.0, %v1079
    %1082 = vrot.lane.b32.xlu0 %v1060, 32
    %v1083 = vpop.permute.xlu0 %1082
    %v1085 = vmul.f32 %v1080, %v1083
    %1087 = vrot.lane.b32.xlu0 %v1085, 64
    %v1088 = vpop.permute.xlu0 %1087
    %v1090 = vadd.f32 %v1060, %v1088
    %v1091 = vtanh.pop %v1090
    %v1092 = vsub.f32 1.0, %v1080
    %1094 = vrot.lane.b32.xlu0 %v1091, 96
    %v1095 = vpop.permute.xlu0 %1094
    %v1097 = vmul.f32 %v1092, %v1095
    %v1098 = vmul.f32 %v1080, %v781
    %v1099 = vadd.f32 %v1097, %v1098
    %1101 = vrot.lane.b32.xlu0 %v1099, 96
    %v1102 = vpop.permute.xlu0 %1101
    %1104 = vst.msk [vmem:[#allocation2 + $0x4] sm:$0x3] %vm470, %v1102
    %v1105 = vld [vmem:[%s5] sm:$0xff]
    %v1106 = vld [vmem:[%s5 + $0x8] sm:$0xff]
    %v1107 = vld [vmem:[%s5 + $0x10] sm:$0xff]
    %v1108 = vld [vmem:[%s5 + $0x18] sm:$0xff]
    %v1109 = vld [vmem:[%s6] sm:$0x1]
    %v1111 = vperm.slane %v1109, 0
    %v1113 = vrot.slane %v862, 4
    %1114 = vrot.lane.b32.xlu0 %v1113, 96
    %v1115 = vpop.permute.xlu0 %1114
    %v1116 = vsel %vm105, %v1115, 0
    %1118 = vmatpush.msra.mxu0 0.0
    %1119 = vmatpush.msra.mxu0 0.0
    %1120 = vmatpush.msra.mxu0 0.0
    %1121 = vmatpush.msra.mxu0 0.0
    %1122 = vmatpush.msra.mxu0 0.0
    %1123 = vmatpush.msra.mxu0 0.0
    %1124 = vmatpush.msra.mxu0 0.0
    %1125 = vmatpush.msra.mxu0 0.0
    %1126 = vmatpush.msra.mxu0 0.0
    %1127 = vmatpush.msra.mxu0 0.0
    %1128 = vmatpush.msra.mxu0 0.0
    %1129 = vmatpush.msra.mxu0 0.0
    %1130 = vmatpush.msra.mxu0 %v1108
    %1131 = vmatpush.msra.mxu0 %v1107
    %1132 = vmatpush.msra.mxu0 %v1106
    %1133 = vmatpush.msra.mxu0 %v1105
    %1134 = vmatmul.f32.gmra.mxu0 %v1116
    %v1135 = vpop.f32.mrf.mxu0
    %v1136 = vadd.f32 %v1111, %v1135
    %1137 = vdwg.mxu0
    %v1139 = vrot.slane %v1136, 2
    %v1141 = vadd.f32 %v130, %v1139
    %v1142 = vxor.u32 %v1141, 2147483648
    %v1143 = vmul.f32 %v1142, 1.442695
    %v1144 = vpow.pop %v1143
    %v1145 = vadd.f32 %v1144, 1.0
    %v1146 = vrcp.pop %v1145
    %v1147 = vmul.f32 %v1145, %v1146
    %v1148 = vsub.f32 1.0, %v1147
    %v1149 = vmul.f32 %v1146, %v1148
    %v1150 = vadd.f32 %v1146, %v1149
    %vm1151 = vweird.f32 %v1145
    %vm1152 = vweird.f32 %v1146
    %vm1153 = vmor %vm1151, %vm1152
    %v1154 = vsel %vm1153, %v1146, %v1150
    %v1155 = vand.u32 2147483647, %v1145
    %vm1156 = vcmp.eq.f32.partialorder %v1155, 8.507059e+37
    %v1157 = vand.u32 %v1145, 2147483648
    %v1158 = vor.u32 1.1754944e-38, %v1157
    %v1159 = vsel %vm1156, %v1158, %v1154
    %v1160 = vmul.f32 1.0, %v1159
    %1161 = vrot.lane.b32.xlu0 %v1139, 64
    %v1162 = vpop.permute.xlu0 %1161
    %v1164 = vmul.f32 %v1160, %v1162
    %1166 = vrot.lane.b32.xlu0 %v1164, 64
    %v1167 = vpop.permute.xlu0 %1166
    %v1169 = vadd.f32 %v130, %v1167
    %v1170 = vtanh.pop %v1169
    %v1171 = vsub.f32 1.0, %v1160
    %1173 = vrot.lane.b32.xlu0 %v1170, 96
    %v1174 = vpop.permute.xlu0 %1173
    %v1176 = vmul.f32 %v1171, %v1174
    %v1177 = vrot.slane %v862, 6
    %v1179 = vmul.f32 %v1160, %v1177
    %v1180 = vadd.f32 %v1176, %v1179
    %1182 = vrot.lane.b32.xlu0 %v1180, 96
    %v1183 = vpop.permute.xlu0 %1182
    %v1185 = vrot.slane %v943, 2
    %v1187 = vsel %vm105, %v1183, %v1185
    %v1188 = vld [vmem:[%s7] sm:$0xff]
    %v1189 = vld [vmem:[%s7 + $0x8] sm:$0xff]
    %v1190 = vld [vmem:[%s7 + $0x10] sm:$0xff]
    %v1191 = vld [vmem:[%s7 + $0x18] sm:$0xff]
    %v1192 = vld [vmem:[%s7 + $0x20] sm:$0xff]
    %v1193 = vld [vmem:[%s7 + $0x28] sm:$0xff]
    %v1194 = vld [vmem:[%s7 + $0x30] sm:$0xff]
    %v1195 = vld [vmem:[%s7 + $0x38] sm:$0xff]
    %v1196 = vld [vmem:[%s8] sm:$0x1]
    %v1198 = vperm.slane %v1196, 0
    %v1201 = vrot.slane %v1187, 6
    %v1202 = vsel %vm236, %v1201, 0
    %1204 = vmatpush.msra.mxu0 0.0
    %1205 = vmatpush.msra.mxu0 0.0
    %1206 = vmatpush.msra.mxu0 0.0
    %1207 = vmatpush.msra.mxu0 0.0
    %1208 = vmatpush.msra.mxu0 0.0
    %1209 = vmatpush.msra.mxu0 0.0
    %1210 = vmatpush.msra.mxu0 0.0
    %1211 = vmatpush.msra.mxu0 0.0
    %1212 = vmatpush.msra.mxu0 %v1195
    %1213 = vmatpush.msra.mxu0 %v1194
    %1214 = vmatpush.msra.mxu0 %v1193
    %1215 = vmatpush.msra.mxu0 %v1192
    %1216 = vmatpush.msra.mxu0 %v1191
    %1217 = vmatpush.msra.mxu0 %v1190
    %1218 = vmatpush.msra.mxu0 %v1189
    %1219 = vmatpush.msra.mxu0 %v1188
    %1220 = vmatmul.f32.gmra.mxu0 %v1202
    %v1221 = vpop.f32.mrf.mxu0
    %v1222 = vadd.f32 %v1198, %v1221
    %1223 = vdwg.mxu0
    %v1224 = vxor.u32 %v1222, 2147483648
    %v1225 = vmul.f32 %v1224, 1.442695
    %v1226 = vpow.pop %v1225
    %v1227 = vadd.f32 %v1226, 1.0
    %v1228 = vrcp.pop %v1227
    %v1229 = vmul.f32 %v1227, %v1228
    %v1230 = vsub.f32 1.0, %v1229
    %v1231 = vmul.f32 %v1228, %v1230
    %v1232 = vadd.f32 %v1228, %v1231
    %vm1233 = vweird.f32 %v1227
    %vm1234 = vweird.f32 %v1228
    %vm1235 = vmor %vm1233, %vm1234
    %v1236 = vsel %vm1235, %v1228, %v1232
    %v1237 = vand.u32 2147483647, %v1227
    %vm1238 = vcmp.eq.f32.partialorder %v1237, 8.507059e+37
    %v1239 = vand.u32 %v1227, 2147483648
    %v1240 = vor.u32 1.1754944e-38, %v1239
    %v1241 = vsel %vm1238, %v1240, %v1236
    %v1242 = vmul.f32 1.0, %v1241
    %1244 = vrot.lane.b32.xlu0 %v1222, 32
    %v1245 = vpop.permute.xlu0 %1244
    %v1247 = vmul.f32 %v1242, %v1245
    %1249 = vrot.lane.b32.xlu0 %v1247, 64
    %v1250 = vpop.permute.xlu0 %1249
    %v1252 = vadd.f32 %v1222, %v1250
    %v1253 = vtanh.pop %v1252
    %v1254 = vsub.f32 1.0, %v1242
    %1256 = vrot.lane.b32.xlu0 %v1253, 96
    %v1257 = vpop.permute.xlu0 %1256
    %v1259 = vmul.f32 %v1254, %v1257
    %v1260 = vmul.f32 %v1242, %v943
    %v1261 = vadd.f32 %v1259, %v1260
    %1263 = vrot.lane.b32.xlu0 %v1261, 96
    %v1264 = vpop.permute.xlu0 %1263
    %v1266 = vsel %vm105, %v1264, %v1021
    %v1267 = vld [vmem:[%s307] sm:$0xff]
    %v1268 = vld [vmem:[%s307 + $0x8] sm:$0xff]
    %v1269 = vld [vmem:[%s307 + $0x10] sm:$0xff]
    %v1270 = vld [vmem:[%s307 + $0x18] sm:$0xff]
    %v1271 = vld [vmem:[%s307 + $0x20] sm:$0xff]
    %v1272 = vld [vmem:[%s307 + $0x28] sm:$0xff]
    %v1273 = vld [vmem:[%s307 + $0x30] sm:$0xff]
    %v1274 = vld [vmem:[%s307 + $0x38] sm:$0xff]
    %v1275 = vld [vmem:[%s316] sm:$0x1]
    %v1277 = vperm.slane %v1275, 0
    %v1280 = vsel %vm236, %v1266, 0
    %1282 = vmatpush.msra.mxu0 0.0
    %1283 = vmatpush.msra.mxu0 0.0
    %1284 = vmatpush.msra.mxu0 0.0
    %1285 = vmatpush.msra.mxu0 0.0
    %1286 = vmatpush.msra.mxu0 0.0
    %1287 = vmatpush.msra.mxu0 0.0
    %1288 = vmatpush.msra.mxu0 0.0
    %1289 = vmatpush.msra.mxu0 0.0
    %1290 = vmatpush.msra.mxu0 %v1274
    %1291 = vmatpush.msra.mxu0 %v1273
    %1292 = vmatpush.msra.mxu0 %v1272
    %1293 = vmatpush.msra.mxu0 %v1271
    %1294 = vmatpush.msra.mxu0 %v1270
    %1295 = vmatpush.msra.mxu0 %v1269
    %1296 = vmatpush.msra.mxu0 %v1268
    %1297 = vmatpush.msra.mxu0 %v1267
    %1298 = vmatmul.f32.gmra.mxu0 %v1280
    %v1299 = vpop.f32.mrf.mxu0
    %v1300 = vadd.f32 %v1277, %v1299
    %1301 = vdwg.mxu0
    %v1302 = vxor.u32 %v1300, 2147483648
    %v1303 = vmul.f32 %v1302, 1.442695
    %v1304 = vpow.pop %v1303
    %v1305 = vadd.f32 %v1304, 1.0
    %v1306 = vrcp.pop %v1305
    %v1307 = vmul.f32 %v1305, %v1306
    %v1308 = vsub.f32 1.0, %v1307
    %v1309 = vmul.f32 %v1306, %v1308
    %v1310 = vadd.f32 %v1306, %v1309
    %vm1311 = vweird.f32 %v1305
    %vm1312 = vweird.f32 %v1306
    %vm1313 = vmor %vm1311, %vm1312
    %v1314 = vsel %vm1313, %v1306, %v1310
    %v1315 = vand.u32 2147483647, %v1305
    %vm1316 = vcmp.eq.f32.partialorder %v1315, 8.507059e+37
    %v1317 = vand.u32 %v1305, 2147483648
    %v1318 = vor.u32 1.1754944e-38, %v1317
    %v1319 = vsel %vm1316, %v1318, %v1314
    %v1320 = vmul.f32 1.0, %v1319
    %1322 = vrot.lane.b32.xlu0 %v1300, 32
    %v1323 = vpop.permute.xlu0 %1322
    %v1325 = vmul.f32 %v1320, %v1323
    %1327 = vrot.lane.b32.xlu0 %v1325, 64
    %v1328 = vpop.permute.xlu0 %1327
    %v1330 = vadd.f32 %v1300, %v1328
    %v1331 = vtanh.pop %v1330
    %v1332 = vsub.f32 1.0, %v1320
    %1334 = vrot.lane.b32.xlu0 %v1331, 96
    %v1335 = vpop.permute.xlu0 %1334
    %v1337 = vmul.f32 %v1332, %v1335
    %v1338 = vmul.f32 %v1320, %v1021
    %v1339 = vadd.f32 %v1337, %v1338
    %1341 = vrot.lane.b32.xlu0 %v1339, 96
    %v1342 = vpop.permute.xlu0 %1341
    %v1344 = vsel %vm105, %v1342, %v1099
    %v1345 = vld [vmem:[%s391] sm:$0xff]
    %v1346 = vld [vmem:[%s391 + $0x8] sm:$0xff]
    %v1347 = vld [vmem:[%s391 + $0x10] sm:$0xff]
    %v1348 = vld [vmem:[%s391 + $0x18] sm:$0xff]
    %v1349 = vld [vmem:[%s391 + $0x20] sm:$0xff]
    %v1350 = vld [vmem:[%s391 + $0x28] sm:$0xff]
    %v1351 = vld [vmem:[%s391 + $0x30] sm:$0xff]
    %v1352 = vld [vmem:[%s391 + $0x38] sm:$0xff]
    %v1353 = vld [vmem:[%s400] sm:$0x1]
    %v1355 = vperm.slane %v1353, 0
    %v1358 = vsel %vm236, %v1344, 0
    %1360 = vmatpush.msra.mxu0 0.0
    %1361 = vmatpush.msra.mxu0 0.0
    %1362 = vmatpush.msra.mxu0 0.0
    %1363 = vmatpush.msra.mxu0 0.0
    %1364 = vmatpush.msra.mxu0 0.0
    %1365 = vmatpush.msra.mxu0 0.0
    %1366 = vmatpush.msra.mxu0 0.0
    %1367 = vmatpush.msra.mxu0 0.0
    %1368 = vmatpush.msra.mxu0 %v1352
    %1369 = vmatpush.msra.mxu0 %v1351
    %1370 = vmatpush.msra.mxu0 %v1350
    %1371 = vmatpush.msra.mxu0 %v1349
    %1372 = vmatpush.msra.mxu0 %v1348
    %1373 = vmatpush.msra.mxu0 %v1347
    %1374 = vmatpush.msra.mxu0 %v1346
    %1375 = vmatpush.msra.mxu0 %v1345
    %1376 = vmatmul.f32.gmra.mxu0 %v1358
    %v1377 = vpop.f32.mrf.mxu0
    %v1378 = vadd.f32 %v1355, %v1377
    %1379 = vdwg.mxu0
    %v1380 = vxor.u32 %v1378, 2147483648
    %v1381 = vmul.f32 %v1380, 1.442695
    %v1382 = vpow.pop %v1381
    %v1383 = vadd.f32 %v1382, 1.0
    %v1384 = vrcp.pop %v1383
    %v1385 = vmul.f32 %v1383, %v1384
    %v1386 = vsub.f32 1.0, %v1385
    %v1387 = vmul.f32 %v1384, %v1386
    %v1388 = vadd.f32 %v1384, %v1387
    %vm1389 = vweird.f32 %v1383
    %vm1390 = vweird.f32 %v1384
    %vm1391 = vmor %vm1389, %vm1390
    %v1392 = vsel %vm1391, %v1384, %v1388
    %v1393 = vand.u32 2147483647, %v1383
    %vm1394 = vcmp.eq.f32.partialorder %v1393, 8.507059e+37
    %v1395 = vand.u32 %v1383, 2147483648
    %v1396 = vor.u32 1.1754944e-38, %v1395
    %v1397 = vsel %vm1394, %v1396, %v1392
    %v1398 = vmul.f32 1.0, %v1397
    %1400 = vrot.lane.b32.xlu0 %v1378, 32
    %v1401 = vpop.permute.xlu0 %1400
    %v1403 = vmul.f32 %v1398, %v1401
    %1405 = vrot.lane.b32.xlu0 %v1403, 64
    %v1406 = vpop.permute.xlu0 %1405
    %v1408 = vadd.f32 %v1378, %v1406
    %v1409 = vtanh.pop %v1408
    %v1410 = vsub.f32 1.0, %v1398
    %1412 = vrot.lane.b32.xlu0 %v1409, 96
    %v1413 = vpop.permute.xlu0 %1412
    %v1415 = vmul.f32 %v1410, %v1413
    %v1416 = vmul.f32 %v1398, %v1099
    %v1417 = vadd.f32 %v1415, %v1416
    %1419 = vrot.lane.b32.xlu0 %v1417, 96
    %v1420 = vpop.permute.xlu0 %1419
    %1422 = vst.msk [vmem:[#allocation2 + $0x6] sm:$0x3] %vm470, %v1420
    %v1423 = vld [vmem:[%s5] sm:$0xff]
    %v1424 = vld [vmem:[%s5 + $0x8] sm:$0xff]
    %v1425 = vld [vmem:[%s5 + $0x10] sm:$0xff]
    %v1426 = vld [vmem:[%s5 + $0x18] sm:$0xff]
    %v1427 = vld [vmem:[%s6] sm:$0x1]
    %v1429 = vperm.slane %v1427, 0
    %v1431 = vrot.slane %v1180, 6
    %1432 = vrot.lane.b32.xlu0 %v1431, 96
    %v1433 = vpop.permute.xlu0 %1432
    %v1434 = vsel %vm105, %v1433, 0
    %1436 = vmatpush.msra.mxu0 0.0
    %1437 = vmatpush.msra.mxu0 0.0
    %1438 = vmatpush.msra.mxu0 0.0
    %1439 = vmatpush.msra.mxu0 0.0
    %1440 = vmatpush.msra.mxu0 0.0
    %1441 = vmatpush.msra.mxu0 0.0
    %1442 = vmatpush.msra.mxu0 0.0
    %1443 = vmatpush.msra.mxu0 0.0
    %1444 = vmatpush.msra.mxu0 0.0
    %1445 = vmatpush.msra.mxu0 0.0
    %1446 = vmatpush.msra.mxu0 0.0
    %1447 = vmatpush.msra.mxu0 0.0
    %1448 = vmatpush.msra.mxu0 %v1426
    %1449 = vmatpush.msra.mxu0 %v1425
    %1450 = vmatpush.msra.mxu0 %v1424
    %1451 = vmatpush.msra.mxu0 %v1423
    %1452 = vmatmul.f32.gmra.mxu0 %v1434
    %v1453 = vpop.f32.mrf.mxu0
    %v1454 = vadd.f32 %v1429, %v1453
    %1455 = vdwg.mxu0
    %v1456 = vadd.f32 %v133, %v1454
    %v1457 = vxor.u32 %v1456, 2147483648
    %v1458 = vmul.f32 %v1457, 1.442695
    %v1459 = vpow.pop %v1458
    %v1460 = vadd.f32 %v1459, 1.0
    %v1461 = vrcp.pop %v1460
    %v1462 = vmul.f32 %v1460, %v1461
    %v1463 = vsub.f32 1.0, %v1462
    %v1464 = vmul.f32 %v1461, %v1463
    %v1465 = vadd.f32 %v1461, %v1464
    %vm1466 = vweird.f32 %v1460
    %vm1467 = vweird.f32 %v1461
    %vm1468 = vmor %vm1466, %vm1467
    %v1469 = vsel %vm1468, %v1461, %v1465
    %v1470 = vand.u32 2147483647, %v1460
    %vm1471 = vcmp.eq.f32.partialorder %v1470, 8.507059e+37
    %v1472 = vand.u32 %v1460, 2147483648
    %v1473 = vor.u32 1.1754944e-38, %v1472
    %v1474 = vsel %vm1471, %v1473, %v1469
    %v1475 = vmul.f32 1.0, %v1474
    %1477 = vrot.lane.b32.xlu0 %v1454, 64
    %v1478 = vpop.permute.xlu0 %1477
    %v1480 = vmul.f32 %v1475, %v1478
    %1482 = vrot.lane.b32.xlu0 %v1480, 64
    %v1483 = vpop.permute.xlu0 %1482
    %v1485 = vadd.f32 %v133, %v1483
    %v1486 = vtanh.pop %v1485
    %v1487 = vsub.f32 1.0, %v1475
    %1489 = vrot.lane.b32.xlu0 %v1486, 96
    %v1490 = vpop.permute.xlu0 %1489
    %v1492 = vmul.f32 %v1487, %v1490
    %v1494 = vmul.f32 %v1475, %v1431
    %v1495 = vadd.f32 %v1492, %v1494
    %1497 = vrot.lane.b32.xlu0 %v1495, 96
    %v1498 = vpop.permute.xlu0 %1497
    %v1500 = vsel %vm105, %v1498, %v1261
    %v1501 = vld [vmem:[%s7] sm:$0xff]
    %v1502 = vld [vmem:[%s7 + $0x8] sm:$0xff]
    %v1503 = vld [vmem:[%s7 + $0x10] sm:$0xff]
    %v1504 = vld [vmem:[%s7 + $0x18] sm:$0xff]
    %v1505 = vld [vmem:[%s7 + $0x20] sm:$0xff]
    %v1506 = vld [vmem:[%s7 + $0x28] sm:$0xff]
    %v1507 = vld [vmem:[%s7 + $0x30] sm:$0xff]
    %v1508 = vld [vmem:[%s7 + $0x38] sm:$0xff]
    %v1509 = vld [vmem:[%s8] sm:$0x1]
    %v1511 = vperm.slane %v1509, 0
    %v1514 = vsel %vm236, %v1500, 0
    %1516 = vmatpush.msra.mxu0 0.0
    %1517 = vmatpush.msra.mxu0 0.0
    %1518 = vmatpush.msra.mxu0 0.0
    %1519 = vmatpush.msra.mxu0 0.0
    %1520 = vmatpush.msra.mxu0 0.0
    %1521 = vmatpush.msra.mxu0 0.0
    %1522 = vmatpush.msra.mxu0 0.0
    %1523 = vmatpush.msra.mxu0 0.0
    %1524 = vmatpush.msra.mxu0 %v1508
    %1525 = vmatpush.msra.mxu0 %v1507
    %1526 = vmatpush.msra.mxu0 %v1506
    %1527 = vmatpush.msra.mxu0 %v1505
    %1528 = vmatpush.msra.mxu0 %v1504
    %1529 = vmatpush.msra.mxu0 %v1503
    %1530 = vmatpush.msra.mxu0 %v1502
    %1531 = vmatpush.msra.mxu0 %v1501
    %1532 = vmatmul.f32.gmra.mxu0 %v1514
    %v1533 = vpop.f32.mrf.mxu0
    %v1534 = vadd.f32 %v1511, %v1533
    %1535 = vdwg.mxu0
    %v1536 = vxor.u32 %v1534, 2147483648
    %v1537 = vmul.f32 %v1536, 1.442695
    %v1538 = vpow.pop %v1537
    %v1539 = vadd.f32 %v1538, 1.0
    %v1540 = vrcp.pop %v1539
    %v1541 = vmul.f32 %v1539, %v1540
    %v1542 = vsub.f32 1.0, %v1541
    %v1543 = vmul.f32 %v1540, %v1542
    %v1544 = vadd.f32 %v1540, %v1543
    %vm1545 = vweird.f32 %v1539
    %vm1546 = vweird.f32 %v1540
    %vm1547 = vmor %vm1545, %vm1546
    %v1548 = vsel %vm1547, %v1540, %v1544
    %v1549 = vand.u32 2147483647, %v1539
    %vm1550 = vcmp.eq.f32.partialorder %v1549, 8.507059e+37
    %v1551 = vand.u32 %v1539, 2147483648
    %v1552 = vor.u32 1.1754944e-38, %v1551
    %v1553 = vsel %vm1550, %v1552, %v1548
    %v1554 = vmul.f32 1.0, %v1553
    %1556 = vrot.lane.b32.xlu0 %v1534, 32
    %v1557 = vpop.permute.xlu0 %1556
    %v1559 = vmul.f32 %v1554, %v1557
    %1561 = vrot.lane.b32.xlu0 %v1559, 64
    %v1562 = vpop.permute.xlu0 %1561
    %v1564 = vadd.f32 %v1534, %v1562
    %v1565 = vtanh.pop %v1564
    %v1566 = vsub.f32 1.0, %v1554
    %1568 = vrot.lane.b32.xlu0 %v1565, 96
    %v1569 = vpop.permute.xlu0 %1568
    %v1571 = vmul.f32 %v1566, %v1569
    %v1572 = vmul.f32 %v1554, %v1261
    %v1573 = vadd.f32 %v1571, %v1572
    %1575 = vrot.lane.b32.xlu0 %v1573, 96
    %v1576 = vpop.permute.xlu0 %1575
    %v1578 = vsel %vm105, %v1576, %v1339
    %v1579 = vld [vmem:[%s307] sm:$0xff]
    %v1580 = vld [vmem:[%s307 + $0x8] sm:$0xff]
    %v1581 = vld [vmem:[%s307 + $0x10] sm:$0xff]
    %v1582 = vld [vmem:[%s307 + $0x18] sm:$0xff]
    %v1583 = vld [vmem:[%s307 + $0x20] sm:$0xff]
    %v1584 = vld [vmem:[%s307 + $0x28] sm:$0xff]
    %v1585 = vld [vmem:[%s307 + $0x30] sm:$0xff]
    %v1586 = vld [vmem:[%s307 + $0x38] sm:$0xff]
    %v1587 = vld [vmem:[%s316] sm:$0x1]
    %v1589 = vperm.slane %v1587, 0
    %v1592 = vsel %vm236, %v1578, 0
    %1594 = vmatpush.msra.mxu0 0.0
    %1595 = vmatpush.msra.mxu0 0.0
    %1596 = vmatpush.msra.mxu0 0.0
    %1597 = vmatpush.msra.mxu0 0.0
    %1598 = vmatpush.msra.mxu0 0.0
    %1599 = vmatpush.msra.mxu0 0.0
    %1600 = vmatpush.msra.mxu0 0.0
    %1601 = vmatpush.msra.mxu0 0.0
    %1602 = vmatpush.msra.mxu0 %v1586
    %1603 = vmatpush.msra.mxu0 %v1585
    %1604 = vmatpush.msra.mxu0 %v1584
    %1605 = vmatpush.msra.mxu0 %v1583
    %1606 = vmatpush.msra.mxu0 %v1582
    %1607 = vmatpush.msra.mxu0 %v1581
    %1608 = vmatpush.msra.mxu0 %v1580
    %1609 = vmatpush.msra.mxu0 %v1579
    %1610 = vmatmul.f32.gmra.mxu0 %v1592
    %v1611 = vpop.f32.mrf.mxu0
    %v1612 = vadd.f32 %v1589, %v1611
    %1613 = vdwg.mxu0
    %v1614 = vxor.u32 %v1612, 2147483648
    %v1615 = vmul.f32 %v1614, 1.442695
    %v1616 = vpow.pop %v1615
    %v1617 = vadd.f32 %v1616, 1.0
    %v1618 = vrcp.pop %v1617
    %v1619 = vmul.f32 %v1617, %v1618
    %v1620 = vsub.f32 1.0, %v1619
    %v1621 = vmul.f32 %v1618, %v1620
    %v1622 = vadd.f32 %v1618, %v1621
    %vm1623 = vweird.f32 %v1617
    %vm1624 = vweird.f32 %v1618
    %vm1625 = vmor %vm1623, %vm1624
    %v1626 = vsel %vm1625, %v1618, %v1622
    %v1627 = vand.u32 2147483647, %v1617
    %vm1628 = vcmp.eq.f32.partialorder %v1627, 8.507059e+37
    %v1629 = vand.u32 %v1617, 2147483648
    %v1630 = vor.u32 1.1754944e-38, %v1629
    %v1631 = vsel %vm1628, %v1630, %v1626
    %v1632 = vmul.f32 1.0, %v1631
    %1634 = vrot.lane.b32.xlu0 %v1612, 32
    %v1635 = vpop.permute.xlu0 %1634
    %v1637 = vmul.f32 %v1632, %v1635
    %1639 = vrot.lane.b32.xlu0 %v1637, 64
    %v1640 = vpop.permute.xlu0 %1639
    %v1642 = vadd.f32 %v1612, %v1640
    %v1643 = vtanh.pop %v1642
    %v1644 = vsub.f32 1.0, %v1632
    %1646 = vrot.lane.b32.xlu0 %v1643, 96
    %v1647 = vpop.permute.xlu0 %1646
    %v1649 = vmul.f32 %v1644, %v1647
    %v1650 = vmul.f32 %v1632, %v1339
    %v1651 = vadd.f32 %v1649, %v1650
    %1653 = vrot.lane.b32.xlu0 %v1651, 96
    %v1654 = vpop.permute.xlu0 %1653
    %v1656 = vsel %vm105, %v1654, %v1417
    %v1657 = vld [vmem:[%s391] sm:$0xff]
    %v1658 = vld [vmem:[%s391 + $0x8] sm:$0xff]
    %v1659 = vld [vmem:[%s391 + $0x10] sm:$0xff]
    %v1660 = vld [vmem:[%s391 + $0x18] sm:$0xff]
    %v1661 = vld [vmem:[%s391 + $0x20] sm:$0xff]
    %v1662 = vld [vmem:[%s391 + $0x28] sm:$0xff]
    %v1663 = vld [vmem:[%s391 + $0x30] sm:$0xff]
    %v1664 = vld [vmem:[%s391 + $0x38] sm:$0xff]
    %v1665 = vld [vmem:[%s400] sm:$0x1]
    %v1667 = vperm.slane %v1665, 0
    %v1670 = vsel %vm236, %v1656, 0
    %1672 = vmatpush.msra.mxu0 0.0
    %1673 = vmatpush.msra.mxu0 0.0
    %1674 = vmatpush.msra.mxu0 0.0
    %1675 = vmatpush.msra.mxu0 0.0
    %1676 = vmatpush.msra.mxu0 0.0
    %1677 = vmatpush.msra.mxu0 0.0
    %1678 = vmatpush.msra.mxu0 0.0
    %1679 = vmatpush.msra.mxu0 0.0
    %1680 = vmatpush.msra.mxu0 %v1664
    %1681 = vmatpush.msra.mxu0 %v1663
    %1682 = vmatpush.msra.mxu0 %v1662
    %1683 = vmatpush.msra.mxu0 %v1661
    %1684 = vmatpush.msra.mxu0 %v1660
    %1685 = vmatpush.msra.mxu0 %v1659
    %1686 = vmatpush.msra.mxu0 %v1658
    %1687 = vmatpush.msra.mxu0 %v1657
    %1688 = vmatmul.f32.gmra.mxu0 %v1670
    %v1689 = vpop.f32.mrf.mxu0
    %v1690 = vadd.f32 %v1667, %v1689
    %1691 = vdwg.mxu0
    %v1692 = vxor.u32 %v1690, 2147483648
    %v1693 = vmul.f32 %v1692, 1.442695
    %v1694 = vpow.pop %v1693
    %v1695 = vadd.f32 %v1694, 1.0
    %v1696 = vrcp.pop %v1695
    %v1697 = vmul.f32 %v1695, %v1696
    %v1698 = vsub.f32 1.0, %v1697
    %v1699 = vmul.f32 %v1696, %v1698
    %v1700 = vadd.f32 %v1696, %v1699
    %vm1701 = vweird.f32 %v1695
    %vm1702 = vweird.f32 %v1696
    %vm1703 = vmor %vm1701, %vm1702
    %v1704 = vsel %vm1703, %v1696, %v1700
    %v1705 = vand.u32 2147483647, %v1695
    %vm1706 = vcmp.eq.f32.partialorder %v1705, 8.507059e+37
    %v1707 = vand.u32 %v1695, 2147483648
    %v1708 = vor.u32 1.1754944e-38, %v1707
    %v1709 = vsel %vm1706, %v1708, %v1704
    %v1710 = vmul.f32 1.0, %v1709
    %1712 = vrot.lane.b32.xlu0 %v1690, 32
    %v1713 = vpop.permute.xlu0 %1712
    %v1715 = vmul.f32 %v1710, %v1713
    %1717 = vrot.lane.b32.xlu0 %v1715, 64
    %v1718 = vpop.permute.xlu0 %1717
    %v1720 = vadd.f32 %v1690, %v1718
    %v1721 = vtanh.pop %v1720
    %v1722 = vsub.f32 1.0, %v1710
    %1724 = vrot.lane.b32.xlu0 %v1721, 96
    %v1725 = vpop.permute.xlu0 %1724
    %v1727 = vmul.f32 %v1722, %v1725
    %v1728 = vmul.f32 %v1710, %v1417
    %v1729 = vadd.f32 %v1727, %v1728
    %1731 = vrot.lane.b32.xlu0 %v1729, 96
    %v1732 = vpop.permute.xlu0 %1731
    %1734 = vst.msk [vmem:[#allocation2 + $0x8] sm:$0x3] %vm470, %v1732
    %v1735 = vld [vmem:[%s5] sm:$0xff]
    %v1736 = vld [vmem:[%s5 + $0x8] sm:$0xff]
    %v1737 = vld [vmem:[%s5 + $0x10] sm:$0xff]
    %v1738 = vld [vmem:[%s5 + $0x18] sm:$0xff]
    %v1739 = vld [vmem:[%s6] sm:$0x1]
    %v1741 = vperm.slane %v1739, 0
    %v1743 = vsel %vm105, %v1498, 0
    %1745 = vmatpush.msra.mxu0 0.0
    %1746 = vmatpush.msra.mxu0 0.0
    %1747 = vmatpush.msra.mxu0 0.0
    %1748 = vmatpush.msra.mxu0 0.0
    %1749 = vmatpush.msra.mxu0 0.0
    %1750 = vmatpush.msra.mxu0 0.0
    %1751 = vmatpush.msra.mxu0 0.0
    %1752 = vmatpush.msra.mxu0 0.0
    %1753 = vmatpush.msra.mxu0 0.0
    %1754 = vmatpush.msra.mxu0 0.0
    %1755 = vmatpush.msra.mxu0 0.0
    %1756 = vmatpush.msra.mxu0 0.0
    %1757 = vmatpush.msra.mxu0 %v1738
    %1758 = vmatpush.msra.mxu0 %v1737
    %1759 = vmatpush.msra.mxu0 %v1736
    %1760 = vmatpush.msra.mxu0 %v1735
    %1761 = vmatmul.f32.gmra.mxu0 %v1743
    %v1762 = vpop.f32.mrf.mxu0
    %v1763 = vadd.f32 %v1741, %v1762
    %1764 = vdwg.mxu0
    %v1766 = vrot.slane %v1763, 6
    %v1768 = vadd.f32 %v133, %v1766
    %v1769 = vxor.u32 %v1768, 2147483648
    %v1770 = vmul.f32 %v1769, 1.442695
    %v1771 = vpow.pop %v1770
    %v1772 = vadd.f32 %v1771, 1.0
    %v1773 = vrcp.pop %v1772
    %v1774 = vmul.f32 %v1772, %v1773
    %v1775 = vsub.f32 1.0, %v1774
    %v1776 = vmul.f32 %v1773, %v1775
    %v1777 = vadd.f32 %v1773, %v1776
    %vm1778 = vweird.f32 %v1772
    %vm1779 = vweird.f32 %v1773
    %vm1780 = vmor %vm1778, %vm1779
    %v1781 = vsel %vm1780, %v1773, %v1777
    %v1782 = vand.u32 2147483647, %v1772
    %vm1783 = vcmp.eq.f32.partialorder %v1782, 8.507059e+37
    %v1784 = vand.u32 %v1772, 2147483648
    %v1785 = vor.u32 1.1754944e-38, %v1784
    %v1786 = vsel %vm1783, %v1785, %v1781
    %v1787 = vmul.f32 1.0, %v1786
    %1788 = vrot.lane.b32.xlu0 %v1766, 64
    %v1789 = vpop.permute.xlu0 %1788
    %v1791 = vmul.f32 %v1787, %v1789
    %1793 = vrot.lane.b32.xlu0 %v1791, 64
    %v1794 = vpop.permute.xlu0 %1793
    %v1796 = vadd.f32 %v133, %v1794
    %v1797 = vtanh.pop %v1796
    %v1798 = vsub.f32 1.0, %v1787
    %1800 = vrot.lane.b32.xlu0 %v1797, 96
    %v1801 = vpop.permute.xlu0 %1800
    %v1803 = vmul.f32 %v1798, %v1801
    %v1804 = vrot.slane %v1495, 6
    %v1806 = vmul.f32 %v1787, %v1804
    %v1807 = vadd.f32 %v1803, %v1806
    %1809 = vrot.lane.b32.xlu0 %v1807, 96
    %v1810 = vpop.permute.xlu0 %1809
    %v1812 = vrot.slane %v1573, 6
    %v1814 = vsel %vm105, %v1810, %v1812
    %v1815 = vld [vmem:[%s7] sm:$0xff]
    %v1816 = vld [vmem:[%s7 + $0x8] sm:$0xff]
    %v1817 = vld [vmem:[%s7 + $0x10] sm:$0xff]
    %v1818 = vld [vmem:[%s7 + $0x18] sm:$0xff]
    %v1819 = vld [vmem:[%s7 + $0x20] sm:$0xff]
    %v1820 = vld [vmem:[%s7 + $0x28] sm:$0xff]
    %v1821 = vld [vmem:[%s7 + $0x30] sm:$0xff]
    %v1822 = vld [vmem:[%s7 + $0x38] sm:$0xff]
    %v1823 = vld [vmem:[%s8] sm:$0x1]
    %v1825 = vperm.slane %v1823, 0
    %v1828 = vrot.slane %v1814, 2
    %v1829 = vsel %vm236, %v1828, 0
    %1831 = vmatpush.msra.mxu0 0.0
    %1832 = vmatpush.msra.mxu0 0.0
    %1833 = vmatpush.msra.mxu0 0.0
    %1834 = vmatpush.msra.mxu0 0.0
    %1835 = vmatpush.msra.mxu0 0.0
    %1836 = vmatpush.msra.mxu0 0.0
    %1837 = vmatpush.msra.mxu0 0.0
    %1838 = vmatpush.msra.mxu0 0.0
    %1839 = vmatpush.msra.mxu0 %v1822
    %1840 = vmatpush.msra.mxu0 %v1821
    %1841 = vmatpush.msra.mxu0 %v1820
    %1842 = vmatpush.msra.mxu0 %v1819
    %1843 = vmatpush.msra.mxu0 %v1818
    %1844 = vmatpush.msra.mxu0 %v1817
    %1845 = vmatpush.msra.mxu0 %v1816
    %1846 = vmatpush.msra.mxu0 %v1815
    %1847 = vmatmul.f32.gmra.mxu0 %v1829
    %v1848 = vpop.f32.mrf.mxu0
    %v1849 = vadd.f32 %v1825, %v1848
    %1850 = vdwg.mxu0
    %v1851 = vxor.u32 %v1849, 2147483648
    %v1852 = vmul.f32 %v1851, 1.442695
    %v1853 = vpow.pop %v1852
    %v1854 = vadd.f32 %v1853, 1.0
    %v1855 = vrcp.pop %v1854
    %v1856 = vmul.f32 %v1854, %v1855
    %v1857 = vsub.f32 1.0, %v1856
    %v1858 = vmul.f32 %v1855, %v1857
    %v1859 = vadd.f32 %v1855, %v1858
    %vm1860 = vweird.f32 %v1854
    %vm1861 = vweird.f32 %v1855
    %vm1862 = vmor %vm1860, %vm1861
    %v1863 = vsel %vm1862, %v1855, %v1859
    %v1864 = vand.u32 2147483647, %v1854
    %vm1865 = vcmp.eq.f32.partialorder %v1864, 8.507059e+37
    %v1866 = vand.u32 %v1854, 2147483648
    %v1867 = vor.u32 1.1754944e-38, %v1866
    %v1868 = vsel %vm1865, %v1867, %v1863
    %v1869 = vmul.f32 1.0, %v1868
    %1871 = vrot.lane.b32.xlu0 %v1849, 32
    %v1872 = vpop.permute.xlu0 %1871
    %v1874 = vmul.f32 %v1869, %v1872
    %1876 = vrot.lane.b32.xlu0 %v1874, 64
    %v1877 = vpop.permute.xlu0 %1876
    %v1879 = vadd.f32 %v1849, %v1877
    %v1880 = vtanh.pop %v1879
    %v1881 = vsub.f32 1.0, %v1869
    %1883 = vrot.lane.b32.xlu0 %v1880, 96
    %v1884 = vpop.permute.xlu0 %1883
    %v1886 = vmul.f32 %v1881, %v1884
    %v1887 = vmul.f32 %v1869, %v1573
    %v1888 = vadd.f32 %v1886, %v1887
    %1890 = vrot.lane.b32.xlu0 %v1888, 96
    %v1891 = vpop.permute.xlu0 %1890
    %v1893 = vsel %vm105, %v1891, %v1651
    %v1894 = vld [vmem:[%s307] sm:$0xff]
    %v1895 = vld [vmem:[%s307 + $0x8] sm:$0xff]
    %v1896 = vld [vmem:[%s307 + $0x10] sm:$0xff]
    %v1897 = vld [vmem:[%s307 + $0x18] sm:$0xff]
    %v1898 = vld [vmem:[%s307 + $0x20] sm:$0xff]
    %v1899 = vld [vmem:[%s307 + $0x28] sm:$0xff]
    %v1900 = vld [vmem:[%s307 + $0x30] sm:$0xff]
    %v1901 = vld [vmem:[%s307 + $0x38] sm:$0xff]
    %v1902 = vld [vmem:[%s316] sm:$0x1]
    %v1904 = vperm.slane %v1902, 0
    %v1907 = vsel %vm236, %v1893, 0
    %1909 = vmatpush.msra.mxu0 0.0
    %1910 = vmatpush.msra.mxu0 0.0
    %1911 = vmatpush.msra.mxu0 0.0
    %1912 = vmatpush.msra.mxu0 0.0
    %1913 = vmatpush.msra.mxu0 0.0
    %1914 = vmatpush.msra.mxu0 0.0
    %1915 = vmatpush.msra.mxu0 0.0
    %1916 = vmatpush.msra.mxu0 0.0
    %1917 = vmatpush.msra.mxu0 %v1901
    %1918 = vmatpush.msra.mxu0 %v1900
    %1919 = vmatpush.msra.mxu0 %v1899
    %1920 = vmatpush.msra.mxu0 %v1898
    %1921 = vmatpush.msra.mxu0 %v1897
    %1922 = vmatpush.msra.mxu0 %v1896
    %1923 = vmatpush.msra.mxu0 %v1895
    %1924 = vmatpush.msra.mxu0 %v1894
    %1925 = vmatmul.f32.gmra.mxu0 %v1907
    %v1926 = vpop.f32.mrf.mxu0
    %v1927 = vadd.f32 %v1904, %v1926
    %1928 = vdwg.mxu0
    %v1929 = vxor.u32 %v1927, 2147483648
    %v1930 = vmul.f32 %v1929, 1.442695
    %v1931 = vpow.pop %v1930
    %v1932 = vadd.f32 %v1931, 1.0
    %v1933 = vrcp.pop %v1932
    %v1934 = vmul.f32 %v1932, %v1933
    %v1935 = vsub.f32 1.0, %v1934
    %v1936 = vmul.f32 %v1933, %v1935
    %v1937 = vadd.f32 %v1933, %v1936
    %vm1938 = vweird.f32 %v1932
    %vm1939 = vweird.f32 %v1933
    %vm1940 = vmor %vm1938, %vm1939
    %v1941 = vsel %vm1940, %v1933, %v1937
    %v1942 = vand.u32 2147483647, %v1932
    %vm1943 = vcmp.eq.f32.partialorder %v1942, 8.507059e+37
    %v1944 = vand.u32 %v1932, 2147483648
    %v1945 = vor.u32 1.1754944e-38, %v1944
    %v1946 = vsel %vm1943, %v1945, %v1941
    %v1947 = vmul.f32 1.0, %v1946
    %1949 = vrot.lane.b32.xlu0 %v1927, 32
    %v1950 = vpop.permute.xlu0 %1949
    %v1952 = vmul.f32 %v1947, %v1950
    %1954 = vrot.lane.b32.xlu0 %v1952, 64
    %v1955 = vpop.permute.xlu0 %1954
    %v1957 = vadd.f32 %v1927, %v1955
    %v1958 = vtanh.pop %v1957
    %v1959 = vsub.f32 1.0, %v1947
    %1961 = vrot.lane.b32.xlu0 %v1958, 96
    %v1962 = vpop.permute.xlu0 %1961
    %v1964 = vmul.f32 %v1959, %v1962
    %v1965 = vmul.f32 %v1947, %v1651
    %v1966 = vadd.f32 %v1964, %v1965
    %1968 = vrot.lane.b32.xlu0 %v1966, 96
    %v1969 = vpop.permute.xlu0 %1968
    %v1971 = vsel %vm105, %v1969, %v1729
    %v1972 = vld [vmem:[%s391] sm:$0xff]
    %v1973 = vld [vmem:[%s391 + $0x8] sm:$0xff]
    %v1974 = vld [vmem:[%s391 + $0x10] sm:$0xff]
    %v1975 = vld [vmem:[%s391 + $0x18] sm:$0xff]
    %v1976 = vld [vmem:[%s391 + $0x20] sm:$0xff]
    %v1977 = vld [vmem:[%s391 + $0x28] sm:$0xff]
    %v1978 = vld [vmem:[%s391 + $0x30] sm:$0xff]
    %v1979 = vld [vmem:[%s391 + $0x38] sm:$0xff]
    %v1980 = vld [vmem:[%s400] sm:$0x1]
    %v1982 = vperm.slane %v1980, 0
    %v1985 = vsel %vm236, %v1971, 0
    %1987 = vmatpush.msra.mxu0 0.0
    %1988 = vmatpush.msra.mxu0 0.0
    %1989 = vmatpush.msra.mxu0 0.0
    %1990 = vmatpush.msra.mxu0 0.0
    %1991 = vmatpush.msra.mxu0 0.0
    %1992 = vmatpush.msra.mxu0 0.0
    %1993 = vmatpush.msra.mxu0 0.0
    %1994 = vmatpush.msra.mxu0 0.0
    %1995 = vmatpush.msra.mxu0 %v1979
    %1996 = vmatpush.msra.mxu0 %v1978
    %1997 = vmatpush.msra.mxu0 %v1977
    %1998 = vmatpush.msra.mxu0 %v1976
    %1999 = vmatpush.msra.mxu0 %v1975
    %2000 = vmatpush.msra.mxu0 %v1974
    %2001 = vmatpush.msra.mxu0 %v1973
    %2002 = vmatpush.msra.mxu0 %v1972
    %2003 = vmatmul.f32.gmra.mxu0 %v1985
    %v2004 = vpop.f32.mrf.mxu0
    %v2005 = vadd.f32 %v1982, %v2004
    %2006 = vdwg.mxu0
    %v2007 = vxor.u32 %v2005, 2147483648
    %v2008 = vmul.f32 %v2007, 1.442695
    %v2009 = vpow.pop %v2008
    %v2010 = vadd.f32 %v2009, 1.0
    %v2011 = vrcp.pop %v2010
    %v2012 = vmul.f32 %v2010, %v2011
    %v2013 = vsub.f32 1.0, %v2012
    %v2014 = vmul.f32 %v2011, %v2013
    %v2015 = vadd.f32 %v2011, %v2014
    %vm2016 = vweird.f32 %v2010
    %vm2017 = vweird.f32 %v2011
    %vm2018 = vmor %vm2016, %vm2017
    %v2019 = vsel %vm2018, %v2011, %v2015
    %v2020 = vand.u32 2147483647, %v2010
    %vm2021 = vcmp.eq.f32.partialorder %v2020, 8.507059e+37
    %v2022 = vand.u32 %v2010, 2147483648
    %v2023 = vor.u32 1.1754944e-38, %v2022
    %v2024 = vsel %vm2021, %v2023, %v2019
    %v2025 = vmul.f32 1.0, %v2024
    %2027 = vrot.lane.b32.xlu0 %v2005, 32
    %v2028 = vpop.permute.xlu0 %2027
    %v2030 = vmul.f32 %v2025, %v2028
    %2032 = vrot.lane.b32.xlu0 %v2030, 64
    %v2033 = vpop.permute.xlu0 %2032
    %v2035 = vadd.f32 %v2005, %v2033
    %v2036 = vtanh.pop %v2035
    %v2037 = vsub.f32 1.0, %v2025
    %2039 = vrot.lane.b32.xlu0 %v2036, 96
    %v2040 = vpop.permute.xlu0 %2039
    %v2042 = vmul.f32 %v2037, %v2040
    %v2043 = vmul.f32 %v2025, %v1729
    %v2044 = vadd.f32 %v2042, %v2043
    %2046 = vrot.lane.b32.xlu0 %v2044, 96
    %v2047 = vpop.permute.xlu0 %2046
    %2049 = vst.msk [vmem:[#allocation2 + $0xa] sm:$0x3] %vm470, %v2047
    %v2050 = vld [vmem:[%s5] sm:$0xff]
    %v2051 = vld [vmem:[%s5 + $0x8] sm:$0xff]
    %v2052 = vld [vmem:[%s5 + $0x10] sm:$0xff]
    %v2053 = vld [vmem:[%s5 + $0x18] sm:$0xff]
    %v2054 = vld [vmem:[%s6] sm:$0x1]
    %v2056 = vperm.slane %v2054, 0
    %v2058 = vrot.slane %v1807, 2
    %2059 = vrot.lane.b32.xlu0 %v2058, 96
    %v2060 = vpop.permute.xlu0 %2059
    %v2061 = vsel %vm105, %v2060, 0
    %2063 = vmatpush.msra.mxu0 0.0
    %2064 = vmatpush.msra.mxu0 0.0
    %2065 = vmatpush.msra.mxu0 0.0
    %2066 = vmatpush.msra.mxu0 0.0
    %2067 = vmatpush.msra.mxu0 0.0
    %2068 = vmatpush.msra.mxu0 0.0
    %2069 = vmatpush.msra.mxu0 0.0
    %2070 = vmatpush.msra.mxu0 0.0
    %2071 = vmatpush.msra.mxu0 0.0
    %2072 = vmatpush.msra.mxu0 0.0
    %2073 = vmatpush.msra.mxu0 0.0
    %2074 = vmatpush.msra.mxu0 0.0
    %2075 = vmatpush.msra.mxu0 %v2053
    %2076 = vmatpush.msra.mxu0 %v2052
    %2077 = vmatpush.msra.mxu0 %v2051
    %2078 = vmatpush.msra.mxu0 %v2050
    %2079 = vmatmul.f32.gmra.mxu0 %v2061
    %v2080 = vpop.f32.mrf.mxu0
    %v2081 = vadd.f32 %v2056, %v2080
    %2082 = vdwg.mxu0
    %v2084 = vrot.slane %v2081, 4
    %v2086 = vadd.f32 %v133, %v2084
    %v2087 = vxor.u32 %v2086, 2147483648
    %v2088 = vmul.f32 %v2087, 1.442695
    %v2089 = vpow.pop %v2088
    %v2090 = vadd.f32 %v2089, 1.0
    %v2091 = vrcp.pop %v2090
    %v2092 = vmul.f32 %v2090, %v2091
    %v2093 = vsub.f32 1.0, %v2092
    %v2094 = vmul.f32 %v2091, %v2093
    %v2095 = vadd.f32 %v2091, %v2094
    %vm2096 = vweird.f32 %v2090
    %vm2097 = vweird.f32 %v2091
    %vm2098 = vmor %vm2096, %vm2097
    %v2099 = vsel %vm2098, %v2091, %v2095
    %v2100 = vand.u32 2147483647, %v2090
    %vm2101 = vcmp.eq.f32.partialorder %v2100, 8.507059e+37
    %v2102 = vand.u32 %v2090, 2147483648
    %v2103 = vor.u32 1.1754944e-38, %v2102
    %v2104 = vsel %vm2101, %v2103, %v2099
    %v2105 = vmul.f32 1.0, %v2104
    %2106 = vrot.lane.b32.xlu0 %v2084, 64
    %v2107 = vpop.permute.xlu0 %2106
    %v2109 = vmul.f32 %v2105, %v2107
    %2111 = vrot.lane.b32.xlu0 %v2109, 64
    %v2112 = vpop.permute.xlu0 %2111
    %v2114 = vadd.f32 %v133, %v2112
    %v2115 = vtanh.pop %v2114
    %v2116 = vsub.f32 1.0, %v2105
    %2118 = vrot.lane.b32.xlu0 %v2115, 96
    %v2119 = vpop.permute.xlu0 %2118
    %v2121 = vmul.f32 %v2116, %v2119
    %v2122 = vrot.slane %v1807, 6
    %v2124 = vmul.f32 %v2105, %v2122
    %v2125 = vadd.f32 %v2121, %v2124
    %2127 = vrot.lane.b32.xlu0 %v2125, 96
    %v2128 = vpop.permute.xlu0 %2127
    %v2130 = vrot.slane %v1888, 4
    %v2132 = vsel %vm105, %v2128, %v2130
    %v2133 = vld [vmem:[%s7] sm:$0xff]
    %v2134 = vld [vmem:[%s7 + $0x8] sm:$0xff]
    %v2135 = vld [vmem:[%s7 + $0x10] sm:$0xff]
    %v2136 = vld [vmem:[%s7 + $0x18] sm:$0xff]
    %v2137 = vld [vmem:[%s7 + $0x20] sm:$0xff]
    %v2138 = vld [vmem:[%s7 + $0x28] sm:$0xff]
    %v2139 = vld [vmem:[%s7 + $0x30] sm:$0xff]
    %v2140 = vld [vmem:[%s7 + $0x38] sm:$0xff]
    %v2141 = vld [vmem:[%s8] sm:$0x1]
    %v2143 = vperm.slane %v2141, 0
    %v2146 = vrot.slane %v2132, 4
    %v2147 = vsel %vm236, %v2146, 0
    %2149 = vmatpush.msra.mxu0 0.0
    %2150 = vmatpush.msra.mxu0 0.0
    %2151 = vmatpush.msra.mxu0 0.0
    %2152 = vmatpush.msra.mxu0 0.0
    %2153 = vmatpush.msra.mxu0 0.0
    %2154 = vmatpush.msra.mxu0 0.0
    %2155 = vmatpush.msra.mxu0 0.0
    %2156 = vmatpush.msra.mxu0 0.0
    %2157 = vmatpush.msra.mxu0 %v2140
    %2158 = vmatpush.msra.mxu0 %v2139
    %2159 = vmatpush.msra.mxu0 %v2138
    %2160 = vmatpush.msra.mxu0 %v2137
    %2161 = vmatpush.msra.mxu0 %v2136
    %2162 = vmatpush.msra.mxu0 %v2135
    %2163 = vmatpush.msra.mxu0 %v2134
    %2164 = vmatpush.msra.mxu0 %v2133
    %2165 = vmatmul.f32.gmra.mxu0 %v2147
    %v2166 = vpop.f32.mrf.mxu0
    %v2167 = vadd.f32 %v2143, %v2166
    %2168 = vdwg.mxu0
    %v2169 = vxor.u32 %v2167, 2147483648
    %v2170 = vmul.f32 %v2169, 1.442695
    %v2171 = vpow.pop %v2170
    %v2172 = vadd.f32 %v2171, 1.0
    %v2173 = vrcp.pop %v2172
    %v2174 = vmul.f32 %v2172, %v2173
    %v2175 = vsub.f32 1.0, %v2174
    %v2176 = vmul.f32 %v2173, %v2175
    %v2177 = vadd.f32 %v2173, %v2176
    %vm2178 = vweird.f32 %v2172
    %vm2179 = vweird.f32 %v2173
    %vm2180 = vmor %vm2178, %vm2179
    %v2181 = vsel %vm2180, %v2173, %v2177
    %v2182 = vand.u32 2147483647, %v2172
    %vm2183 = vcmp.eq.f32.partialorder %v2182, 8.507059e+37
    %v2184 = vand.u32 %v2172, 2147483648
    %v2185 = vor.u32 1.1754944e-38, %v2184
    %v2186 = vsel %vm2183, %v2185, %v2181
    %v2187 = vmul.f32 1.0, %v2186
    %2189 = vrot.lane.b32.xlu0 %v2167, 32
    %v2190 = vpop.permute.xlu0 %2189
    %v2192 = vmul.f32 %v2187, %v2190
    %2194 = vrot.lane.b32.xlu0 %v2192, 64
    %v2195 = vpop.permute.xlu0 %2194
    %v2197 = vadd.f32 %v2167, %v2195
    %v2198 = vtanh.pop %v2197
    %v2199 = vsub.f32 1.0, %v2187
    %2201 = vrot.lane.b32.xlu0 %v2198, 96
    %v2202 = vpop.permute.xlu0 %2201
    %v2204 = vmul.f32 %v2199, %v2202
    %v2205 = vmul.f32 %v2187, %v1888
    %v2206 = vadd.f32 %v2204, %v2205
    %2208 = vrot.lane.b32.xlu0 %v2206, 96
    %v2209 = vpop.permute.xlu0 %2208
    %v2211 = vsel %vm105, %v2209, %v1966
    %v2212 = vld [vmem:[%s307] sm:$0xff]
    %v2213 = vld [vmem:[%s307 + $0x8] sm:$0xff]
    %v2214 = vld [vmem:[%s307 + $0x10] sm:$0xff]
    %v2215 = vld [vmem:[%s307 + $0x18] sm:$0xff]
    %v2216 = vld [vmem:[%s307 + $0x20] sm:$0xff]
    %v2217 = vld [vmem:[%s307 + $0x28] sm:$0xff]
    %v2218 = vld [vmem:[%s307 + $0x30] sm:$0xff]
    %v2219 = vld [vmem:[%s307 + $0x38] sm:$0xff]
    %v2220 = vld [vmem:[%s316] sm:$0x1]
    %v2222 = vperm.slane %v2220, 0
    %v2225 = vsel %vm236, %v2211, 0
    %2227 = vmatpush.msra.mxu0 0.0
    %2228 = vmatpush.msra.mxu0 0.0
    %2229 = vmatpush.msra.mxu0 0.0
    %2230 = vmatpush.msra.mxu0 0.0
    %2231 = vmatpush.msra.mxu0 0.0
    %2232 = vmatpush.msra.mxu0 0.0
    %2233 = vmatpush.msra.mxu0 0.0
    %2234 = vmatpush.msra.mxu0 0.0
    %2235 = vmatpush.msra.mxu0 %v2219
    %2236 = vmatpush.msra.mxu0 %v2218
    %2237 = vmatpush.msra.mxu0 %v2217
    %2238 = vmatpush.msra.mxu0 %v2216
    %2239 = vmatpush.msra.mxu0 %v2215
    %2240 = vmatpush.msra.mxu0 %v2214
    %2241 = vmatpush.msra.mxu0 %v2213
    %2242 = vmatpush.msra.mxu0 %v2212
    %2243 = vmatmul.f32.gmra.mxu0 %v2225
    %v2244 = vpop.f32.mrf.mxu0
    %v2245 = vadd.f32 %v2222, %v2244
    %2246 = vdwg.mxu0
    %v2247 = vxor.u32 %v2245, 2147483648
    %v2248 = vmul.f32 %v2247, 1.442695
    %v2249 = vpow.pop %v2248
    %v2250 = vadd.f32 %v2249, 1.0
    %v2251 = vrcp.pop %v2250
    %v2252 = vmul.f32 %v2250, %v2251
    %v2253 = vsub.f32 1.0, %v2252
    %v2254 = vmul.f32 %v2251, %v2253
    %v2255 = vadd.f32 %v2251, %v2254
    %vm2256 = vweird.f32 %v2250
    %vm2257 = vweird.f32 %v2251
    %vm2258 = vmor %vm2256, %vm2257
    %v2259 = vsel %vm2258, %v2251, %v2255
    %v2260 = vand.u32 2147483647, %v2250
    %vm2261 = vcmp.eq.f32.partialorder %v2260, 8.507059e+37
    %v2262 = vand.u32 %v2250, 2147483648
    %v2263 = vor.u32 1.1754944e-38, %v2262
    %v2264 = vsel %vm2261, %v2263, %v2259
    %v2265 = vmul.f32 1.0, %v2264
    %2267 = vrot.lane.b32.xlu0 %v2245, 32
    %v2268 = vpop.permute.xlu0 %2267
    %v2270 = vmul.f32 %v2265, %v2268
    %2272 = vrot.lane.b32.xlu0 %v2270, 64
    %v2273 = vpop.permute.xlu0 %2272
    %v2275 = vadd.f32 %v2245, %v2273
    %v2276 = vtanh.pop %v2275
    %v2277 = vsub.f32 1.0, %v2265
    %2279 = vrot.lane.b32.xlu0 %v2276, 96
    %v2280 = vpop.permute.xlu0 %2279
    %v2282 = vmul.f32 %v2277, %v2280
    %v2283 = vmul.f32 %v2265, %v1966
    %v2284 = vadd.f32 %v2282, %v2283
    %2286 = vrot.lane.b32.xlu0 %v2284, 96
    %v2287 = vpop.permute.xlu0 %2286
    %v2289 = vsel %vm105, %v2287, %v2044
    %v2290 = vld [vmem:[%s391] sm:$0xff]
    %v2291 = vld [vmem:[%s391 + $0x8] sm:$0xff]
    %v2292 = vld [vmem:[%s391 + $0x10] sm:$0xff]
    %v2293 = vld [vmem:[%s391 + $0x18] sm:$0xff]
    %v2294 = vld [vmem:[%s391 + $0x20] sm:$0xff]
    %v2295 = vld [vmem:[%s391 + $0x28] sm:$0xff]
    %v2296 = vld [vmem:[%s391 + $0x30] sm:$0xff]
    %v2297 = vld [vmem:[%s391 + $0x38] sm:$0xff]
    %v2298 = vld [vmem:[%s400] sm:$0x1]
    %v2300 = vperm.slane %v2298, 0
    %v2303 = vsel %vm236, %v2289, 0
    %2305 = vmatpush.msra.mxu0 0.0
    %2306 = vmatpush.msra.mxu0 0.0
    %2307 = vmatpush.msra.mxu0 0.0
    %2308 = vmatpush.msra.mxu0 0.0
    %2309 = vmatpush.msra.mxu0 0.0
    %2310 = vmatpush.msra.mxu0 0.0
    %2311 = vmatpush.msra.mxu0 0.0
    %2312 = vmatpush.msra.mxu0 0.0
    %2313 = vmatpush.msra.mxu0 %v2297
    %2314 = vmatpush.msra.mxu0 %v2296
    %2315 = vmatpush.msra.mxu0 %v2295
    %2316 = vmatpush.msra.mxu0 %v2294
    %2317 = vmatpush.msra.mxu0 %v2293
    %2318 = vmatpush.msra.mxu0 %v2292
    %2319 = vmatpush.msra.mxu0 %v2291
    %2320 = vmatpush.msra.mxu0 %v2290
    %2321 = vmatmul.f32.gmra.mxu0 %v2303
    %v2322 = vpop.f32.mrf.mxu0
    %v2323 = vadd.f32 %v2300, %v2322
    %2324 = vdwg.mxu0
    %v2325 = vxor.u32 %v2323, 2147483648
    %v2326 = vmul.f32 %v2325, 1.442695
    %v2327 = vpow.pop %v2326
    %v2328 = vadd.f32 %v2327, 1.0
    %v2329 = vrcp.pop %v2328
    %v2330 = vmul.f32 %v2328, %v2329
    %v2331 = vsub.f32 1.0, %v2330
    %v2332 = vmul.f32 %v2329, %v2331
    %v2333 = vadd.f32 %v2329, %v2332
    %vm2334 = vweird.f32 %v2328
    %vm2335 = vweird.f32 %v2329
    %vm2336 = vmor %vm2334, %vm2335
    %v2337 = vsel %vm2336, %v2329, %v2333
    %v2338 = vand.u32 2147483647, %v2328
    %vm2339 = vcmp.eq.f32.partialorder %v2338, 8.507059e+37
    %v2340 = vand.u32 %v2328, 2147483648
    %v2341 = vor.u32 1.1754944e-38, %v2340
    %v2342 = vsel %vm2339, %v2341, %v2337
    %v2343 = vmul.f32 1.0, %v2342
    %2345 = vrot.lane.b32.xlu0 %v2323, 32
    %v2346 = vpop.permute.xlu0 %2345
    %v2348 = vmul.f32 %v2343, %v2346
    %2350 = vrot.lane.b32.xlu0 %v2348, 64
    %v2351 = vpop.permute.xlu0 %2350
    %v2353 = vadd.f32 %v2323, %v2351
    %v2354 = vtanh.pop %v2353
    %v2355 = vsub.f32 1.0, %v2343
    %2357 = vrot.lane.b32.xlu0 %v2354, 96
    %v2358 = vpop.permute.xlu0 %2357
    %v2360 = vmul.f32 %v2355, %v2358
    %v2361 = vmul.f32 %v2343, %v2044
    %v2362 = vadd.f32 %v2360, %v2361
    %2364 = vrot.lane.b32.xlu0 %v2362, 96
    %v2365 = vpop.permute.xlu0 %2364
    %2367 = vst.msk [vmem:[#allocation2 + $0xc] sm:$0x3] %vm470, %v2365
    %v2368 = vld [vmem:[%s5] sm:$0xff]
    %v2369 = vld [vmem:[%s5 + $0x8] sm:$0xff]
    %v2370 = vld [vmem:[%s5 + $0x10] sm:$0xff]
    %v2371 = vld [vmem:[%s5 + $0x18] sm:$0xff]
    %v2372 = vld [vmem:[%s6] sm:$0x1]
    %v2374 = vperm.slane %v2372, 0
    %v2376 = vrot.slane %v2125, 4
    %2377 = vrot.lane.b32.xlu0 %v2376, 96
    %v2378 = vpop.permute.xlu0 %2377
    %v2379 = vsel %vm105, %v2378, 0
    %2381 = vmatpush.msra.mxu0 0.0
    %2382 = vmatpush.msra.mxu0 0.0
    %2383 = vmatpush.msra.mxu0 0.0
    %2384 = vmatpush.msra.mxu0 0.0
    %2385 = vmatpush.msra.mxu0 0.0
    %2386 = vmatpush.msra.mxu0 0.0
    %2387 = vmatpush.msra.mxu0 0.0
    %2388 = vmatpush.msra.mxu0 0.0
    %2389 = vmatpush.msra.mxu0 0.0
    %2390 = vmatpush.msra.mxu0 0.0
    %2391 = vmatpush.msra.mxu0 0.0
    %2392 = vmatpush.msra.mxu0 0.0
    %2393 = vmatpush.msra.mxu0 %v2371
    %2394 = vmatpush.msra.mxu0 %v2370
    %2395 = vmatpush.msra.mxu0 %v2369
    %2396 = vmatpush.msra.mxu0 %v2368
    %2397 = vmatmul.f32.gmra.mxu0 %v2379
    %v2398 = vpop.f32.mrf.mxu0
    %v2399 = vadd.f32 %v2374, %v2398
    %2400 = vdwg.mxu0
    %v2402 = vrot.slane %v2399, 2
    %v2404 = vadd.f32 %v133, %v2402
    %v2405 = vxor.u32 %v2404, 2147483648
    %v2406 = vmul.f32 %v2405, 1.442695
    %v2407 = vpow.pop %v2406
    %v2408 = vadd.f32 %v2407, 1.0
    %v2409 = vrcp.pop %v2408
    %v2410 = vmul.f32 %v2408, %v2409
    %v2411 = vsub.f32 1.0, %v2410
    %v2412 = vmul.f32 %v2409, %v2411
    %v2413 = vadd.f32 %v2409, %v2412
    %vm2414 = vweird.f32 %v2408
    %vm2415 = vweird.f32 %v2409
    %vm2416 = vmor %vm2414, %vm2415
    %v2417 = vsel %vm2416, %v2409, %v2413
    %v2418 = vand.u32 2147483647, %v2408
    %vm2419 = vcmp.eq.f32.partialorder %v2418, 8.507059e+37
    %v2420 = vand.u32 %v2408, 2147483648
    %v2421 = vor.u32 1.1754944e-38, %v2420
    %v2422 = vsel %vm2419, %v2421, %v2417
    %v2423 = vmul.f32 1.0, %v2422
    %2424 = vrot.lane.b32.xlu0 %v2402, 64
    %v2425 = vpop.permute.xlu0 %2424
    %v2427 = vmul.f32 %v2423, %v2425
    %2429 = vrot.lane.b32.xlu0 %v2427, 64
    %v2430 = vpop.permute.xlu0 %2429
    %v2432 = vadd.f32 %v133, %v2430
    %v2433 = vtanh.pop %v2432
    %v2434 = vsub.f32 1.0, %v2423
    %2436 = vrot.lane.b32.xlu0 %v2433, 96
    %v2437 = vpop.permute.xlu0 %2436
    %v2439 = vmul.f32 %v2434, %v2437
    %v2440 = vrot.slane %v2125, 6
    %v2442 = vmul.f32 %v2423, %v2440
    %v2443 = vadd.f32 %v2439, %v2442
    %2445 = vrot.lane.b32.xlu0 %v2443, 96
    %v2446 = vpop.permute.xlu0 %2445
    %v2448 = vrot.slane %v2206, 2
    %v2450 = vsel %vm105, %v2446, %v2448
    %v2451 = vld [vmem:[%s7] sm:$0xff]
    %v2452 = vld [vmem:[%s7 + $0x8] sm:$0xff]
    %v2453 = vld [vmem:[%s7 + $0x10] sm:$0xff]
    %v2454 = vld [vmem:[%s7 + $0x18] sm:$0xff]
    %v2455 = vld [vmem:[%s7 + $0x20] sm:$0xff]
    %v2456 = vld [vmem:[%s7 + $0x28] sm:$0xff]
    %v2457 = vld [vmem:[%s7 + $0x30] sm:$0xff]
    %v2458 = vld [vmem:[%s7 + $0x38] sm:$0xff]
    %v2459 = vld [vmem:[%s8] sm:$0x1]
    %v2461 = vperm.slane %v2459, 0
    %v2464 = vrot.slane %v2450, 6
    %v2465 = vsel %vm236, %v2464, 0
    %2467 = vmatpush.msra.mxu0 0.0
    %2468 = vmatpush.msra.mxu0 0.0
    %2469 = vmatpush.msra.mxu0 0.0
    %2470 = vmatpush.msra.mxu0 0.0
    %2471 = vmatpush.msra.mxu0 0.0
    %2472 = vmatpush.msra.mxu0 0.0
    %2473 = vmatpush.msra.mxu0 0.0
    %2474 = vmatpush.msra.mxu0 0.0
    %2475 = vmatpush.msra.mxu0 %v2458
    %2476 = vmatpush.msra.mxu0 %v2457
    %2477 = vmatpush.msra.mxu0 %v2456
    %2478 = vmatpush.msra.mxu0 %v2455
    %2479 = vmatpush.msra.mxu0 %v2454
    %2480 = vmatpush.msra.mxu0 %v2453
    %2481 = vmatpush.msra.mxu0 %v2452
    %2482 = vmatpush.msra.mxu0 %v2451
    %2483 = vmatmul.f32.gmra.mxu0 %v2465
    %v2484 = vpop.f32.mrf.mxu0
    %v2485 = vadd.f32 %v2461, %v2484
    %2486 = vdwg.mxu0
    %v2487 = vxor.u32 %v2485, 2147483648
    %v2488 = vmul.f32 %v2487, 1.442695
    %v2489 = vpow.pop %v2488
    %v2490 = vadd.f32 %v2489, 1.0
    %v2491 = vrcp.pop %v2490
    %v2492 = vmul.f32 %v2490, %v2491
    %v2493 = vsub.f32 1.0, %v2492
    %v2494 = vmul.f32 %v2491, %v2493
    %v2495 = vadd.f32 %v2491, %v2494
    %vm2496 = vweird.f32 %v2490
    %vm2497 = vweird.f32 %v2491
    %vm2498 = vmor %vm2496, %vm2497
    %v2499 = vsel %vm2498, %v2491, %v2495
    %v2500 = vand.u32 2147483647, %v2490
    %vm2501 = vcmp.eq.f32.partialorder %v2500, 8.507059e+37
    %v2502 = vand.u32 %v2490, 2147483648
    %v2503 = vor.u32 1.1754944e-38, %v2502
    %v2504 = vsel %vm2501, %v2503, %v2499
    %v2505 = vmul.f32 1.0, %v2504
    %2507 = vrot.lane.b32.xlu0 %v2485, 32
    %v2508 = vpop.permute.xlu0 %2507
    %v2510 = vmul.f32 %v2505, %v2508
    %2512 = vrot.lane.b32.xlu0 %v2510, 64
    %v2513 = vpop.permute.xlu0 %2512
    %v2515 = vadd.f32 %v2485, %v2513
    %v2516 = vtanh.pop %v2515
    %v2517 = vsub.f32 1.0, %v2505
    %2519 = vrot.lane.b32.xlu0 %v2516, 96
    %v2520 = vpop.permute.xlu0 %2519
    %v2522 = vmul.f32 %v2517, %v2520
    %v2523 = vmul.f32 %v2505, %v2206
    %v2524 = vadd.f32 %v2522, %v2523
    %2526 = vrot.lane.b32.xlu0 %v2524, 96
    %v2527 = vpop.permute.xlu0 %2526
    %v2529 = vsel %vm105, %v2527, %v2284
    %v2530 = vld [vmem:[%s307] sm:$0xff]
    %v2531 = vld [vmem:[%s307 + $0x8] sm:$0xff]
    %v2532 = vld [vmem:[%s307 + $0x10] sm:$0xff]
    %v2533 = vld [vmem:[%s307 + $0x18] sm:$0xff]
    %v2534 = vld [vmem:[%s307 + $0x20] sm:$0xff]
    %v2535 = vld [vmem:[%s307 + $0x28] sm:$0xff]
    %v2536 = vld [vmem:[%s307 + $0x30] sm:$0xff]
    %v2537 = vld [vmem:[%s307 + $0x38] sm:$0xff]
    %v2538 = vld [vmem:[%s316] sm:$0x1]
    %v2540 = vperm.slane %v2538, 0
    %v2543 = vsel %vm236, %v2529, 0
    %2545 = vmatpush.msra.mxu0 0.0
    %2546 = vmatpush.msra.mxu0 0.0
    %2547 = vmatpush.msra.mxu0 0.0
    %2548 = vmatpush.msra.mxu0 0.0
    %2549 = vmatpush.msra.mxu0 0.0
    %2550 = vmatpush.msra.mxu0 0.0
    %2551 = vmatpush.msra.mxu0 0.0
    %2552 = vmatpush.msra.mxu0 0.0
    %2553 = vmatpush.msra.mxu0 %v2537
    %2554 = vmatpush.msra.mxu0 %v2536
    %2555 = vmatpush.msra.mxu0 %v2535
    %2556 = vmatpush.msra.mxu0 %v2534
    %2557 = vmatpush.msra.mxu0 %v2533
    %2558 = vmatpush.msra.mxu0 %v2532
    %2559 = vmatpush.msra.mxu0 %v2531
    %2560 = vmatpush.msra.mxu0 %v2530
    %2561 = vmatmul.f32.gmra.mxu0 %v2543
    %v2562 = vpop.f32.mrf.mxu0
    %v2563 = vadd.f32 %v2540, %v2562
    %2564 = vdwg.mxu0
    %v2565 = vxor.u32 %v2563, 2147483648
    %v2566 = vmul.f32 %v2565, 1.442695
    %v2567 = vpow.pop %v2566
    %v2568 = vadd.f32 %v2567, 1.0
    %v2569 = vrcp.pop %v2568
    %v2570 = vmul.f32 %v2568, %v2569
    %v2571 = vsub.f32 1.0, %v2570
    %v2572 = vmul.f32 %v2569, %v2571
    %v2573 = vadd.f32 %v2569, %v2572
    %vm2574 = vweird.f32 %v2568
    %vm2575 = vweird.f32 %v2569
    %vm2576 = vmor %vm2574, %vm2575
    %v2577 = vsel %vm2576, %v2569, %v2573
    %v2578 = vand.u32 2147483647, %v2568
    %vm2579 = vcmp.eq.f32.partialorder %v2578, 8.507059e+37
    %v2580 = vand.u32 %v2568, 2147483648
    %v2581 = vor.u32 1.1754944e-38, %v2580
    %v2582 = vsel %vm2579, %v2581, %v2577
    %v2583 = vmul.f32 1.0, %v2582
    %2585 = vrot.lane.b32.xlu0 %v2563, 32
    %v2586 = vpop.permute.xlu0 %2585
    %v2588 = vmul.f32 %v2583, %v2586
    %2590 = vrot.lane.b32.xlu0 %v2588, 64
    %v2591 = vpop.permute.xlu0 %2590
    %v2593 = vadd.f32 %v2563, %v2591
    %v2594 = vtanh.pop %v2593
    %v2595 = vsub.f32 1.0, %v2583
    %2597 = vrot.lane.b32.xlu0 %v2594, 96
    %v2598 = vpop.permute.xlu0 %2597
    %v2600 = vmul.f32 %v2595, %v2598
    %v2601 = vmul.f32 %v2583, %v2284
    %v2602 = vadd.f32 %v2600, %v2601
    %2604 = vrot.lane.b32.xlu0 %v2602, 96
    %v2605 = vpop.permute.xlu0 %2604
    %v2607 = vsel %vm105, %v2605, %v2362
    %v2608 = vld [vmem:[%s391] sm:$0xff]
    %v2609 = vld [vmem:[%s391 + $0x8] sm:$0xff]
    %v2610 = vld [vmem:[%s391 + $0x10] sm:$0xff]
    %v2611 = vld [vmem:[%s391 + $0x18] sm:$0xff]
    %v2612 = vld [vmem:[%s391 + $0x20] sm:$0xff]
    %v2613 = vld [vmem:[%s391 + $0x28] sm:$0xff]
    %v2614 = vld [vmem:[%s391 + $0x30] sm:$0xff]
    %v2615 = vld [vmem:[%s391 + $0x38] sm:$0xff]
    %v2616 = vld [vmem:[%s400] sm:$0x1]
    %v2618 = vperm.slane %v2616, 0
    %v2621 = vsel %vm236, %v2607, 0
    %2623 = vmatpush.msra.mxu0 0.0
    %2624 = vmatpush.msra.mxu0 0.0
    %2625 = vmatpush.msra.mxu0 0.0
    %2626 = vmatpush.msra.mxu0 0.0
    %2627 = vmatpush.msra.mxu0 0.0
    %2628 = vmatpush.msra.mxu0 0.0
    %2629 = vmatpush.msra.mxu0 0.0
    %2630 = vmatpush.msra.mxu0 0.0
    %2631 = vmatpush.msra.mxu0 %v2615
    %2632 = vmatpush.msra.mxu0 %v2614
    %2633 = vmatpush.msra.mxu0 %v2613
    %2634 = vmatpush.msra.mxu0 %v2612
    %2635 = vmatpush.msra.mxu0 %v2611
    %2636 = vmatpush.msra.mxu0 %v2610
    %2637 = vmatpush.msra.mxu0 %v2609
    %2638 = vmatpush.msra.mxu0 %v2608
    %2639 = vmatmul.f32.gmra.mxu0 %v2621
    %v2640 = vpop.f32.mrf.mxu0
    %v2641 = vadd.f32 %v2618, %v2640
    %2642 = vdwg.mxu0
    %v2643 = vxor.u32 %v2641, 2147483648
    %v2644 = vmul.f32 %v2643, 1.442695
    %v2645 = vpow.pop %v2644
    %v2646 = vadd.f32 %v2645, 1.0
    %v2647 = vrcp.pop %v2646
    %v2648 = vmul.f32 %v2646, %v2647
    %v2649 = vsub.f32 1.0, %v2648
    %v2650 = vmul.f32 %v2647, %v2649
    %v2651 = vadd.f32 %v2647, %v2650
    %vm2652 = vweird.f32 %v2646
    %vm2653 = vweird.f32 %v2647
    %vm2654 = vmor %vm2652, %vm2653
    %v2655 = vsel %vm2654, %v2647, %v2651
    %v2656 = vand.u32 2147483647, %v2646
    %vm2657 = vcmp.eq.f32.partialorder %v2656, 8.507059e+37
    %v2658 = vand.u32 %v2646, 2147483648
    %v2659 = vor.u32 1.1754944e-38, %v2658
    %v2660 = vsel %vm2657, %v2659, %v2655
    %v2661 = vmul.f32 1.0, %v2660
    %2663 = vrot.lane.b32.xlu0 %v2641, 32
    %v2664 = vpop.permute.xlu0 %2663
    %v2666 = vmul.f32 %v2661, %v2664
    %2668 = vrot.lane.b32.xlu0 %v2666, 64
    %v2669 = vpop.permute.xlu0 %2668
    %v2671 = vadd.f32 %v2641, %v2669
    %v2672 = vtanh.pop %v2671
    %v2673 = vsub.f32 1.0, %v2661
    %2675 = vrot.lane.b32.xlu0 %v2672, 96
    %v2676 = vpop.permute.xlu0 %2675
    %v2678 = vmul.f32 %v2673, %v2676
    %v2679 = vmul.f32 %v2661, %v2362
    %v2680 = vadd.f32 %v2678, %v2679
    %2682 = vrot.lane.b32.xlu0 %v2680, 96
    %v2683 = vpop.permute.xlu0 %2682
    %2685 = vst.msk [vmem:[#allocation2 + $0xe] sm:$0x3] %vm470, %v2683
    %v2686 = vld [vmem:[#allocation2] sm:$0xff]
    %v2687 = vld [vmem:[#allocation2 + $0x8] sm:$0xff]
    %v2688 = vld [vmem:[%s9] sm:$0xff]
    %v2689 = vld [vmem:[%s9 + $0x8] sm:$0xff]
    %v2690 = vld [vmem:[%s9 + $0x10] sm:$0xff]
    %v2691 = vld [vmem:[%s9 + $0x18] sm:$0xff]
    %v2692 = vld [vmem:[%s10] sm:$0x1]
    %v2694 = vperm.slane %v2692, 0
    %v2697 = vsel %vm105, %v2686, 0
    %v2700 = vsel %vm105, %v2687, 0
    %2702 = vmatpush.msra.mxu0 0.0
    %2703 = vmatpush.msra.mxu0 0.0
    %2704 = vmatpush.msra.mxu0 0.0
    %2705 = vmatpush.msra.mxu0 0.0
    %2706 = vmatpush.msra.mxu0 0.0
    %2707 = vmatpush.msra.mxu0 0.0
    %2708 = vmatpush.msra.mxu0 0.0
    %2709 = vmatpush.msra.mxu0 0.0
    %2710 = vmatpush.msra.mxu0 0.0
    %2711 = vmatpush.msra.mxu0 0.0
    %2712 = vmatpush.msra.mxu0 0.0
    %2713 = vmatpush.msra.mxu0 0.0
    %2714 = vmatpush.msra.mxu0 %v2691
    %2715 = vmatpush.msra.mxu0 %v2690
    %2716 = vmatpush.msra.mxu0 %v2689
    %2717 = vmatpush.msra.mxu0 %v2688
    %2718 = vmatmul.f32.gmra.mxu0 %v2697
    %v2719 = vpop.f32.mrf.mxu0
    %v2720 = vadd.f32 %v2694, %v2719
    %2721 = vmatmul.f32.gmra.mxu0 %v2700
    %v2722 = vpop.f32.mrf.mxu0
    %v2723 = vadd.f32 %v2694, %v2722
    %2724 = vdwg.mxu0
    %2725 = vst [vmem:[#allocation3] sm:$0xff] %v2720
    %2726 = vst [vmem:[#allocation3 + $0x8] sm:$0xff] %v2723
    %vm2727 = vcmask 261126
    %2728 = vst.msk [vmem:[#allocation5 - $0x6] sm:$0xc0] %vm2727, %v2446
    %s2729 = scalar_lea.vmem [#allocation5], 2
    %2730 = vst.msk [vmem:[%s2729] sm:$0x3] %vm470, %v2527
    %s2731 = scalar_lea.vmem [#allocation5], 4
    %2732 = vst.msk [vmem:[%s2731] sm:$0x3] %vm470, %v2605
    %s2733 = scalar_lea.vmem [#allocation5], 6
    %2734 = vst.msk [vmem:[%s2733] sm:$0x3] %vm470, %v2683
    // Predicated region
    $region46: #{model_forward.1} parent=1 // pred_check
      _
    $region47: #{model_forward.1} parent=1 // pred_check_branch
      %2736 = sbr.rel (0) target = $region49
    $region48: #{model_forward.1} parent=1 // pred_region
      %2738 = vsyncadd [#allocation4], 0
      %s2739 = sshll.u32 [#allocation3], 4
      %s2740 = int_to_ptr.vmem [resolvable:$true] %s2739
      %s2741 = sshll.u32 %s11, 4
      %s2742 = int_to_ptr.hbm [resolvable:$true] %s2741
      %2747 = dma.vmem_to_hbm [thread:$0]  %s2740, 256, %s2742, [#allocation4], 128, 128, 8
    $region49: #{model_forward.1} parent=1 // pred_fallthru
      _
    // Predicated region
    $region50: #{model_forward.1} parent=1 // pred_check
      _
    $region51: #{model_forward.1} parent=1 // pred_check_branch
      %2749 = sbr.rel (0) target = $region53
    $region52: #{model_forward.1} parent=1 // pred_region
      %2751 = vsyncadd [#allocation6], 0
      %s2752 = sshll.u32 [#allocation5], 4
      %s2753 = int_to_ptr.vmem [resolvable:$true] %s2752
      %s2754 = sshll.u32 %s12, 4
      %s2755 = int_to_ptr.hbm [resolvable:$true] %s2754
      %2760 = dma.vmem_to_hbm [thread:$0]  %s2753, 128, %s2755, [#allocation6], 32, 32, 2
    $region53: #{model_forward.1} parent=1 // pred_fallthru
      _
    // Predicated region
    $region54: #{model_forward.1} parent=1 // pred_check
      _
    $region55: #{model_forward.1} parent=1 // pred_check_branch
      %2762 = sbr.rel (0) target = $region57
    $region56: #{model_forward.1} parent=1 // pred_region
      %2764 = dma.done [#allocation4], 256
    $region57: #{model_forward.1} parent=1 // pred_fallthru
      _
    // Predicated region
    $region58: #{model_forward.1} parent=1 // pred_check
      _
    $region59: #{model_forward.1} parent=1 // pred_check_branch
      %2766 = sbr.rel (0) target = $region61
    $region60: #{model_forward.1} parent=1 // pred_region
      %2768 = dma.done [#allocation6], 128
    $region61: #{model_forward.1} parent=1 // pred_fallthru
      _
    %2769 = vsyncpa [#allocation4], 1
    %2770 = vsyncpa [#allocation6], 1

</llo_original>
